<compile_context>
chip_gen: v6e
topology: v6e:2x2x1
jax: 0.10.0
libtpu: 0.0.40
codegen_flags: <defaults>
</compile_context>

<pallas_src>
import jax
import jax.numpy as jnp
from jax.experimental import pallas as pl
from jax.experimental.pallas import tpu as pltpu

LATENT_DIM = 20
INPUT_DIM = 28 * 28          # 784
INPUT_PAD = 896              # 7 * 128: lane-dense K/N for the big matmuls + output store
HIDDEN_DIM = 400


def _round_up(n, m):
    return ((n + m - 1) // m) * m


# --------------------------------------------------------------------------
# Kernel
# --------------------------------------------------------------------------
def vae_kernel(
    x_ref,          # (TB, 896)   f32  (cols 784:896 zero-padded)
    enc_w1_ref,     # (896, 400)  bf16 (rows 784:896 zero-padded)
    enc_b1_ref,     # (1, 400)    f32
    enc_wmulv_ref,  # (400, 40)   f32  [w_mu | w_logvar] fused
    enc_bmulv_ref,  # (1, 40)     f32
    eps_ref,        # (TB, 20)    f32  pre-sampled N(0, 1)
    dec_w1_ref,     # (20, 400)   f32
    dec_b1_ref,     # (1, 400)    f32
    dec_w2_ref,     # (400, 896)  bf16 (cols 784:896 zero-padded)
    dec_b2_ref,     # (1, 896)    f32  (zero-padded)
    xrec_ref,       # out: (TB, 896) f32
    mulv_ref,       # out: (TB, 40)  f32  [mu | logvar]
):
    # ---- Encoder fc1 + relu (bf16 MXU pass, f32 accumulate) ----
    xb = x_ref[...].astype(jnp.bfloat16)
    h = jnp.dot(xb, enc_w1_ref[...], preferred_element_type=jnp.float32)
    h = jnp.maximum(h + enc_b1_ref[...], 0.0)

    # ---- Encoder: fused mu / logvar head (single 400x40 matmul) ----
    mulv = jnp.dot(h, enc_wmulv_ref[...], preferred_element_type=jnp.float32)
    mulv = mulv + enc_bmulv_ref[...]
    mulv_ref[...] = mulv

    mu = mulv[:, :LATENT_DIM]
    logvar = mulv[:, LATENT_DIM:]

    # ---- Reparameterize (exp on EUP; free under a DMA/MXU-bound kernel) ----
    z = mu + eps_ref[...] * jnp.exp(0.5 * logvar)

    # ---- Decoder ----
    hd = jnp.dot(z, dec_w1_ref[...], preferred_element_type=jnp.float32)
    hd = jnp.maximum(hd + dec_b1_ref[...], 0.0)

    logits = jnp.dot(hd.astype(jnp.bfloat16), dec_w2_ref[...],
                     preferred_element_type=jnp.float32)
    logits = logits + dec_b2_ref[...]
    xrec_ref[...] = jax.nn.sigmoid(logits)


# --------------------------------------------------------------------------
# Wrapper
# --------------------------------------------------------------------------
def vae_forward(x, kparams, eps, *, batch_tile=256):
    """Full VAE forward in one pallas_call with a batch-tiled grid.

    Args:
      x:       (B, 784) float32
      kparams: output of prepare_params() (bf16 big weights, padded, fused heads)
      eps:     (B, 20) float32 standard-normal noise (replaces torch.randn_like)
    Returns:
      (x_recon (B, 784), mu (B, 20), logvar (B, 20)), all float32.
    """
    B = x.shape[0]
    TB = min(batch_tile, _round_up(B, 8))       # batch tile, multiple of 8 sublanes
    B_pad = _round_up(B, TB)
    grid = (B_pad // TB,)

    x_p = jnp.pad(x.astype(jnp.float32),
                  ((0, B_pad - B), (0, INPUT_PAD - INPUT_DIM)))
    eps_p = jnp.pad(eps.astype(jnp.float32), ((0, B_pad - B), (0, 0)))

    batch_map = lambda i: (i, 0)
    const_map = lambda i: (0, 0)   # weights: same block every step -> stay VMEM-resident

    xrec_p, mulv_p = pl.pallas_call(
        vae_kernel,
        out_shape=(
            jax.ShapeDtypeStruct((B_pad, INPUT_PAD), jnp.float32),
            jax.ShapeDtypeStruct((B_pad, 2 * LATENT_DIM), jnp.float32),
        ),
        grid=grid,
        in_specs=[
            pl.BlockSpec((TB, INPUT_PAD), batch_map),                  # x
            pl.BlockSpec((INPUT_PAD, HIDDEN_DIM), const_map),          # enc_w1 (bf16)
            pl.BlockSpec((1, HIDDEN_DIM), const_map),                  # enc_b1
            pl.BlockSpec((HIDDEN_DIM, 2 * LATENT_DIM), const_map),     # enc_wmulv
            pl.BlockSpec((1, 2 * LATENT_DIM), const_map),              # enc_bmulv
            pl.BlockSpec((TB, LATENT_DIM), batch_map),                 # eps
            pl.BlockSpec((LATENT_DIM, HIDDEN_DIM), const_map),         # dec_w1
            pl.BlockSpec((1, HIDDEN_DIM), const_map),                  # dec_b1
            pl.BlockSpec((HIDDEN_DIM, INPUT_PAD), const_map),          # dec_w2 (bf16)
            pl.BlockSpec((1, INPUT_PAD), const_map),                   # dec_b2
        ],
        out_specs=(
            pl.BlockSpec((TB, INPUT_PAD), batch_map),                  # xrec
            pl.BlockSpec((TB, 2 * LATENT_DIM), batch_map),             # [mu | logvar]
        ),
        compiler_params=pltpu.CompilerParams(
            dimension_semantics=("parallel",)),                        # v7x: 2 TCs
    )(
        x_p,
        kparams["enc_w1"], kparams["enc_b1"],
        kparams["enc_wmulv"], kparams["enc_bmulv"],
        eps_p,
        kparams["dec_w1"], kparams["dec_b1"],
        kparams["dec_w2"], kparams["dec_b2"],
    )

    x_recon = xrec_p[:B, :INPUT_DIM]
    mu = mulv_p[:B, :LATENT_DIM]
    logvar = mulv_p[:B, LATENT_DIM:]
    return x_recon, mu, logvar


# --------------------------------------------------------------------------
# Parameter construction
# --------------------------------------------------------------------------
def init_params(key):
    """f32 master weights, nn.Linear-style uniform(-1/sqrt(in), 1/sqrt(in));
    stored pre-transposed as (in_features, out_features)."""
    def linear(k, fan_in, fan_out):
        kw, kb = jax.random.split(k)
        bound = 1.0 / (fan_in ** 0.5)
        w = jax.random.uniform(kw, (fan_in, fan_out), jnp.float32, -bound, bound)
        b = jax.random.uniform(kb, (1, fan_out), jnp.float32, -bound, bound)
        return w, b

    keys = jax.random.split(key, 5)
    enc_w1, enc_b1 = linear(keys[0], INPUT_DIM, HIDDEN_DIM)
    enc_wmu, enc_bmu = linear(keys[1], HIDDEN_DIM, LATENT_DIM)
    enc_wlv, enc_blv = linear(keys[2], HIDDEN_DIM, LATENT_DIM)
    dec_w1, dec_b1 = linear(keys[3], LATENT_DIM, HIDDEN_DIM)
    dec_w2, dec_b2 = linear(keys[4], HIDDEN_DIM, INPUT_DIM)
    return dict(enc_w1=enc_w1, enc_b1=enc_b1, enc_wmu=enc_wmu, enc_bmu=enc_bmu,
                enc_wlv=enc_wlv, enc_blv=enc_blv, dec_w1=dec_w1, dec_b1=dec_b1,
                dec_w2=dec_w2, dec_b2=dec_b2)


def prepare_params(p):
    """One-time packing for the kernel:
       * big matrices -> bf16 (halves the dominant HBM weight DMA)
       * enc_w1 rows / dec_w2 cols / dec_b2 zero-padded 784 -> 896 (lane-dense)
       * mu / logvar heads fused into a single (400, 40) weight + (1, 40) bias."""
    pad_k = INPUT_PAD - INPUT_DIM
    enc_w1 = jnp.pad(p["enc_w1"], ((0, pad_k), (0, 0))).astype(jnp.bfloat16)
    dec_w2 = jnp.pad(p["dec_w2"], ((0, 0), (0, pad_k))).astype(jnp.bfloat16)
    dec_b2 = jnp.pad(p["dec_b2"], ((0, 0), (0, pad_k)))
    enc_wmulv = jnp.concatenate([p["enc_wmu"], p["enc_wlv"]], axis=1)
    enc_bmulv = jnp.concatenate([p["enc_bmu"], p["enc_blv"]], axis=1)
    return dict(enc_w1=enc_w1, enc_b1=p["enc_b1"],
                enc_wmulv=enc_wmulv, enc_bmulv=enc_bmulv,
                dec_w1=p["dec_w1"], dec_b1=p["dec_b1"],
                dec_w2=dec_w2, dec_b2=dec_b2)


# --------------------------------------------------------------------------
# References
# --------------------------------------------------------------------------
def vae_ref_matched(x, kp, eps):
    """Pure-JAX reference with the SAME numerics as the kernel (bf16 big matmuls)."""
    xb = x.astype(jnp.bfloat16)
    h = jnp.maximum(jnp.dot(xb, kp["enc_w1"][:INPUT_DIM],
                            preferred_element_type=jnp.float32) + kp["enc_b1"], 0.0)
    mulv = jnp.dot(h, kp["enc_wmulv"],
                   preferred_element_type=jnp.float32) + kp["enc_bmulv"]
    mu, logvar = mulv[:, :LATENT_DIM], mulv[:, LATENT_DIM:]
    z = mu + eps * jnp.exp(0.5 * logvar)
    hd = jnp.maximum(jnp.dot(z, kp["dec_w1"],
                             preferred_element_type=jnp.float32) + kp["dec_b1"], 0.0)
    logits = jnp.dot(hd.astype(jnp.bfloat16), kp["dec_w2"][:, :INPUT_DIM],
                     preferred_element_type=jnp.float32) + kp["dec_b2"][:, :INPUT_DIM]
    return jax.nn.sigmoid(logits), mu, logvar


def vae_ref_f32(x, p, eps):
    """Full-precision reference mirroring the PyTorch forward exactly."""
    h = jnp.maximum(x @ p["enc_w1"] + p["enc_b1"], 0.0)
    mu = h @ p["enc_wmu"] + p["enc_bmu"]
    logvar = h @ p["enc_wlv"] + p["enc_blv"]
    z = mu + eps * jnp.exp(0.5 * logvar)
    hd = jnp.maximum(z @ p["dec_w1"] + p["dec_b1"], 0.0)
    return jax.nn.sigmoid(hd @ p["dec_w2"] + p["dec_b2"]), mu, logvar


# --------------------------------------------------------------------------
if __name__ == "__main__":
    key = jax.random.PRNGKey(0)
    k_param, k_x, k_eps, k_x2, k_eps2 = jax.random.split(key, 5)

    master = init_params(k_param)
    kparams = prepare_params(master)

    # --- small batch (single grid step) ---
    # TODO(synk): torch.randn_like is sampled outside the kernel (eps) for determinism.
    B = 8
    x = jax.random.uniform(k_x, (B, INPUT_DIM), jnp.float32)
    eps = jax.random.normal(k_eps, (B, LATENT_DIM), jnp.float32)
    xr, mu, lv = jax.block_until_ready(vae_forward(x, kparams, eps))

    assert xr.shape == (B, INPUT_DIM) and mu.shape == (B, LATENT_DIM) and lv.shape == (B, LATENT_DIM)
    xr_m, mu_m, lv_m = vae_ref_matched(x, kparams, eps)
    assert jnp.allclose(xr, xr_m, atol=1e-2, rtol=1e-2)
    assert jnp.allclose(mu, mu_m, atol=1e-2, rtol=1e-2)
    assert jnp.allclose(lv, lv_m, atol=1e-2, rtol=1e-2)

    # bf16 big weights stay close to the f32 PyTorch-equivalent forward.
    xr_f, mu_f, lv_f = vae_ref_f32(x, master, eps)
    assert jnp.allclose(xr, xr_f, atol=5e-2)
    assert jnp.allclose(mu, mu_f, atol=5e-2)
    assert jnp.allclose(lv, lv_f, atol=5e-2)

    # --- larger batch: exercises the batch grid (weights DMA'd once, resident
    #     across grid steps; "parallel" axis shards steps across v7x TCs) ---
    B2 = 512
    x2 = jax.random.uniform(k_x2, (B2, INPUT_DIM), jnp.float32)
    eps2 = jax.random.normal(k_eps2, (B2, LATENT_DIM), jnp.float32)
    xr2, mu2, lv2 = jax.block_until_ready(vae_forward(x2, kparams, eps2, batch_tile=256))
    xr2_m, mu2_m, lv2_m = vae_ref_matched(x2, kparams, eps2)
    assert jnp.allclose(xr2, xr2_m, atol=1e-2, rtol=1e-2)
    assert jnp.allclose(mu2, mu2_m, atol=1e-2, rtol=1e-2)
    assert jnp.allclose(lv2, lv2_m, atol=1e-2, rtol=1e-2)

    print("KERNEL_OK")
</pallas_src>

<mosaic_0001>
module attributes {stable_mosaic.version = 11 : i64} {
  func.func @vae_kernel(%arg0: i32, %arg1: memref<8x896xf32, #tpu.memory_space<vmem>>, %arg2: memref<896x400xbf16, #tpu.memory_space<vmem>>, %arg3: memref<1x400xf32, #tpu.memory_space<vmem>>, %arg4: memref<400x40xf32, #tpu.memory_space<vmem>>, %arg5: memref<1x40xf32, #tpu.memory_space<vmem>>, %arg6: memref<8x20xf32, #tpu.memory_space<vmem>>, %arg7: memref<20x400xf32, #tpu.memory_space<vmem>>, %arg8: memref<1x400xf32, #tpu.memory_space<vmem>>, %arg9: memref<400x896xbf16, #tpu.memory_space<vmem>>, %arg10: memref<1x896xf32, #tpu.memory_space<vmem>>, %arg11: memref<8x896xf32, #tpu.memory_space<vmem>>, %arg12: memref<8x40xf32, #tpu.memory_space<vmem>>) attributes {dimension_semantics = [#tpu.dimension_semantics<parallel>], iteration_bounds = array<i64: 1>, scalar_prefetch = 0 : i64, scratch_operands = 0 : i64, tpu.core_type = #tpu.core_type<tc>, window_params = [{transform_indices = @transform_0, window_bounds = array<i64: 8, 896>}, {pipeline_mode = #tpu.pipeline_mode<synchronous>, transform_indices = @transform_1, window_bounds = array<i64: 896, 400>}, {pipeline_mode = #tpu.pipeline_mode<synchronous>, transform_indices = @transform_2, window_bounds = array<i64: 1, 400>}, {pipeline_mode = #tpu.pipeline_mode<synchronous>, transform_indices = @transform_3, window_bounds = array<i64: 400, 40>}, {pipeline_mode = #tpu.pipeline_mode<synchronous>, transform_indices = @transform_4, window_bounds = array<i64: 1, 40>}, {transform_indices = @transform_5, window_bounds = array<i64: 8, 20>}, {pipeline_mode = #tpu.pipeline_mode<synchronous>, transform_indices = @transform_6, window_bounds = array<i64: 20, 400>}, {pipeline_mode = #tpu.pipeline_mode<synchronous>, transform_indices = @transform_7, window_bounds = array<i64: 1, 400>}, {pipeline_mode = #tpu.pipeline_mode<synchronous>, transform_indices = @transform_8, window_bounds = array<i64: 400, 896>}, {pipeline_mode = #tpu.pipeline_mode<synchronous>, transform_indices = @transform_9, window_bounds = array<i64: 1, 896>}, {transform_indices = @transform_10, window_bounds = array<i64: 8, 896>}, {transform_indices = @transform_11, window_bounds = array<i64: 8, 40>}]} {
    %c0 = arith.constant 0 : index
    %c0_0 = arith.constant 0 : index
    %0 = vector.load %arg1[%c0, %c0_0] : memref<8x896xf32, #tpu.memory_space<vmem>>, vector<8x896xf32>
    %1 = arith.truncf %0 : vector<8x896xf32> to vector<8x896xbf16>
    %c0_1 = arith.constant 0 : index
    %c0_2 = arith.constant 0 : index
    %2 = vector.load %arg2[%c0_1, %c0_2] : memref<896x400xbf16, #tpu.memory_space<vmem>>, vector<896x400xbf16>
    %cst = arith.constant dense<0.000000e+00> : vector<8x400xf32>
    %3 = tpu.matmul %1, %2, %cst {dimension_numbers = #tpu.dot_dimension_numbers<[1], [0], [0], [1], [0, 0, 1, 1], [], []>} : vector<8x896xbf16>, vector<896x400xbf16>, vector<8x400xf32> -> vector<8x400xf32>
    %c0_3 = arith.constant 0 : index
    %c0_4 = arith.constant 0 : index
    %4 = vector.load %arg3[%c0_3, %c0_4] : memref<1x400xf32, #tpu.memory_space<vmem>>, vector<1x400xf32>
    %5 = vector.broadcast %4 : vector<1x400xf32> to vector<8x400xf32>
    %6 = arith.addf %3, %5 : vector<8x400xf32>
    %cst_5 = arith.constant 0.000000e+00 : f32
    %7 = vector.broadcast %cst_5 : f32 to vector<8x400xf32>
    %8 = arith.maximumf %6, %7 : vector<8x400xf32>
    %c0_6 = arith.constant 0 : index
    %c0_7 = arith.constant 0 : index
    %9 = vector.load %arg4[%c0_6, %c0_7] : memref<400x40xf32, #tpu.memory_space<vmem>>, vector<400x40xf32>
    %cst_8 = arith.constant dense<0.000000e+00> : vector<8x40xf32>
    %10 = tpu.matmul %8, %9, %cst_8 {dimension_numbers = #tpu.dot_dimension_numbers<[1], [0], [0], [1], [0, 0, 1, 1], [], []>} : vector<8x400xf32>, vector<400x40xf32>, vector<8x40xf32> -> vector<8x40xf32>
    %c0_9 = arith.constant 0 : index
    %c0_10 = arith.constant 0 : index
    %11 = vector.load %arg5[%c0_9, %c0_10] : memref<1x40xf32, #tpu.memory_space<vmem>>, vector<1x40xf32>
    %12 = vector.broadcast %11 : vector<1x40xf32> to vector<8x40xf32>
    %13 = arith.addf %10, %12 : vector<8x40xf32>
    %c0_11 = arith.constant 0 : index
    %c0_12 = arith.constant 0 : index
    %14 = vector.load %arg12[%c0_11, %c0_12] : memref<8x40xf32, #tpu.memory_space<vmem>>, vector<8x40xf32>
    tpu.vector_store %arg12[%c0_11, %c0_12], %13 {strides = array<i32>} : memref<8x40xf32, #tpu.memory_space<vmem>>, vector<8x40xf32>,
    %15 = vector.extract_strided_slice %13 {offsets = [0, 0], sizes = [8, 20], strides = [1, 1]} : vector<8x40xf32> to vector<8x20xf32>
    %16 = vector.extract_strided_slice %13 {offsets = [0, 20], sizes = [8, 20], strides = [1, 1]} : vector<8x40xf32> to vector<8x20xf32>
    %c0_13 = arith.constant 0 : index
    %c0_14 = arith.constant 0 : index
    %17 = vector.load %arg6[%c0_13, %c0_14] : memref<8x20xf32, #tpu.memory_space<vmem>>, vector<8x20xf32>
    %cst_15 = arith.constant 5.000000e-01 : f32
    %18 = vector.broadcast %cst_15 : f32 to vector<8x20xf32>
    %19 = arith.mulf %18, %16 : vector<8x20xf32>
    %20 = math.exp %19 : vector<8x20xf32>
    %21 = arith.mulf %17, %20 : vector<8x20xf32>
    %22 = arith.addf %15, %21 : vector<8x20xf32>
    %c0_16 = arith.constant 0 : index
    %c0_17 = arith.constant 0 : index
    %23 = vector.load %arg7[%c0_16, %c0_17] : memref<20x400xf32, #tpu.memory_space<vmem>>, vector<20x400xf32>
    %cst_18 = arith.constant dense<0.000000e+00> : vector<8x400xf32>
    %24 = tpu.matmul %22, %23, %cst_18 {dimension_numbers = #tpu.dot_dimension_numbers<[1], [0], [0], [1], [0, 0, 1, 1], [], []>} : vector<8x20xf32>, vector<20x400xf32>, vector<8x400xf32> -> vector<8x400xf32>
    %c0_19 = arith.constant 0 : index
    %c0_20 = arith.constant 0 : index
    %25 = vector.load %arg8[%c0_19, %c0_20] : memref<1x400xf32, #tpu.memory_space<vmem>>, vector<1x400xf32>
    %26 = vector.broadcast %25 : vector<1x400xf32> to vector<8x400xf32>
    %27 = arith.addf %24, %26 : vector<8x400xf32>
    %cst_21 = arith.constant 0.000000e+00 : f32
    %28 = vector.broadcast %cst_21 : f32 to vector<8x400xf32>
    %29 = arith.maximumf %27, %28 : vector<8x400xf32>
    %30 = arith.truncf %29 : vector<8x400xf32> to vector<8x400xbf16>
    %c0_22 = arith.constant 0 : index
    %c0_23 = arith.constant 0 : index
    %31 = vector.load %arg9[%c0_22, %c0_23] : memref<400x896xbf16, #tpu.memory_space<vmem>>, vector<400x896xbf16>
    %cst_24 = arith.constant dense<0.000000e+00> : vector<8x896xf32>
    %32 = tpu.matmul %30, %31, %cst_24 {dimension_numbers = #tpu.dot_dimension_numbers<[1], [0], [0], [1], [0, 0, 1, 1], [], []>} : vector<8x400xbf16>, vector<400x896xbf16>, vector<8x896xf32> -> vector<8x896xf32>
    %c0_25 = arith.constant 0 : index
    %c0_26 = arith.constant 0 : index
    %33 = vector.load %arg10[%c0_25, %c0_26] : memref<1x896xf32, #tpu.memory_space<vmem>>, vector<1x896xf32>
    %34 = vector.broadcast %33 : vector<1x896xf32> to vector<8x896xf32>
    %35 = arith.addf %32, %34 : vector<8x896xf32>
    %36 = arith.negf %35 : vector<8x896xf32>
    %37 = math.exp %36 : vector<8x896xf32>
    %cst_27 = arith.constant 1.000000e+00 : f32
    %38 = vector.broadcast %cst_27 : f32 to vector<8x896xf32>
    %39 = arith.addf %38, %37 : vector<8x896xf32>
    %40 = arith.divf %38, %39 : vector<8x896xf32>
    %c0_28 = arith.constant 0 : index
    %c0_29 = arith.constant 0 : index
    %41 = vector.load %arg11[%c0_28, %c0_29] : memref<8x896xf32, #tpu.memory_space<vmem>>, vector<8x896xf32>
    tpu.vector_store %arg11[%c0_28, %c0_29], %40 {strides = array<i32>} : memref<8x896xf32, #tpu.memory_space<vmem>>, vector<8x896xf32>,
    return
  }
  func.func @transform_0(%arg0: i32) -> (i32, i32) {
    %c0_i32 = arith.constant 0 : i32
    %c0_i32_0 = arith.constant 0 : i32
    return %arg0, %c0_i32 : i32, i32
  }
  func.func @transform_1(%arg0: i32) -> (i32, i32) {
    %c0_i32 = arith.constant 0 : i32
    %c0_i32_0 = arith.constant 0 : i32
    %c0_i32_1 = arith.constant 0 : i32
    return %c0_i32, %c0_i32_0 : i32, i32
  }
  func.func @transform_2(%arg0: i32) -> (i32, i32) {
    %c0_i32 = arith.constant 0 : i32
    %c0_i32_0 = arith.constant 0 : i32
    %c0_i32_1 = arith.constant 0 : i32
    return %c0_i32, %c0_i32_0 : i32, i32
  }
  func.func @transform_3(%arg0: i32) -> (i32, i32) {
    %c0_i32 = arith.constant 0 : i32
    %c0_i32_0 = arith.constant 0 : i32
    %c0_i32_1 = arith.constant 0 : i32
    return %c0_i32, %c0_i32_0 : i32, i32
  }
  func.func @transform_4(%arg0: i32) -> (i32, i32) {
    %c0_i32 = arith.constant 0 : i32
    %c0_i32_0 = arith.constant 0 : i32
    %c0_i32_1 = arith.constant 0 : i32
    return %c0_i32, %c0_i32_0 : i32, i32
  }
  func.func @transform_5(%arg0: i32) -> (i32, i32) {
    %c0_i32 = arith.constant 0 : i32
    %c0_i32_0 = arith.constant 0 : i32
    return %arg0, %c0_i32 : i32, i32
  }
  func.func @transform_6(%arg0: i32) -> (i32, i32) {
    %c0_i32 = arith.constant 0 : i32
    %c0_i32_0 = arith.constant 0 : i32
    %c0_i32_1 = arith.constant 0 : i32
    return %c0_i32, %c0_i32_0 : i32, i32
  }
  func.func @transform_7(%arg0: i32) -> (i32, i32) {
    %c0_i32 = arith.constant 0 : i32
    %c0_i32_0 = arith.constant 0 : i32
    %c0_i32_1 = arith.constant 0 : i32
    return %c0_i32, %c0_i32_0 : i32, i32
  }
  func.func @transform_8(%arg0: i32) -> (i32, i32) {
    %c0_i32 = arith.constant 0 : i32
    %c0_i32_0 = arith.constant 0 : i32
    %c0_i32_1 = arith.constant 0 : i32
    return %c0_i32, %c0_i32_0 : i32, i32
  }
  func.func @transform_9(%arg0: i32) -> (i32, i32) {
    %c0_i32 = arith.constant 0 : i32
    %c0_i32_0 = arith.constant 0 : i32
    %c0_i32_1 = arith.constant 0 : i32
    return %c0_i32, %c0_i32_0 : i32, i32
  }
  func.func @transform_10(%arg0: i32) -> (i32, i32) {
    %c0_i32 = arith.constant 0 : i32
    %c0_i32_0 = arith.constant 0 : i32
    return %arg0, %c0_i32 : i32, i32
  }
  func.func @transform_11(%arg0: i32) -> (i32, i32) {
    %c0_i32 = arith.constant 0 : i32
    %c0_i32_0 = arith.constant 0 : i32
    return %arg0, %c0_i32 : i32, i32
  }
}

</mosaic_0001>

<llo_original>
// kernel: tpu_custom_call.1
$region0: #{tpu_custom_call.1}
  #allocation0 [shape = 'u32[]', space=smem, size = 0x4, offset = 0x4, fixed_abs, tag = 'smem constant byte address 0x4 - core index']
  #allocation1 [shape = 'u32[144,128]{1,0:T(1,128)}', space=vmem, size = 0x12000, scoped, tag = 'internal scratch']
  %s0 = inlined_call_operand.vmem [shape: f32[8,896], index: 0, kind: input, shape index: {}]
  %s1 = inlined_call_operand.vmem [shape: bf16[896,400], index: 1, kind: input, shape index: {}]
  %s2 = inlined_call_operand.vmem [shape: f32[1,400], index: 2, kind: input, shape index: {}]
  %s3 = inlined_call_operand.vmem [shape: f32[400,40], index: 3, kind: input, shape index: {}]
  %s4 = inlined_call_operand.vmem [shape: f32[1,40], index: 4, kind: input, shape index: {}]
  %s5 = inlined_call_operand.vmem [shape: f32[8,20], index: 5, kind: input, shape index: {}]
  %s6 = inlined_call_operand.vmem [shape: f32[20,400], index: 6, kind: input, shape index: {}]
  %s7 = inlined_call_operand.vmem [shape: f32[1,400], index: 7, kind: input, shape index: {}]
  %s8 = inlined_call_operand.vmem [shape: bf16[400,896], index: 8, kind: input, shape index: {}]
  %s9 = inlined_call_operand.vmem [shape: f32[1,896], index: 9, kind: input, shape index: {}]
  %s10 = inlined_call_operand.hbm [shape: f32[8,896], index: 10, kind: output, shape index: {0}]
  %s11 = inlined_call_operand.hbm [shape: f32[8,40], index: 11, kind: output, shape index: {1}]
  %12 = xla_tuple %s10, %s11
  %s13 = sld [smem:[#allocation0]]
  $region58: #{tpu_custom_call.1} parent=0
    _
  %s15 = ssub.s32 1, %s13
  %s16 = scalar_select 0, %s15, %s13
  $region1: #{tpu_custom_call.1} parent=0
    #allocation2 [shape = 'u8[28672]{0}', space=vmem, size = 0x7000, scoped, tag = 'output window, operand 0, single buffered']
    #allocation3 [shape = 's32[1]{0}', space=sflag, size = 0x4, scoped, tag = 'scoped memory for tpu_custom_call.1']
    #allocation4 [shape = 'u8[4096]{0}', space=vmem, size = 0x1000, scoped, tag = 'output window, operand 1, single buffered']
    #allocation5 [shape = 's32[1]{0}', space=sflag, size = 0x4, scoped, tag = 'scoped memory for tpu_custom_call.1']
    %17 = vsyncpa [#allocation3], 0
    %18 = vsyncpa [#allocation5], 0
    // Predicated region
    $region2: #{tpu_custom_call.1} parent=1 // pred_check
      _
    $region3: #{tpu_custom_call.1} parent=1 // pred_check_branch
      %20 = sbr.rel (0) target = $region5
    $region4: #{tpu_custom_call.1} parent=1 // pred_region
      _
    $region5: #{tpu_custom_call.1} parent=1 // pred_fallthru
      _
    // Predicated region
    $region6: #{tpu_custom_call.1} parent=1 // pred_check
      _
    $region7: #{tpu_custom_call.1} parent=1 // pred_check_branch
      %22 = sbr.rel (0) target = $region9
    $region8: #{tpu_custom_call.1} parent=1 // pred_region
      _
    $region9: #{tpu_custom_call.1} parent=1 // pred_fallthru
      _
    // Predicated region
    $region10: #{tpu_custom_call.1} parent=1 // pred_check
      _
    $region11: #{tpu_custom_call.1} parent=1 // pred_check_branch
      %24 = sbr.rel (0) target = $region13
    $region12: #{tpu_custom_call.1} parent=1 // pred_region
      _
    $region13: #{tpu_custom_call.1} parent=1 // pred_fallthru
      _
    // Predicated region
    $region14: #{tpu_custom_call.1} parent=1 // pred_check
      _
    $region15: #{tpu_custom_call.1} parent=1 // pred_check_branch
      %26 = sbr.rel (0) target = $region17
    $region16: #{tpu_custom_call.1} parent=1 // pred_region
      _
    $region17: #{tpu_custom_call.1} parent=1 // pred_fallthru
      _
    // Predicated region
    $region18: #{tpu_custom_call.1} parent=1 // pred_check
      _
    $region19: #{tpu_custom_call.1} parent=1 // pred_check_branch
      %28 = sbr.rel (0) target = $region21
    $region20: #{tpu_custom_call.1} parent=1 // pred_region
      _
    $region21: #{tpu_custom_call.1} parent=1 // pred_fallthru
      _
    // Predicated region
    $region22: #{tpu_custom_call.1} parent=1 // pred_check
      _
    $region23: #{tpu_custom_call.1} parent=1 // pred_check_branch
      %30 = sbr.rel (0) target = $region25
    $region24: #{tpu_custom_call.1} parent=1 // pred_region
      _
    $region25: #{tpu_custom_call.1} parent=1 // pred_fallthru
      _
    // Predicated region
    $region26: #{tpu_custom_call.1} parent=1 // pred_check
      _
    $region27: #{tpu_custom_call.1} parent=1 // pred_check_branch
      %32 = sbr.rel (0) target = $region29
    $region28: #{tpu_custom_call.1} parent=1 // pred_region
      _
    $region29: #{tpu_custom_call.1} parent=1 // pred_fallthru
      _
    // Predicated region
    $region30: #{tpu_custom_call.1} parent=1 // pred_check
      _
    $region31: #{tpu_custom_call.1} parent=1 // pred_check_branch
      %34 = sbr.rel (0) target = $region33
    $region32: #{tpu_custom_call.1} parent=1 // pred_region
      _
    $region33: #{tpu_custom_call.1} parent=1 // pred_fallthru
      _
    // Predicated region
    $region34: #{tpu_custom_call.1} parent=1 // pred_check
      _
    $region35: #{tpu_custom_call.1} parent=1 // pred_check_branch
      %36 = sbr.rel (0) target = $region37
    $region36: #{tpu_custom_call.1} parent=1 // pred_region
      _
    $region37: #{tpu_custom_call.1} parent=1 // pred_fallthru
      _
    // Predicated region
    $region38: #{tpu_custom_call.1} parent=1 // pred_check
      _
    $region39: #{tpu_custom_call.1} parent=1 // pred_check_branch
      %38 = sbr.rel (0) target = $region41
    $region40: #{tpu_custom_call.1} parent=1 // pred_region
      _
    $region41: #{tpu_custom_call.1} parent=1 // pred_fallthru
      _
    %v40 = vld [vmem:[%s0] sm:$0xff]
    %v41 = vld [vmem:[%s0 + $0x8] sm:$0xff]
    %v42 = vld [vmem:[%s0 + $0x10] sm:$0xff]
    %v43 = vld [vmem:[%s0 + $0x18] sm:$0xff]
    %v44 = vld [vmem:[%s0 + $0x20] sm:$0xff]
    %v45 = vld [vmem:[%s0 + $0x28] sm:$0xff]
    %v46 = vld [vmem:[%s0 + $0x30] sm:$0xff]
    %v47 = vpack.c.bf16 %v40, %v40
    %v48 = vpack.c.bf16 %v41, %v41
    %v49 = vpack.c.bf16 %v42, %v42
    %v50 = vpack.c.bf16 %v43, %v43
    %v51 = vpack.c.bf16 %v44, %v44
    %v52 = vpack.c.bf16 %v45, %v45
    %v53 = vpack.c.bf16 %v46, %v46
    %v54 = vld [vmem:[%s1] sm:$0xff]
    %v55 = vld [vmem:[%s1 + $0x8] sm:$0xff]
    %v56 = vld [vmem:[%s1 + $0x10] sm:$0xff]
    %v57 = vld [vmem:[%s1 + $0x18] sm:$0xff]
    %v58 = vld [vmem:[%s1 + $0x20] sm:$0xff]
    %v59 = vld [vmem:[%s1 + $0x28] sm:$0xff]
    %v60 = vld [vmem:[%s1 + $0x30] sm:$0xff]
    %v61 = vld [vmem:[%s1 + $0x38] sm:$0xff]
    %v62 = vld [vmem:[%s1 + $0x40] sm:$0xff]
    %v63 = vld [vmem:[%s1 + $0x48] sm:$0xff]
    %v64 = vld [vmem:[%s1 + $0x50] sm:$0xff]
    %v65 = vld [vmem:[%s1 + $0x58] sm:$0xff]
    %v66 = vld [vmem:[%s1 + $0x60] sm:$0xff]
    %v67 = vld [vmem:[%s1 + $0x68] sm:$0xff]
    %v68 = vld [vmem:[%s1 + $0x70] sm:$0xff]
    %v69 = vld [vmem:[%s1 + $0x78] sm:$0xff]
    %v70 = vld [vmem:[%s1 + $0x80] sm:$0xff]
    %v71 = vld [vmem:[%s1 + $0x88] sm:$0xff]
    %v72 = vld [vmem:[%s1 + $0x90] sm:$0xff]
    %v73 = vld [vmem:[%s1 + $0x98] sm:$0xff]
    %v74 = vld [vmem:[%s1 + $0xa0] sm:$0xff]
    %v75 = vld [vmem:[%s1 + $0xa8] sm:$0xff]
    %v76 = vld [vmem:[%s1 + $0xb0] sm:$0xff]
    %v77 = vld [vmem:[%s1 + $0xb8] sm:$0xff]
    %v78 = vld [vmem:[%s1 + $0xc0] sm:$0xff]
    %v79 = vld [vmem:[%s1 + $0xc8] sm:$0xff]
    %v80 = vld [vmem:[%s1 + $0xd0] sm:$0xff]
    %v81 = vld [vmem:[%s1 + $0xd8] sm:$0xff]
    %v82 = vld [vmem:[%s1 + $0xe0] sm:$0xff]
    %v83 = vld [vmem:[%s1 + $0xe8] sm:$0xff]
    %v84 = vld [vmem:[%s1 + $0xf0] sm:$0xff]
    %v85 = vld [vmem:[%s1 + $0xf8] sm:$0xff]
    %v86 = vld [vmem:[%s1 + $0x100] sm:$0xff]
    %v87 = vld [vmem:[%s1 + $0x108] sm:$0xff]
    %v88 = vld [vmem:[%s1 + $0x110] sm:$0xff]
    %v89 = vld [vmem:[%s1 + $0x118] sm:$0xff]
    %v90 = vld [vmem:[%s1 + $0x120] sm:$0xff]
    %v91 = vld [vmem:[%s1 + $0x128] sm:$0xff]
    %v92 = vld [vmem:[%s1 + $0x130] sm:$0xff]
    %v93 = vld [vmem:[%s1 + $0x138] sm:$0xff]
    %v94 = vld [vmem:[%s1 + $0x140] sm:$0xff]
    %v95 = vld [vmem:[%s1 + $0x148] sm:$0xff]
    %v96 = vld [vmem:[%s1 + $0x150] sm:$0xff]
    %v97 = vld [vmem:[%s1 + $0x158] sm:$0xff]
    %v98 = vld [vmem:[%s1 + $0x160] sm:$0xff]
    %v99 = vld [vmem:[%s1 + $0x168] sm:$0xff]
    %v100 = vld [vmem:[%s1 + $0x170] sm:$0xff]
    %v101 = vld [vmem:[%s1 + $0x178] sm:$0xff]
    %v102 = vld [vmem:[%s1 + $0x180] sm:$0xff]
    %v103 = vld [vmem:[%s1 + $0x188] sm:$0xff]
    %v104 = vld [vmem:[%s1 + $0x190] sm:$0xff]
    %v105 = vld [vmem:[%s1 + $0x198] sm:$0xff]
    %v106 = vld [vmem:[%s1 + $0x1a0] sm:$0xff]
    %v107 = vld [vmem:[%s1 + $0x1a8] sm:$0xff]
    %v108 = vld [vmem:[%s1 + $0x1b0] sm:$0xff]
    %v109 = vld [vmem:[%s1 + $0x1b8] sm:$0xff]
    %v110 = vld [vmem:[%s1 + $0x1c0] sm:$0xff]
    %v111 = vld [vmem:[%s1 + $0x1c8] sm:$0xff]
    %v112 = vld [vmem:[%s1 + $0x1d0] sm:$0xff]
    %v113 = vld [vmem:[%s1 + $0x1d8] sm:$0xff]
    %v114 = vld [vmem:[%s1 + $0x1e0] sm:$0xff]
    %v115 = vld [vmem:[%s1 + $0x1e8] sm:$0xff]
    %v116 = vld [vmem:[%s1 + $0x1f0] sm:$0xff]
    %v117 = vld [vmem:[%s1 + $0x1f8] sm:$0xff]
    %v118 = vld [vmem:[%s1 + $0x200] sm:$0xff]
    %v119 = vld [vmem:[%s1 + $0x208] sm:$0xff]
    %v120 = vld [vmem:[%s1 + $0x210] sm:$0xff]
    %v121 = vld [vmem:[%s1 + $0x218] sm:$0xff]
    %v122 = vld [vmem:[%s1 + $0x220] sm:$0xff]
    %v123 = vld [vmem:[%s1 + $0x228] sm:$0xff]
    %v124 = vld [vmem:[%s1 + $0x230] sm:$0xff]
    %v125 = vld [vmem:[%s1 + $0x238] sm:$0xff]
    %v126 = vld [vmem:[%s1 + $0x240] sm:$0xff]
    %v127 = vld [vmem:[%s1 + $0x248] sm:$0xff]
    %v128 = vld [vmem:[%s1 + $0x250] sm:$0xff]
    %v129 = vld [vmem:[%s1 + $0x258] sm:$0xff]
    %v130 = vld [vmem:[%s1 + $0x260] sm:$0xff]
    %v131 = vld [vmem:[%s1 + $0x268] sm:$0xff]
    %v132 = vld [vmem:[%s1 + $0x270] sm:$0xff]
    %v133 = vld [vmem:[%s1 + $0x278] sm:$0xff]
    %v134 = vld [vmem:[%s1 + $0x280] sm:$0xff]
    %v135 = vld [vmem:[%s1 + $0x288] sm:$0xff]
    %v136 = vld [vmem:[%s1 + $0x290] sm:$0xff]
    %v137 = vld [vmem:[%s1 + $0x298] sm:$0xff]
    %v138 = vld [vmem:[%s1 + $0x2a0] sm:$0xff]
    %v139 = vld [vmem:[%s1 + $0x2a8] sm:$0xff]
    %v140 = vld [vmem:[%s1 + $0x2b0] sm:$0xff]
    %v141 = vld [vmem:[%s1 + $0x2b8] sm:$0xff]
    %v142 = vld [vmem:[%s1 + $0x2c0] sm:$0xff]
    %v143 = vld [vmem:[%s1 + $0x2c8] sm:$0xff]
    %v144 = vld [vmem:[%s1 + $0x2d0] sm:$0xff]
    %v145 = vld [vmem:[%s1 + $0x2d8] sm:$0xff]
    %v146 = vld [vmem:[%s1 + $0x2e0] sm:$0xff]
    %v147 = vld [vmem:[%s1 + $0x2e8] sm:$0xff]
    %v148 = vld [vmem:[%s1 + $0x2f0] sm:$0xff]
    %v149 = vld [vmem:[%s1 + $0x2f8] sm:$0xff]
    %v150 = vld [vmem:[%s1 + $0x300] sm:$0xff]
    %v151 = vld [vmem:[%s1 + $0x308] sm:$0xff]
    %v152 = vld [vmem:[%s1 + $0x310] sm:$0xff]
    %v153 = vld [vmem:[%s1 + $0x318] sm:$0xff]
    %v154 = vld [vmem:[%s1 + $0x320] sm:$0xff]
    %v155 = vld [vmem:[%s1 + $0x328] sm:$0xff]
    %v156 = vld [vmem:[%s1 + $0x330] sm:$0xff]
    %v157 = vld [vmem:[%s1 + $0x338] sm:$0xff]
    %v158 = vld [vmem:[%s1 + $0x340] sm:$0xff]
    %v159 = vld [vmem:[%s1 + $0x348] sm:$0xff]
    %v160 = vld [vmem:[%s1 + $0x350] sm:$0xff]
    %v161 = vld [vmem:[%s1 + $0x358] sm:$0xff]
    %v162 = vld [vmem:[%s1 + $0x360] sm:$0xff]
    %v163 = vld [vmem:[%s1 + $0x368] sm:$0xff]
    %v164 = vld [vmem:[%s1 + $0x370] sm:$0xff]
    %v165 = vld [vmem:[%s1 + $0x378] sm:$0xff]
    %v166 = vld [vmem:[%s1 + $0x380] sm:$0xff]
    %v167 = vld [vmem:[%s1 + $0x388] sm:$0xff]
    %v168 = vld [vmem:[%s1 + $0x390] sm:$0xff]
    %v169 = vld [vmem:[%s1 + $0x398] sm:$0xff]
    %v170 = vld [vmem:[%s1 + $0x3a0] sm:$0xff]
    %v171 = vld [vmem:[%s1 + $0x3a8] sm:$0xff]
    %v172 = vld [vmem:[%s1 + $0x3b0] sm:$0xff]
    %v173 = vld [vmem:[%s1 + $0x3b8] sm:$0xff]
    %v174 = vld [vmem:[%s1 + $0x3c0] sm:$0xff]
    %v175 = vld [vmem:[%s1 + $0x3c8] sm:$0xff]
    %v176 = vld [vmem:[%s1 + $0x3d0] sm:$0xff]
    %v177 = vld [vmem:[%s1 + $0x3d8] sm:$0xff]
    %v178 = vld [vmem:[%s1 + $0x3e0] sm:$0xff]
    %v179 = vld [vmem:[%s1 + $0x3e8] sm:$0xff]
    %v180 = vld [vmem:[%s1 + $0x3f0] sm:$0xff]
    %v181 = vld [vmem:[%s1 + $0x3f8] sm:$0xff]
    %v182 = vld [vmem:[%s1 + $0x400] sm:$0xff]
    %v183 = vld [vmem:[%s1 + $0x408] sm:$0xff]
    %v184 = vld [vmem:[%s1 + $0x410] sm:$0xff]
    %v185 = vld [vmem:[%s1 + $0x418] sm:$0xff]
    %v186 = vld [vmem:[%s1 + $0x420] sm:$0xff]
    %v187 = vld [vmem:[%s1 + $0x428] sm:$0xff]
    %v188 = vld [vmem:[%s1 + $0x430] sm:$0xff]
    %v189 = vld [vmem:[%s1 + $0x438] sm:$0xff]
    %v190 = vld [vmem:[%s1 + $0x440] sm:$0xff]
    %v191 = vld [vmem:[%s1 + $0x448] sm:$0xff]
    %v192 = vld [vmem:[%s1 + $0x450] sm:$0xff]
    %v193 = vld [vmem:[%s1 + $0x458] sm:$0xff]
    %v194 = vld [vmem:[%s1 + $0x460] sm:$0xff]
    %v195 = vld [vmem:[%s1 + $0x468] sm:$0xff]
    %v196 = vld [vmem:[%s1 + $0x470] sm:$0xff]
    %v197 = vld [vmem:[%s1 + $0x478] sm:$0xff]
    %v198 = vld [vmem:[%s1 + $0x480] sm:$0xff]
    %v199 = vld [vmem:[%s1 + $0x488] sm:$0xff]
    %v200 = vld [vmem:[%s1 + $0x490] sm:$0xff]
    %v201 = vld [vmem:[%s1 + $0x498] sm:$0xff]
    %v202 = vld [vmem:[%s1 + $0x4a0] sm:$0xff]
    %v203 = vld [vmem:[%s1 + $0x4a8] sm:$0xff]
    %v204 = vld [vmem:[%s1 + $0x4b0] sm:$0xff]
    %v205 = vld [vmem:[%s1 + $0x4b8] sm:$0xff]
    %v206 = vld [vmem:[%s1 + $0x4c0] sm:$0xff]
    %v207 = vld [vmem:[%s1 + $0x4c8] sm:$0xff]
    %v208 = vld [vmem:[%s1 + $0x4d0] sm:$0xff]
    %v209 = vld [vmem:[%s1 + $0x4d8] sm:$0xff]
    %v210 = vld [vmem:[%s1 + $0x4e0] sm:$0xff]
    %v211 = vld [vmem:[%s1 + $0x4e8] sm:$0xff]
    %v212 = vld [vmem:[%s1 + $0x4f0] sm:$0xff]
    %v213 = vld [vmem:[%s1 + $0x4f8] sm:$0xff]
    %v214 = vld [vmem:[%s1 + $0x500] sm:$0xff]
    %v215 = vld [vmem:[%s1 + $0x508] sm:$0xff]
    %v216 = vld [vmem:[%s1 + $0x510] sm:$0xff]
    %v217 = vld [vmem:[%s1 + $0x518] sm:$0xff]
    %v218 = vld [vmem:[%s1 + $0x520] sm:$0xff]
    %v219 = vld [vmem:[%s1 + $0x528] sm:$0xff]
    %v220 = vld [vmem:[%s1 + $0x530] sm:$0xff]
    %v221 = vld [vmem:[%s1 + $0x538] sm:$0xff]
    %v222 = vld [vmem:[%s1 + $0x540] sm:$0xff]
    %v223 = vld [vmem:[%s1 + $0x548] sm:$0xff]
    %v224 = vld [vmem:[%s1 + $0x550] sm:$0xff]
    %v225 = vld [vmem:[%s1 + $0x558] sm:$0xff]
    %v226 = vld [vmem:[%s1 + $0x560] sm:$0xff]
    %v227 = vld [vmem:[%s1 + $0x568] sm:$0xff]
    %v228 = vld [vmem:[%s1 + $0x570] sm:$0xff]
    %v229 = vld [vmem:[%s1 + $0x578] sm:$0xff]
    %v230 = vld [vmem:[%s1 + $0x580] sm:$0xff]
    %v231 = vld [vmem:[%s1 + $0x588] sm:$0xff]
    %v232 = vld [vmem:[%s1 + $0x590] sm:$0xff]
    %v233 = vld [vmem:[%s1 + $0x598] sm:$0xff]
    %v234 = vld [vmem:[%s1 + $0x5a0] sm:$0xff]
    %v235 = vld [vmem:[%s1 + $0x5a8] sm:$0xff]
    %v236 = vld [vmem:[%s1 + $0x5b0] sm:$0xff]
    %v237 = vld [vmem:[%s1 + $0x5b8] sm:$0xff]
    %v238 = vld [vmem:[%s1 + $0x5c0] sm:$0xff]
    %v239 = vld [vmem:[%s1 + $0x5c8] sm:$0xff]
    %v240 = vld [vmem:[%s1 + $0x5d0] sm:$0xff]
    %v241 = vld [vmem:[%s1 + $0x5d8] sm:$0xff]
    %v242 = vld [vmem:[%s1 + $0x5e0] sm:$0xff]
    %v243 = vld [vmem:[%s1 + $0x5e8] sm:$0xff]
    %v244 = vld [vmem:[%s1 + $0x5f0] sm:$0xff]
    %v245 = vld [vmem:[%s1 + $0x5f8] sm:$0xff]
    %v246 = vld [vmem:[%s1 + $0x600] sm:$0xff]
    %v247 = vld [vmem:[%s1 + $0x608] sm:$0xff]
    %v248 = vld [vmem:[%s1 + $0x610] sm:$0xff]
    %v249 = vld [vmem:[%s1 + $0x618] sm:$0xff]
    %v250 = vld [vmem:[%s1 + $0x620] sm:$0xff]
    %v251 = vld [vmem:[%s1 + $0x628] sm:$0xff]
    %v252 = vld [vmem:[%s1 + $0x630] sm:$0xff]
    %v253 = vld [vmem:[%s1 + $0x638] sm:$0xff]
    %v254 = vld [vmem:[%s1 + $0x640] sm:$0xff]
    %v255 = vld [vmem:[%s1 + $0x648] sm:$0xff]
    %v256 = vld [vmem:[%s1 + $0x650] sm:$0xff]
    %v257 = vld [vmem:[%s1 + $0x658] sm:$0xff]
    %v258 = vld [vmem:[%s1 + $0x660] sm:$0xff]
    %v259 = vld [vmem:[%s1 + $0x668] sm:$0xff]
    %v260 = vld [vmem:[%s1 + $0x670] sm:$0xff]
    %v261 = vld [vmem:[%s1 + $0x678] sm:$0xff]
    %v262 = vld [vmem:[%s1 + $0x680] sm:$0xff]
    %v263 = vld [vmem:[%s1 + $0x688] sm:$0xff]
    %v264 = vld [vmem:[%s1 + $0x690] sm:$0xff]
    %v265 = vld [vmem:[%s1 + $0x698] sm:$0xff]
    %v266 = vld [vmem:[%s1 + $0x6a0] sm:$0xff]
    %v267 = vld [vmem:[%s1 + $0x6a8] sm:$0xff]
    %v268 = vld [vmem:[%s1 + $0x6b0] sm:$0xff]
    %v269 = vld [vmem:[%s1 + $0x6b8] sm:$0xff]
    %v270 = vld [vmem:[%s1 + $0x6c0] sm:$0xff]
    %v271 = vld [vmem:[%s1 + $0x6c8] sm:$0xff]
    %v272 = vld [vmem:[%s1 + $0x6d0] sm:$0xff]
    %v273 = vld [vmem:[%s1 + $0x6d8] sm:$0xff]
    %v274 = vld [vmem:[%s1 + $0x6e0] sm:$0xff]
    %v275 = vld [vmem:[%s1 + $0x6e8] sm:$0xff]
    %v276 = vld [vmem:[%s1 + $0x6f0] sm:$0xff]
    %v277 = vld [vmem:[%s1 + $0x6f8] sm:$0xff]
    %v278 = vld [vmem:[%s2] sm:$0xf]
    %v280 = vlaneseq
    %v281 = vshrl.u32 %v280, 7
    %v282 = vsub.s32 0, %v281
    %v283 = vrot.slane %v278, %v282
    %v284 = vlaneseq
    %v285 = vshrl.u32 %v284, 7
    %v286 = vsub.s32 1, %v285
    %v287 = vrot.slane %v278, %v286
    %v288 = vlaneseq
    %v289 = vshrl.u32 %v288, 7
    %v290 = vsub.s32 2, %v289
    %v291 = vrot.slane %v278, %v290
    %v292 = vlaneseq
    %v293 = vshrl.u32 %v292, 7
    %v294 = vsub.s32 3, %v293
    %v295 = vrot.slane %v278, %v294
    %v524 = vunpack.c.l.b16 %v54
    %v525 = vunpack.c.h.b16 %v54
    %v526 = vunpack.c.l.b16 %v55
    %v527 = vunpack.c.h.b16 %v55
    %v528 = vunpack.c.l.b16 %v56
    %v529 = vunpack.c.h.b16 %v56
    %v530 = vunpack.c.l.b16 %v57
    %v531 = vunpack.c.h.b16 %v57
    %v532 = vunpack.c.l.b16 %v58
    %v533 = vunpack.c.h.b16 %v58
    %v534 = vunpack.c.l.b16 %v59
    %v535 = vunpack.c.h.b16 %v59
    %v536 = vunpack.c.l.b16 %v60
    %v537 = vunpack.c.h.b16 %v60
    %v538 = vunpack.c.l.b16 %v61
    %v539 = vunpack.c.h.b16 %v61
    %v540 = vunpack.c.l.b16 %v62
    %v541 = vunpack.c.h.b16 %v62
    %v542 = vunpack.c.l.b16 %v63
    %v543 = vunpack.c.h.b16 %v63
    %v544 = vunpack.c.l.b16 %v64
    %v545 = vunpack.c.h.b16 %v64
    %v546 = vunpack.c.l.b16 %v65
    %v547 = vunpack.c.h.b16 %v65
    %v548 = vunpack.c.l.b16 %v66
    %v549 = vunpack.c.h.b16 %v66
    %v550 = vunpack.c.l.b16 %v67
    %v551 = vunpack.c.h.b16 %v67
    %v552 = vunpack.c.l.b16 %v68
    %v553 = vunpack.c.h.b16 %v68
    %v554 = vunpack.c.l.b16 %v69
    %v555 = vunpack.c.h.b16 %v69
    %v556 = vunpack.c.l.b16 %v70
    %v557 = vunpack.c.h.b16 %v70
    %v558 = vunpack.c.l.b16 %v71
    %v559 = vunpack.c.h.b16 %v71
    %v560 = vunpack.c.l.b16 %v72
    %v561 = vunpack.c.h.b16 %v72
    %v562 = vunpack.c.l.b16 %v73
    %v563 = vunpack.c.h.b16 %v73
    %v564 = vunpack.c.l.b16 %v74
    %v565 = vunpack.c.h.b16 %v74
    %v566 = vunpack.c.l.b16 %v75
    %v567 = vunpack.c.h.b16 %v75
    %v568 = vunpack.c.l.b16 %v76
    %v569 = vunpack.c.h.b16 %v76
    %v570 = vunpack.c.l.b16 %v77
    %v571 = vunpack.c.h.b16 %v77
    %v572 = vunpack.c.l.b16 %v78
    %v573 = vunpack.c.h.b16 %v78
    %v574 = vunpack.c.l.b16 %v79
    %v575 = vunpack.c.h.b16 %v79
    %v576 = vunpack.c.l.b16 %v80
    %v577 = vunpack.c.h.b16 %v80
    %v578 = vunpack.c.l.b16 %v81
    %v579 = vunpack.c.h.b16 %v81
    %v580 = vunpack.c.l.b16 %v82
    %v581 = vunpack.c.h.b16 %v82
    %v582 = vunpack.c.l.b16 %v83
    %v583 = vunpack.c.h.b16 %v83
    %v584 = vunpack.c.l.b16 %v84
    %v585 = vunpack.c.h.b16 %v84
    %v586 = vunpack.c.l.b16 %v85
    %v587 = vunpack.c.h.b16 %v85
    %v588 = vunpack.c.l.b16 %v86
    %v589 = vunpack.c.h.b16 %v86
    %v590 = vunpack.c.l.b16 %v87
    %v591 = vunpack.c.h.b16 %v87
    %v592 = vunpack.c.l.b16 %v88
    %v593 = vunpack.c.h.b16 %v88
    %v594 = vunpack.c.l.b16 %v89
    %v595 = vunpack.c.h.b16 %v89
    %v596 = vunpack.c.l.b16 %v90
    %v597 = vunpack.c.h.b16 %v90
    %v598 = vunpack.c.l.b16 %v91
    %v599 = vunpack.c.h.b16 %v91
    %v600 = vunpack.c.l.b16 %v92
    %v601 = vunpack.c.h.b16 %v92
    %v602 = vunpack.c.l.b16 %v93
    %v603 = vunpack.c.h.b16 %v93
    %v604 = vunpack.c.l.b16 %v94
    %v605 = vunpack.c.h.b16 %v94
    %v606 = vunpack.c.l.b16 %v95
    %v607 = vunpack.c.h.b16 %v95
    %v608 = vunpack.c.l.b16 %v96
    %v609 = vunpack.c.h.b16 %v96
    %v610 = vunpack.c.l.b16 %v97
    %v611 = vunpack.c.h.b16 %v97
    %v612 = vunpack.c.l.b16 %v98
    %v613 = vunpack.c.h.b16 %v98
    %v614 = vunpack.c.l.b16 %v99
    %v615 = vunpack.c.h.b16 %v99
    %v616 = vunpack.c.l.b16 %v100
    %v617 = vunpack.c.h.b16 %v100
    %v618 = vunpack.c.l.b16 %v101
    %v619 = vunpack.c.h.b16 %v101
    %v620 = vunpack.c.l.b16 %v102
    %v621 = vunpack.c.h.b16 %v102
    %v622 = vunpack.c.l.b16 %v103
    %v623 = vunpack.c.h.b16 %v103
    %v624 = vunpack.c.l.b16 %v104
    %v625 = vunpack.c.h.b16 %v104
    %v626 = vunpack.c.l.b16 %v105
    %v627 = vunpack.c.h.b16 %v105
    %v628 = vunpack.c.l.b16 %v106
    %v629 = vunpack.c.h.b16 %v106
    %v630 = vunpack.c.l.b16 %v107
    %v631 = vunpack.c.h.b16 %v107
    %v632 = vunpack.c.l.b16 %v108
    %v633 = vunpack.c.h.b16 %v108
    %v634 = vunpack.c.l.b16 %v109
    %v635 = vunpack.c.h.b16 %v109
    %v636 = vunpack.c.l.b16 %v110
    %v637 = vunpack.c.h.b16 %v110
    %v638 = vunpack.c.l.b16 %v111
    %v639 = vunpack.c.h.b16 %v111
    %v640 = vunpack.c.l.b16 %v112
    %v641 = vunpack.c.h.b16 %v112
    %v642 = vunpack.c.l.b16 %v113
    %v643 = vunpack.c.h.b16 %v113
    %v644 = vunpack.c.l.b16 %v114
    %v645 = vunpack.c.h.b16 %v114
    %v646 = vunpack.c.l.b16 %v115
    %v647 = vunpack.c.h.b16 %v115
    %v648 = vunpack.c.l.b16 %v116
    %v649 = vunpack.c.h.b16 %v116
    %v650 = vunpack.c.l.b16 %v117
    %v651 = vunpack.c.h.b16 %v117
    %v652 = vunpack.c.l.b16 %v118
    %v653 = vunpack.c.h.b16 %v118
    %v654 = vunpack.c.l.b16 %v119
    %v655 = vunpack.c.h.b16 %v119
    %v656 = vunpack.c.l.b16 %v120
    %v657 = vunpack.c.h.b16 %v120
    %v658 = vunpack.c.l.b16 %v121
    %v659 = vunpack.c.h.b16 %v121
    %v660 = vunpack.c.l.b16 %v122
    %v661 = vunpack.c.h.b16 %v122
    %v662 = vunpack.c.l.b16 %v123
    %v663 = vunpack.c.h.b16 %v123
    %v664 = vunpack.c.l.b16 %v124
    %v665 = vunpack.c.h.b16 %v124
    %v666 = vunpack.c.l.b16 %v125
    %v667 = vunpack.c.h.b16 %v125
    %v668 = vunpack.c.l.b16 %v126
    %v669 = vunpack.c.h.b16 %v126
    %v670 = vunpack.c.l.b16 %v127
    %v671 = vunpack.c.h.b16 %v127
    %v672 = vunpack.c.l.b16 %v128
    %v673 = vunpack.c.h.b16 %v128
    %v674 = vunpack.c.l.b16 %v129
    %v675 = vunpack.c.h.b16 %v129
    %v676 = vunpack.c.l.b16 %v130
    %v677 = vunpack.c.h.b16 %v130
    %v678 = vunpack.c.l.b16 %v131
    %v679 = vunpack.c.h.b16 %v131
    %v680 = vunpack.c.l.b16 %v132
    %v681 = vunpack.c.h.b16 %v132
    %v682 = vunpack.c.l.b16 %v133
    %v683 = vunpack.c.h.b16 %v133
    %v684 = vunpack.c.l.b16 %v134
    %v685 = vunpack.c.h.b16 %v134
    %v686 = vunpack.c.l.b16 %v135
    %v687 = vunpack.c.h.b16 %v135
    %v688 = vunpack.c.l.b16 %v136
    %v689 = vunpack.c.h.b16 %v136
    %v690 = vunpack.c.l.b16 %v137
    %v691 = vunpack.c.h.b16 %v137
    %v692 = vunpack.c.l.b16 %v138
    %v693 = vunpack.c.h.b16 %v138
    %v694 = vunpack.c.l.b16 %v139
    %v695 = vunpack.c.h.b16 %v139
    %v696 = vunpack.c.l.b16 %v140
    %v697 = vunpack.c.h.b16 %v140
    %v698 = vunpack.c.l.b16 %v141
    %v699 = vunpack.c.h.b16 %v141
    %v700 = vunpack.c.l.b16 %v142
    %v701 = vunpack.c.h.b16 %v142
    %v702 = vunpack.c.l.b16 %v143
    %v703 = vunpack.c.h.b16 %v143
    %v704 = vunpack.c.l.b16 %v144
    %v705 = vunpack.c.h.b16 %v144
    %v706 = vunpack.c.l.b16 %v145
    %v707 = vunpack.c.h.b16 %v145
    %v708 = vunpack.c.l.b16 %v146
    %v709 = vunpack.c.h.b16 %v146
    %v710 = vunpack.c.l.b16 %v147
    %v711 = vunpack.c.h.b16 %v147
    %v712 = vunpack.c.l.b16 %v148
    %v713 = vunpack.c.h.b16 %v148
    %v714 = vunpack.c.l.b16 %v149
    %v715 = vunpack.c.h.b16 %v149
    %v716 = vunpack.c.l.b16 %v150
    %v717 = vunpack.c.h.b16 %v150
    %v718 = vunpack.c.l.b16 %v151
    %v719 = vunpack.c.h.b16 %v151
    %v720 = vunpack.c.l.b16 %v152
    %v721 = vunpack.c.h.b16 %v152
    %v722 = vunpack.c.l.b16 %v153
    %v723 = vunpack.c.h.b16 %v153
    %v724 = vunpack.c.l.b16 %v154
    %v725 = vunpack.c.h.b16 %v154
    %v726 = vunpack.c.l.b16 %v155
    %v727 = vunpack.c.h.b16 %v155
    %v728 = vunpack.c.l.b16 %v156
    %v729 = vunpack.c.h.b16 %v156
    %v730 = vunpack.c.l.b16 %v157
    %v731 = vunpack.c.h.b16 %v157
    %v732 = vunpack.c.l.b16 %v158
    %v733 = vunpack.c.h.b16 %v158
    %v734 = vunpack.c.l.b16 %v159
    %v735 = vunpack.c.h.b16 %v159
    %v736 = vunpack.c.l.b16 %v160
    %v737 = vunpack.c.h.b16 %v160
    %v738 = vunpack.c.l.b16 %v161
    %v739 = vunpack.c.h.b16 %v161
    %v740 = vunpack.c.l.b16 %v162
    %v741 = vunpack.c.h.b16 %v162
    %v742 = vunpack.c.l.b16 %v163
    %v743 = vunpack.c.h.b16 %v163
    %v744 = vunpack.c.l.b16 %v164
    %v745 = vunpack.c.h.b16 %v164
    %v746 = vunpack.c.l.b16 %v165
    %v747 = vunpack.c.h.b16 %v165
    %v748 = vunpack.c.l.b16 %v166
    %v749 = vunpack.c.h.b16 %v166
    %v750 = vunpack.c.l.b16 %v167
    %v751 = vunpack.c.h.b16 %v167
    %v752 = vunpack.c.l.b16 %v168
    %v753 = vunpack.c.h.b16 %v168
    %v754 = vunpack.c.l.b16 %v169
    %v755 = vunpack.c.h.b16 %v169
    %v756 = vunpack.c.l.b16 %v170
    %v757 = vunpack.c.h.b16 %v170
    %v758 = vunpack.c.l.b16 %v171
    %v759 = vunpack.c.h.b16 %v171
    %v760 = vunpack.c.l.b16 %v172
    %v761 = vunpack.c.h.b16 %v172
    %v762 = vunpack.c.l.b16 %v173
    %v763 = vunpack.c.h.b16 %v173
    %v764 = vunpack.c.l.b16 %v174
    %v765 = vunpack.c.h.b16 %v174
    %v766 = vunpack.c.l.b16 %v175
    %v767 = vunpack.c.h.b16 %v175
    %v768 = vunpack.c.l.b16 %v176
    %v769 = vunpack.c.h.b16 %v176
    %v770 = vunpack.c.l.b16 %v177
    %v771 = vunpack.c.h.b16 %v177
    %v772 = vunpack.c.l.b16 %v178
    %v773 = vunpack.c.h.b16 %v178
    %v774 = vunpack.c.l.b16 %v179
    %v775 = vunpack.c.h.b16 %v179
    %v776 = vunpack.c.l.b16 %v180
    %v777 = vunpack.c.h.b16 %v180
    %v778 = vunpack.c.l.b16 %v181
    %v779 = vunpack.c.h.b16 %v181
    %v780 = vunpack.c.l.b16 %v182
    %v781 = vunpack.c.h.b16 %v182
    %v782 = vunpack.c.l.b16 %v183
    %v783 = vunpack.c.h.b16 %v183
    %v784 = vunpack.c.l.b16 %v184
    %v785 = vunpack.c.h.b16 %v184
    %v786 = vunpack.c.l.b16 %v185
    %v787 = vunpack.c.h.b16 %v185
    %v788 = vunpack.c.l.b16 %v186
    %v789 = vunpack.c.h.b16 %v186
    %v790 = vunpack.c.l.b16 %v187
    %v791 = vunpack.c.h.b16 %v187
    %v792 = vunpack.c.l.b16 %v188
    %v793 = vunpack.c.h.b16 %v188
    %v794 = vunpack.c.l.b16 %v189
    %v795 = vunpack.c.h.b16 %v189
    %v796 = vunpack.c.l.b16 %v190
    %v797 = vunpack.c.h.b16 %v190
    %v798 = vunpack.c.l.b16 %v191
    %v799 = vunpack.c.h.b16 %v191
    %v800 = vunpack.c.l.b16 %v192
    %v801 = vunpack.c.h.b16 %v192
    %v802 = vunpack.c.l.b16 %v193
    %v803 = vunpack.c.h.b16 %v193
    %v804 = vunpack.c.l.b16 %v194
    %v805 = vunpack.c.h.b16 %v194
    %v806 = vunpack.c.l.b16 %v195
    %v807 = vunpack.c.h.b16 %v195
    %v808 = vunpack.c.l.b16 %v196
    %v809 = vunpack.c.h.b16 %v196
    %v810 = vunpack.c.l.b16 %v197
    %v811 = vunpack.c.h.b16 %v197
    %v812 = vunpack.c.l.b16 %v198
    %v813 = vunpack.c.h.b16 %v198
    %v814 = vunpack.c.l.b16 %v199
    %v815 = vunpack.c.h.b16 %v199
    %v816 = vunpack.c.l.b16 %v200
    %v817 = vunpack.c.h.b16 %v200
    %v818 = vunpack.c.l.b16 %v201
    %v819 = vunpack.c.h.b16 %v201
    %v820 = vunpack.c.l.b16 %v202
    %v821 = vunpack.c.h.b16 %v202
    %v822 = vunpack.c.l.b16 %v203
    %v823 = vunpack.c.h.b16 %v203
    %v824 = vunpack.c.l.b16 %v204
    %v825 = vunpack.c.h.b16 %v204
    %v826 = vunpack.c.l.b16 %v205
    %v827 = vunpack.c.h.b16 %v205
    %v828 = vunpack.c.l.b16 %v206
    %v829 = vunpack.c.h.b16 %v206
    %v830 = vunpack.c.l.b16 %v207
    %v831 = vunpack.c.h.b16 %v207
    %v832 = vunpack.c.l.b16 %v208
    %v833 = vunpack.c.h.b16 %v208
    %v834 = vunpack.c.l.b16 %v209
    %v835 = vunpack.c.h.b16 %v209
    %v836 = vunpack.c.l.b16 %v210
    %v837 = vunpack.c.h.b16 %v210
    %v838 = vunpack.c.l.b16 %v211
    %v839 = vunpack.c.h.b16 %v211
    %v840 = vunpack.c.l.b16 %v212
    %v841 = vunpack.c.h.b16 %v212
    %v842 = vunpack.c.l.b16 %v213
    %v843 = vunpack.c.h.b16 %v213
    %v844 = vunpack.c.l.b16 %v214
    %v845 = vunpack.c.h.b16 %v214
    %v846 = vunpack.c.l.b16 %v215
    %v847 = vunpack.c.h.b16 %v215
    %v848 = vunpack.c.l.b16 %v216
    %v849 = vunpack.c.h.b16 %v216
    %v850 = vunpack.c.l.b16 %v217
    %v851 = vunpack.c.h.b16 %v217
    %v852 = vunpack.c.l.b16 %v218
    %v853 = vunpack.c.h.b16 %v218
    %v854 = vunpack.c.l.b16 %v219
    %v855 = vunpack.c.h.b16 %v219
    %v856 = vunpack.c.l.b16 %v220
    %v857 = vunpack.c.h.b16 %v220
    %v858 = vunpack.c.l.b16 %v221
    %v859 = vunpack.c.h.b16 %v221
    %v860 = vunpack.c.l.b16 %v222
    %v861 = vunpack.c.h.b16 %v222
    %v862 = vunpack.c.l.b16 %v223
    %v863 = vunpack.c.h.b16 %v223
    %v864 = vunpack.c.l.b16 %v224
    %v865 = vunpack.c.h.b16 %v224
    %v866 = vunpack.c.l.b16 %v225
    %v867 = vunpack.c.h.b16 %v225
    %v868 = vunpack.c.l.b16 %v226
    %v869 = vunpack.c.h.b16 %v226
    %v870 = vunpack.c.l.b16 %v227
    %v871 = vunpack.c.h.b16 %v227
    %v872 = vunpack.c.l.b16 %v228
    %v873 = vunpack.c.h.b16 %v228
    %v874 = vunpack.c.l.b16 %v229
    %v875 = vunpack.c.h.b16 %v229
    %v876 = vunpack.c.l.b16 %v230
    %v877 = vunpack.c.h.b16 %v230
    %v878 = vunpack.c.l.b16 %v231
    %v879 = vunpack.c.h.b16 %v231
    %v880 = vunpack.c.l.b16 %v232
    %v881 = vunpack.c.h.b16 %v232
    %v882 = vunpack.c.l.b16 %v233
    %v883 = vunpack.c.h.b16 %v233
    %v884 = vunpack.c.l.b16 %v234
    %v885 = vunpack.c.h.b16 %v234
    %v886 = vunpack.c.l.b16 %v235
    %v887 = vunpack.c.h.b16 %v235
    %v888 = vunpack.c.l.b16 %v236
    %v889 = vunpack.c.h.b16 %v236
    %v890 = vunpack.c.l.b16 %v237
    %v891 = vunpack.c.h.b16 %v237
    %v892 = vunpack.c.l.b16 %v238
    %v893 = vunpack.c.h.b16 %v238
    %v894 = vunpack.c.l.b16 %v239
    %v895 = vunpack.c.h.b16 %v239
    %v896 = vunpack.c.l.b16 %v240
    %v897 = vunpack.c.h.b16 %v240
    %v898 = vunpack.c.l.b16 %v241
    %v899 = vunpack.c.h.b16 %v241
    %v900 = vunpack.c.l.b16 %v242
    %v901 = vunpack.c.h.b16 %v242
    %v902 = vunpack.c.l.b16 %v243
    %v903 = vunpack.c.h.b16 %v243
    %v904 = vunpack.c.l.b16 %v244
    %v905 = vunpack.c.h.b16 %v244
    %v906 = vunpack.c.l.b16 %v245
    %v907 = vunpack.c.h.b16 %v245
    %v908 = vunpack.c.l.b16 %v246
    %v909 = vunpack.c.h.b16 %v246
    %v910 = vunpack.c.l.b16 %v247
    %v911 = vunpack.c.h.b16 %v247
    %v912 = vunpack.c.l.b16 %v248
    %v913 = vunpack.c.h.b16 %v248
    %v914 = vunpack.c.l.b16 %v249
    %v915 = vunpack.c.h.b16 %v249
    %v916 = vunpack.c.l.b16 %v250
    %v917 = vunpack.c.h.b16 %v250
    %v918 = vunpack.c.l.b16 %v251
    %v919 = vunpack.c.h.b16 %v251
    %v920 = vunpack.c.l.b16 %v252
    %v921 = vunpack.c.h.b16 %v252
    %v922 = vunpack.c.l.b16 %v253
    %v923 = vunpack.c.h.b16 %v253
    %v924 = vunpack.c.l.b16 %v254
    %v925 = vunpack.c.h.b16 %v254
    %v926 = vunpack.c.l.b16 %v255
    %v927 = vunpack.c.h.b16 %v255
    %v928 = vunpack.c.l.b16 %v256
    %v929 = vunpack.c.h.b16 %v256
    %v930 = vunpack.c.l.b16 %v257
    %v931 = vunpack.c.h.b16 %v257
    %v932 = vunpack.c.l.b16 %v258
    %v933 = vunpack.c.h.b16 %v258
    %v934 = vunpack.c.l.b16 %v259
    %v935 = vunpack.c.h.b16 %v259
    %v936 = vunpack.c.l.b16 %v260
    %v937 = vunpack.c.h.b16 %v260
    %v938 = vunpack.c.l.b16 %v261
    %v939 = vunpack.c.h.b16 %v261
    %v940 = vunpack.c.l.b16 %v262
    %v941 = vunpack.c.h.b16 %v262
    %v942 = vunpack.c.l.b16 %v263
    %v943 = vunpack.c.h.b16 %v263
    %v944 = vunpack.c.l.b16 %v264
    %v945 = vunpack.c.h.b16 %v264
    %v946 = vunpack.c.l.b16 %v265
    %v947 = vunpack.c.h.b16 %v265
    %v948 = vunpack.c.l.b16 %v266
    %v949 = vunpack.c.h.b16 %v266
    %v950 = vunpack.c.l.b16 %v267
    %v951 = vunpack.c.h.b16 %v267
    %v952 = vunpack.c.l.b16 %v268
    %v953 = vunpack.c.h.b16 %v268
    %v954 = vunpack.c.l.b16 %v269
    %v955 = vunpack.c.h.b16 %v269
    %v956 = vunpack.c.l.b16 %v270
    %v957 = vunpack.c.h.b16 %v270
    %v958 = vunpack.c.l.b16 %v271
    %v959 = vunpack.c.h.b16 %v271
    %v960 = vunpack.c.l.b16 %v272
    %v961 = vunpack.c.h.b16 %v272
    %v962 = vunpack.c.l.b16 %v273
    %v963 = vunpack.c.h.b16 %v273
    %v964 = vunpack.c.l.b16 %v274
    %v965 = vunpack.c.h.b16 %v274
    %v966 = vunpack.c.l.b16 %v275
    %v967 = vunpack.c.h.b16 %v275
    %v968 = vunpack.c.l.b16 %v276
    %v969 = vunpack.c.h.b16 %v276
    %v970 = vunpack.c.l.b16 %v277
    %v971 = vunpack.c.h.b16 %v277
    %v972 = vpack.c.b16 %v528, %v524
    %v973 = vpack.c.b16 %v529, %v525
    %v974 = vpack.c.b16 %v530, %v526
    %v975 = vpack.c.b16 %v531, %v527
    %v976 = vpack.c.b16 %v536, %v532
    %v977 = vpack.c.b16 %v537, %v533
    %v978 = vpack.c.b16 %v538, %v534
    %v979 = vpack.c.b16 %v539, %v535
    %v980 = vpack.c.b16 %v544, %v540
    %v981 = vpack.c.b16 %v545, %v541
    %v982 = vpack.c.b16 %v546, %v542
    %v983 = vpack.c.b16 %v547, %v543
    %v984 = vpack.c.b16 %v552, %v548
    %v985 = vpack.c.b16 %v553, %v549
    %v986 = vpack.c.b16 %v554, %v550
    %v987 = vpack.c.b16 %v555, %v551
    %v988 = vpack.c.b16 %v560, %v556
    %v989 = vpack.c.b16 %v561, %v557
    %v990 = vpack.c.b16 %v562, %v558
    %v991 = vpack.c.b16 %v563, %v559
    %v992 = vpack.c.b16 %v568, %v564
    %v993 = vpack.c.b16 %v569, %v565
    %v994 = vpack.c.b16 %v570, %v566
    %v995 = vpack.c.b16 %v571, %v567
    %v996 = vpack.c.b16 %v576, %v572
    %v997 = vpack.c.b16 %v577, %v573
    %v998 = vpack.c.b16 %v578, %v574
    %v999 = vpack.c.b16 %v579, %v575
    %v1000 = vpack.c.b16 %v584, %v580
    %v1001 = vpack.c.b16 %v585, %v581
    %v1002 = vpack.c.b16 %v586, %v582
    %v1003 = vpack.c.b16 %v587, %v583
    %v1004 = vpack.c.b16 %v592, %v588
    %v1005 = vpack.c.b16 %v593, %v589
    %v1006 = vpack.c.b16 %v594, %v590
    %v1007 = vpack.c.b16 %v595, %v591
    %v1008 = vpack.c.b16 %v600, %v596
    %v1009 = vpack.c.b16 %v601, %v597
    %v1010 = vpack.c.b16 %v602, %v598
    %v1011 = vpack.c.b16 %v603, %v599
    %v1012 = vpack.c.b16 %v608, %v604
    %v1013 = vpack.c.b16 %v609, %v605
    %v1014 = vpack.c.b16 %v610, %v606
    %v1015 = vpack.c.b16 %v611, %v607
    %v1016 = vpack.c.b16 %v616, %v612
    %v1017 = vpack.c.b16 %v617, %v613
    %v1018 = vpack.c.b16 %v618, %v614
    %v1019 = vpack.c.b16 %v619, %v615
    %v1020 = vpack.c.b16 %v624, %v620
    %v1021 = vpack.c.b16 %v625, %v621
    %v1022 = vpack.c.b16 %v626, %v622
    %v1023 = vpack.c.b16 %v627, %v623
    %v1024 = vpack.c.b16 %v632, %v628
    %v1025 = vpack.c.b16 %v633, %v629
    %v1026 = vpack.c.b16 %v634, %v630
    %v1027 = vpack.c.b16 %v635, %v631
    %v1028 = vpack.c.b16 %v640, %v636
    %v1029 = vpack.c.b16 %v641, %v637
    %v1030 = vpack.c.b16 %v642, %v638
    %v1031 = vpack.c.b16 %v643, %v639
    %v1032 = vpack.c.b16 %v648, %v644
    %v1033 = vpack.c.b16 %v649, %v645
    %v1034 = vpack.c.b16 %v650, %v646
    %v1035 = vpack.c.b16 %v651, %v647
    %v1036 = vpack.c.b16 %v656, %v652
    %v1037 = vpack.c.b16 %v657, %v653
    %v1038 = vpack.c.b16 %v658, %v654
    %v1039 = vpack.c.b16 %v659, %v655
    %v1040 = vpack.c.b16 %v664, %v660
    %v1041 = vpack.c.b16 %v665, %v661
    %v1042 = vpack.c.b16 %v666, %v662
    %v1043 = vpack.c.b16 %v667, %v663
    %v1044 = vpack.c.b16 %v672, %v668
    %v1045 = vpack.c.b16 %v673, %v669
    %v1046 = vpack.c.b16 %v674, %v670
    %v1047 = vpack.c.b16 %v675, %v671
    %v1048 = vpack.c.b16 %v680, %v676
    %v1049 = vpack.c.b16 %v681, %v677
    %v1050 = vpack.c.b16 %v682, %v678
    %v1051 = vpack.c.b16 %v683, %v679
    %v1052 = vpack.c.b16 %v688, %v684
    %v1053 = vpack.c.b16 %v689, %v685
    %v1054 = vpack.c.b16 %v690, %v686
    %v1055 = vpack.c.b16 %v691, %v687
    %v1056 = vpack.c.b16 %v696, %v692
    %v1057 = vpack.c.b16 %v697, %v693
    %v1058 = vpack.c.b16 %v698, %v694
    %v1059 = vpack.c.b16 %v699, %v695
    %v1060 = vpack.c.b16 %v704, %v700
    %v1061 = vpack.c.b16 %v705, %v701
    %v1062 = vpack.c.b16 %v706, %v702
    %v1063 = vpack.c.b16 %v707, %v703
    %v1064 = vpack.c.b16 %v712, %v708
    %v1065 = vpack.c.b16 %v713, %v709
    %v1066 = vpack.c.b16 %v714, %v710
    %v1067 = vpack.c.b16 %v715, %v711
    %v1068 = vpack.c.b16 %v720, %v716
    %v1069 = vpack.c.b16 %v721, %v717
    %v1070 = vpack.c.b16 %v722, %v718
    %v1071 = vpack.c.b16 %v723, %v719
    %v1072 = vpack.c.b16 %v728, %v724
    %v1073 = vpack.c.b16 %v729, %v725
    %v1074 = vpack.c.b16 %v730, %v726
    %v1075 = vpack.c.b16 %v731, %v727
    %v1076 = vpack.c.b16 %v736, %v732
    %v1077 = vpack.c.b16 %v737, %v733
    %v1078 = vpack.c.b16 %v738, %v734
    %v1079 = vpack.c.b16 %v739, %v735
    %v1080 = vpack.c.b16 %v744, %v740
    %v1081 = vpack.c.b16 %v745, %v741
    %v1082 = vpack.c.b16 %v746, %v742
    %v1083 = vpack.c.b16 %v747, %v743
    %v1084 = vpack.c.b16 %v752, %v748
    %v1085 = vpack.c.b16 %v753, %v749
    %v1086 = vpack.c.b16 %v754, %v750
    %v1087 = vpack.c.b16 %v755, %v751
    %v1088 = vpack.c.b16 %v760, %v756
    %v1089 = vpack.c.b16 %v761, %v757
    %v1090 = vpack.c.b16 %v762, %v758
    %v1091 = vpack.c.b16 %v763, %v759
    %v1092 = vpack.c.b16 %v768, %v764
    %v1093 = vpack.c.b16 %v769, %v765
    %v1094 = vpack.c.b16 %v770, %v766
    %v1095 = vpack.c.b16 %v771, %v767
    %v1096 = vpack.c.b16 %v776, %v772
    %v1097 = vpack.c.b16 %v777, %v773
    %v1098 = vpack.c.b16 %v778, %v774
    %v1099 = vpack.c.b16 %v779, %v775
    %v1100 = vpack.c.b16 %v784, %v780
    %v1101 = vpack.c.b16 %v785, %v781
    %v1102 = vpack.c.b16 %v786, %v782
    %v1103 = vpack.c.b16 %v787, %v783
    %v1104 = vpack.c.b16 %v792, %v788
    %v1105 = vpack.c.b16 %v793, %v789
    %v1106 = vpack.c.b16 %v794, %v790
    %v1107 = vpack.c.b16 %v795, %v791
    %v1108 = vpack.c.b16 %v800, %v796
    %v1109 = vpack.c.b16 %v801, %v797
    %v1110 = vpack.c.b16 %v802, %v798
    %v1111 = vpack.c.b16 %v803, %v799
    %v1112 = vpack.c.b16 %v808, %v804
    %v1113 = vpack.c.b16 %v809, %v805
    %v1114 = vpack.c.b16 %v810, %v806
    %v1115 = vpack.c.b16 %v811, %v807
    %v1116 = vpack.c.b16 %v816, %v812
    %v1117 = vpack.c.b16 %v817, %v813
    %v1118 = vpack.c.b16 %v818, %v814
    %v1119 = vpack.c.b16 %v819, %v815
    %v1120 = vpack.c.b16 %v824, %v820
    %v1121 = vpack.c.b16 %v825, %v821
    %v1122 = vpack.c.b16 %v826, %v822
    %v1123 = vpack.c.b16 %v827, %v823
    %v1124 = vpack.c.b16 %v832, %v828
    %v1125 = vpack.c.b16 %v833, %v829
    %v1126 = vpack.c.b16 %v834, %v830
    %v1127 = vpack.c.b16 %v835, %v831
    %v1128 = vpack.c.b16 %v840, %v836
    %v1129 = vpack.c.b16 %v841, %v837
    %v1130 = vpack.c.b16 %v842, %v838
    %v1131 = vpack.c.b16 %v843, %v839
    %v1132 = vpack.c.b16 %v848, %v844
    %v1133 = vpack.c.b16 %v849, %v845
    %v1134 = vpack.c.b16 %v850, %v846
    %v1135 = vpack.c.b16 %v851, %v847
    %v1136 = vpack.c.b16 %v856, %v852
    %v1137 = vpack.c.b16 %v857, %v853
    %v1138 = vpack.c.b16 %v858, %v854
    %v1139 = vpack.c.b16 %v859, %v855
    %v1140 = vpack.c.b16 %v864, %v860
    %v1141 = vpack.c.b16 %v865, %v861
    %v1142 = vpack.c.b16 %v866, %v862
    %v1143 = vpack.c.b16 %v867, %v863
    %v1144 = vpack.c.b16 %v872, %v868
    %v1145 = vpack.c.b16 %v873, %v869
    %v1146 = vpack.c.b16 %v874, %v870
    %v1147 = vpack.c.b16 %v875, %v871
    %v1148 = vpack.c.b16 %v880, %v876
    %v1149 = vpack.c.b16 %v881, %v877
    %v1150 = vpack.c.b16 %v882, %v878
    %v1151 = vpack.c.b16 %v883, %v879
    %v1152 = vpack.c.b16 %v888, %v884
    %v1153 = vpack.c.b16 %v889, %v885
    %v1154 = vpack.c.b16 %v890, %v886
    %v1155 = vpack.c.b16 %v891, %v887
    %v1156 = vpack.c.b16 %v896, %v892
    %v1157 = vpack.c.b16 %v897, %v893
    %v1158 = vpack.c.b16 %v898, %v894
    %v1159 = vpack.c.b16 %v899, %v895
    %v1160 = vpack.c.b16 %v904, %v900
    %v1161 = vpack.c.b16 %v905, %v901
    %v1162 = vpack.c.b16 %v906, %v902
    %v1163 = vpack.c.b16 %v907, %v903
    %v1164 = vpack.c.b16 %v912, %v908
    %v1165 = vpack.c.b16 %v913, %v909
    %v1166 = vpack.c.b16 %v914, %v910
    %v1167 = vpack.c.b16 %v915, %v911
    %v1168 = vpack.c.b16 %v920, %v916
    %v1169 = vpack.c.b16 %v921, %v917
    %v1170 = vpack.c.b16 %v922, %v918
    %v1171 = vpack.c.b16 %v923, %v919
    %v1172 = vpack.c.b16 %v928, %v924
    %v1173 = vpack.c.b16 %v929, %v925
    %v1174 = vpack.c.b16 %v930, %v926
    %v1175 = vpack.c.b16 %v931, %v927
    %v1176 = vpack.c.b16 %v936, %v932
    %v1177 = vpack.c.b16 %v937, %v933
    %v1178 = vpack.c.b16 %v938, %v934
    %v1179 = vpack.c.b16 %v939, %v935
    %v1180 = vpack.c.b16 %v944, %v940
    %v1181 = vpack.c.b16 %v945, %v941
    %v1182 = vpack.c.b16 %v946, %v942
    %v1183 = vpack.c.b16 %v947, %v943
    %v1184 = vpack.c.b16 %v952, %v948
    %v1185 = vpack.c.b16 %v953, %v949
    %v1186 = vpack.c.b16 %v954, %v950
    %v1187 = vpack.c.b16 %v955, %v951
    %v1188 = vpack.c.b16 %v960, %v956
    %v1189 = vpack.c.b16 %v961, %v957
    %v1190 = vpack.c.b16 %v962, %v958
    %v1191 = vpack.c.b16 %v963, %v959
    %v1192 = vpack.c.b16 %v968, %v964
    %v1193 = vpack.c.b16 %v969, %v965
    %v1194 = vpack.c.b16 %v970, %v966
    %v1195 = vpack.c.b16 %v971, %v967
    %1420 = vmatprep.subr.bf16.mxu0 %v1001
    %1421 = vmatpush1.bf16.msra.mxu0 %v1000
    %1422 = vmatprep.subr.bf16.mxu0 %v997
    %1423 = vmatpush1.bf16.msra.mxu0 %v996
    %1424 = vmatprep.subr.bf16.mxu0 %v993
    %1425 = vmatpush1.bf16.msra.mxu0 %v992
    %1426 = vmatprep.subr.bf16.mxu0 %v989
    %1427 = vmatpush1.bf16.msra.mxu0 %v988
    %1428 = vmatprep.subr.bf16.mxu0 %v985
    %1429 = vmatpush1.bf16.msra.mxu0 %v984
    %1430 = vmatprep.subr.bf16.mxu0 %v981
    %1431 = vmatpush1.bf16.msra.mxu0 %v980
    %1432 = vmatprep.subr.bf16.mxu0 %v977
    %1433 = vmatpush1.bf16.msra.mxu0 %v976
    %1434 = vmatprep.subr.bf16.mxu0 %v973
    %1435 = vmatpush1.bf16.msra.mxu0 %v972
    %1436 = vmatprep.subr.bf16.mxu0 %v1033
    %1437 = vmatpush2.bf16.msra.mxu0 %v1032
    %1438 = vmatprep.subr.bf16.mxu0 %v1029
    %1439 = vmatpush2.bf16.msra.mxu0 %v1028
    %1440 = vmatprep.subr.bf16.mxu0 %v1025
    %1441 = vmatpush2.bf16.msra.mxu0 %v1024
    %1442 = vmatprep.subr.bf16.mxu0 %v1021
    %1443 = vmatpush2.bf16.msra.mxu0 %v1020
    %1444 = vmatprep.subr.bf16.mxu0 %v1017
    %1445 = vmatpush2.bf16.msra.mxu0 %v1016
    %1446 = vmatprep.subr.bf16.mxu0 %v1013
    %1447 = vmatpush2.bf16.msra.mxu0 %v1012
    %1448 = vmatprep.subr.bf16.mxu0 %v1009
    %1449 = vmatpush2.bf16.msra.mxu0 %v1008
    %1450 = vmatprep.subr.bf16.mxu0 %v1005
    %1451 = vmatpush2.bf16.msra.mxu0 %v1004
    %1452 = vmatprep.mubr.bf16.mxu0 %v48
    %1453 = vmatmul.mubr.bf16.gmra.mxu0 %v47
    %v1454 = vpop.f32.mrf.mxu0
    %v1455 = vadd.f32 %v283, %v1454
    %v1456 = vpop.f32.mrf.mxu0
    %v1457 = vadd.f32 %v287, %v1456
    %v1458 = vpop.f32.mrf.mxu0
    %v1459 = vpop.f32.mrf.mxu0
    %1460 = vdwg.mxu0
    %1461 = vmatprep.subr.bf16.mxu0 %v1065
    %1462 = vmatpush1.bf16.msra.mxu0 %v1064
    %1463 = vmatprep.subr.bf16.mxu0 %v1061
    %1464 = vmatpush1.bf16.msra.mxu0 %v1060
    %1465 = vmatprep.subr.bf16.mxu0 %v1057
    %1466 = vmatpush1.bf16.msra.mxu0 %v1056
    %1467 = vmatprep.subr.bf16.mxu0 %v1053
    %1468 = vmatpush1.bf16.msra.mxu0 %v1052
    %1469 = vmatprep.subr.bf16.mxu0 %v1049
    %1470 = vmatpush1.bf16.msra.mxu0 %v1048
    %1471 = vmatprep.subr.bf16.mxu0 %v1045
    %1472 = vmatpush1.bf16.msra.mxu0 %v1044
    %1473 = vmatprep.subr.bf16.mxu0 %v1041
    %1474 = vmatpush1.bf16.msra.mxu0 %v1040
    %1475 = vmatprep.subr.bf16.mxu0 %v1037
    %1476 = vmatpush1.bf16.msra.mxu0 %v1036
    %1477 = vmatprep.subr.bf16.mxu0 %v1097
    %1478 = vmatpush2.bf16.msra.mxu0 %v1096
    %1479 = vmatprep.subr.bf16.mxu0 %v1093
    %1480 = vmatpush2.bf16.msra.mxu0 %v1092
    %1481 = vmatprep.subr.bf16.mxu0 %v1089
    %1482 = vmatpush2.bf16.msra.mxu0 %v1088
    %1483 = vmatprep.subr.bf16.mxu0 %v1085
    %1484 = vmatpush2.bf16.msra.mxu0 %v1084
    %1485 = vmatprep.subr.bf16.mxu0 %v1081
    %1486 = vmatpush2.bf16.msra.mxu0 %v1080
    %1487 = vmatprep.subr.bf16.mxu0 %v1077
    %1488 = vmatpush2.bf16.msra.mxu0 %v1076
    %1489 = vmatprep.subr.bf16.mxu0 %v1073
    %1490 = vmatpush2.bf16.msra.mxu0 %v1072
    %1491 = vmatprep.subr.bf16.mxu0 %v1069
    %1492 = vmatpush2.bf16.msra.mxu0 %v1068
    %1493 = vmatprep.mubr.bf16.mxu0 %v50
    %1494 = vmatmul.mubr.bf16.gmra.mxu0 %v49
    %v1495 = vpop.f32.mrf.mxu0
    %v1496 = vadd.f32 %v1455, %v1495
    %v1497 = vpop.f32.mrf.mxu0
    %v1498 = vadd.f32 %v1457, %v1497
    %v1499 = vpop.f32.mrf.mxu0
    %v1500 = vpop.f32.mrf.mxu0
    %1501 = vdwg.mxu0
    %1502 = vmatprep.subr.bf16.mxu0 %v1129
    %1503 = vmatpush1.bf16.msra.mxu0 %v1128
    %1504 = vmatprep.subr.bf16.mxu0 %v1125
    %1505 = vmatpush1.bf16.msra.mxu0 %v1124
    %1506 = vmatprep.subr.bf16.mxu0 %v1121
    %1507 = vmatpush1.bf16.msra.mxu0 %v1120
    %1508 = vmatprep.subr.bf16.mxu0 %v1117
    %1509 = vmatpush1.bf16.msra.mxu0 %v1116
    %1510 = vmatprep.subr.bf16.mxu0 %v1113
    %1511 = vmatpush1.bf16.msra.mxu0 %v1112
    %1512 = vmatprep.subr.bf16.mxu0 %v1109
    %1513 = vmatpush1.bf16.msra.mxu0 %v1108
    %1514 = vmatprep.subr.bf16.mxu0 %v1105
    %1515 = vmatpush1.bf16.msra.mxu0 %v1104
    %1516 = vmatprep.subr.bf16.mxu0 %v1101
    %1517 = vmatpush1.bf16.msra.mxu0 %v1100
    %1518 = vmatprep.subr.bf16.mxu0 %v1161
    %1519 = vmatpush2.bf16.msra.mxu0 %v1160
    %1520 = vmatprep.subr.bf16.mxu0 %v1157
    %1521 = vmatpush2.bf16.msra.mxu0 %v1156
    %1522 = vmatprep.subr.bf16.mxu0 %v1153
    %1523 = vmatpush2.bf16.msra.mxu0 %v1152
    %1524 = vmatprep.subr.bf16.mxu0 %v1149
    %1525 = vmatpush2.bf16.msra.mxu0 %v1148
    %1526 = vmatprep.subr.bf16.mxu0 %v1145
    %1527 = vmatpush2.bf16.msra.mxu0 %v1144
    %1528 = vmatprep.subr.bf16.mxu0 %v1141
    %1529 = vmatpush2.bf16.msra.mxu0 %v1140
    %1530 = vmatprep.subr.bf16.mxu0 %v1137
    %1531 = vmatpush2.bf16.msra.mxu0 %v1136
    %1532 = vmatprep.subr.bf16.mxu0 %v1133
    %1533 = vmatpush2.bf16.msra.mxu0 %v1132
    %1534 = vmatprep.mubr.bf16.mxu0 %v52
    %1535 = vmatmul.mubr.bf16.gmra.mxu0 %v51
    %v1536 = vpop.f32.mrf.mxu0
    %v1537 = vadd.f32 %v1496, %v1536
    %v1538 = vpop.f32.mrf.mxu0
    %v1539 = vadd.f32 %v1498, %v1538
    %v1540 = vpop.f32.mrf.mxu0
    %v1541 = vpop.f32.mrf.mxu0
    %1542 = vdwg.mxu0
    %1543 = vmatprep.subr.bf16.mxu0 %v1193
    %1544 = vmatpush1.bf16.msra.mxu0 %v1192
    %1545 = vmatprep.subr.bf16.mxu0 %v1189
    %1546 = vmatpush1.bf16.msra.mxu0 %v1188
    %1547 = vmatprep.subr.bf16.mxu0 %v1185
    %1548 = vmatpush1.bf16.msra.mxu0 %v1184
    %1549 = vmatprep.subr.bf16.mxu0 %v1181
    %1550 = vmatpush1.bf16.msra.mxu0 %v1180
    %1551 = vmatprep.subr.bf16.mxu0 %v1177
    %1552 = vmatpush1.bf16.msra.mxu0 %v1176
    %1553 = vmatprep.subr.bf16.mxu0 %v1173
    %1554 = vmatpush1.bf16.msra.mxu0 %v1172
    %1555 = vmatprep.subr.bf16.mxu0 %v1169
    %1556 = vmatpush1.bf16.msra.mxu0 %v1168
    %1557 = vmatprep.subr.bf16.mxu0 %v1165
    %1558 = vmatpush1.bf16.msra.mxu0 %v1164
    %1559 = vmatprep.subr.bf16.mxu0 0
    %1560 = vmatpush2.bf16.msra.mxu0 0
    %1561 = vmatprep.subr.bf16.mxu0 0
    %1562 = vmatpush2.bf16.msra.mxu0 0
    %1563 = vmatprep.subr.bf16.mxu0 0
    %1564 = vmatpush2.bf16.msra.mxu0 0
    %1565 = vmatprep.subr.bf16.mxu0 0
    %1566 = vmatpush2.bf16.msra.mxu0 0
    %1567 = vmatprep.subr.bf16.mxu0 0
    %1568 = vmatpush2.bf16.msra.mxu0 0
    %1569 = vmatprep.subr.bf16.mxu0 0
    %1570 = vmatpush2.bf16.msra.mxu0 0
    %1571 = vmatprep.subr.bf16.mxu0 0
    %1572 = vmatpush2.bf16.msra.mxu0 0
    %1573 = vmatprep.subr.bf16.mxu0 0
    %1574 = vmatpush2.bf16.msra.mxu0 0
    %1575 = vmatprep.mubr.bf16.mxu0 0
    %1576 = vmatmul.mubr.bf16.gmra.mxu0 %v53
    %v1577 = vpop.f32.mrf.mxu0
    %v1578 = vadd.f32 %v1537, %v1577
    %v1579 = vpop.f32.mrf.mxu0
    %v1580 = vadd.f32 %v1539, %v1579
    %v1581 = vpop.f32.mrf.mxu0
    %v1582 = vpop.f32.mrf.mxu0
    %1583 = vdwg.mxu0
    %1584 = vmatprep.subr.bf16.mxu0 %v1003
    %1585 = vmatpush1.bf16.msra.mxu0 %v1002
    %1586 = vmatprep.subr.bf16.mxu0 %v999
    %1587 = vmatpush1.bf16.msra.mxu0 %v998
    %1588 = vmatprep.subr.bf16.mxu0 %v995
    %1589 = vmatpush1.bf16.msra.mxu0 %v994
    %1590 = vmatprep.subr.bf16.mxu0 %v991
    %1591 = vmatpush1.bf16.msra.mxu0 %v990
    %1592 = vmatprep.subr.bf16.mxu0 %v987
    %1593 = vmatpush1.bf16.msra.mxu0 %v986
    %1594 = vmatprep.subr.bf16.mxu0 %v983
    %1595 = vmatpush1.bf16.msra.mxu0 %v982
    %1596 = vmatprep.subr.bf16.mxu0 %v979
    %1597 = vmatpush1.bf16.msra.mxu0 %v978
    %1598 = vmatprep.subr.bf16.mxu0 %v975
    %1599 = vmatpush1.bf16.msra.mxu0 %v974
    %1600 = vmatprep.subr.bf16.mxu0 %v1035
    %1601 = vmatpush2.bf16.msra.mxu0 %v1034
    %1602 = vmatprep.subr.bf16.mxu0 %v1031
    %1603 = vmatpush2.bf16.msra.mxu0 %v1030
    %1604 = vmatprep.subr.bf16.mxu0 %v1027
    %1605 = vmatpush2.bf16.msra.mxu0 %v1026
    %1606 = vmatprep.subr.bf16.mxu0 %v1023
    %1607 = vmatpush2.bf16.msra.mxu0 %v1022
    %1608 = vmatprep.subr.bf16.mxu0 %v1019
    %1609 = vmatpush2.bf16.msra.mxu0 %v1018
    %1610 = vmatprep.subr.bf16.mxu0 %v1015
    %1611 = vmatpush2.bf16.msra.mxu0 %v1014
    %1612 = vmatprep.subr.bf16.mxu0 %v1011
    %1613 = vmatpush2.bf16.msra.mxu0 %v1010
    %1614 = vmatprep.subr.bf16.mxu0 %v1007
    %1615 = vmatpush2.bf16.msra.mxu0 %v1006
    %1616 = vmatprep.mubr.bf16.mxu0 %v48
    %1617 = vmatmul.mubr.bf16.gmra.mxu0 %v47
    %v1618 = vpop.f32.mrf.mxu0
    %v1619 = vadd.f32 %v291, %v1618
    %v1620 = vpop.f32.mrf.mxu0
    %v1621 = vadd.f32 %v295, %v1620
    %v1622 = vpop.f32.mrf.mxu0
    %v1623 = vpop.f32.mrf.mxu0
    %1624 = vdwg.mxu0
    %1625 = vmatprep.subr.bf16.mxu0 %v1067
    %1626 = vmatpush1.bf16.msra.mxu0 %v1066
    %1627 = vmatprep.subr.bf16.mxu0 %v1063
    %1628 = vmatpush1.bf16.msra.mxu0 %v1062
    %1629 = vmatprep.subr.bf16.mxu0 %v1059
    %1630 = vmatpush1.bf16.msra.mxu0 %v1058
    %1631 = vmatprep.subr.bf16.mxu0 %v1055
    %1632 = vmatpush1.bf16.msra.mxu0 %v1054
    %1633 = vmatprep.subr.bf16.mxu0 %v1051
    %1634 = vmatpush1.bf16.msra.mxu0 %v1050
    %1635 = vmatprep.subr.bf16.mxu0 %v1047
    %1636 = vmatpush1.bf16.msra.mxu0 %v1046
    %1637 = vmatprep.subr.bf16.mxu0 %v1043
    %1638 = vmatpush1.bf16.msra.mxu0 %v1042
    %1639 = vmatprep.subr.bf16.mxu0 %v1039
    %1640 = vmatpush1.bf16.msra.mxu0 %v1038
    %1641 = vmatprep.subr.bf16.mxu0 %v1099
    %1642 = vmatpush2.bf16.msra.mxu0 %v1098
    %1643 = vmatprep.subr.bf16.mxu0 %v1095
    %1644 = vmatpush2.bf16.msra.mxu0 %v1094
    %1645 = vmatprep.subr.bf16.mxu0 %v1091
    %1646 = vmatpush2.bf16.msra.mxu0 %v1090
    %1647 = vmatprep.subr.bf16.mxu0 %v1087
    %1648 = vmatpush2.bf16.msra.mxu0 %v1086
    %1649 = vmatprep.subr.bf16.mxu0 %v1083
    %1650 = vmatpush2.bf16.msra.mxu0 %v1082
    %1651 = vmatprep.subr.bf16.mxu0 %v1079
    %1652 = vmatpush2.bf16.msra.mxu0 %v1078
    %1653 = vmatprep.subr.bf16.mxu0 %v1075
    %1654 = vmatpush2.bf16.msra.mxu0 %v1074
    %1655 = vmatprep.subr.bf16.mxu0 %v1071
    %1656 = vmatpush2.bf16.msra.mxu0 %v1070
    %1657 = vmatprep.mubr.bf16.mxu0 %v50
    %1658 = vmatmul.mubr.bf16.gmra.mxu0 %v49
    %v1659 = vpop.f32.mrf.mxu0
    %v1660 = vadd.f32 %v1619, %v1659
    %v1661 = vpop.f32.mrf.mxu0
    %v1662 = vadd.f32 %v1621, %v1661
    %v1663 = vpop.f32.mrf.mxu0
    %v1664 = vpop.f32.mrf.mxu0
    %1665 = vdwg.mxu0
    %1666 = vmatprep.subr.bf16.mxu0 %v1131
    %1667 = vmatpush1.bf16.msra.mxu0 %v1130
    %1668 = vmatprep.subr.bf16.mxu0 %v1127
    %1669 = vmatpush1.bf16.msra.mxu0 %v1126
    %1670 = vmatprep.subr.bf16.mxu0 %v1123
    %1671 = vmatpush1.bf16.msra.mxu0 %v1122
    %1672 = vmatprep.subr.bf16.mxu0 %v1119
    %1673 = vmatpush1.bf16.msra.mxu0 %v1118
    %1674 = vmatprep.subr.bf16.mxu0 %v1115
    %1675 = vmatpush1.bf16.msra.mxu0 %v1114
    %1676 = vmatprep.subr.bf16.mxu0 %v1111
    %1677 = vmatpush1.bf16.msra.mxu0 %v1110
    %1678 = vmatprep.subr.bf16.mxu0 %v1107
    %1679 = vmatpush1.bf16.msra.mxu0 %v1106
    %1680 = vmatprep.subr.bf16.mxu0 %v1103
    %1681 = vmatpush1.bf16.msra.mxu0 %v1102
    %1682 = vmatprep.subr.bf16.mxu0 %v1163
    %1683 = vmatpush2.bf16.msra.mxu0 %v1162
    %1684 = vmatprep.subr.bf16.mxu0 %v1159
    %1685 = vmatpush2.bf16.msra.mxu0 %v1158
    %1686 = vmatprep.subr.bf16.mxu0 %v1155
    %1687 = vmatpush2.bf16.msra.mxu0 %v1154
    %1688 = vmatprep.subr.bf16.mxu0 %v1151
    %1689 = vmatpush2.bf16.msra.mxu0 %v1150
    %1690 = vmatprep.subr.bf16.mxu0 %v1147
    %1691 = vmatpush2.bf16.msra.mxu0 %v1146
    %1692 = vmatprep.subr.bf16.mxu0 %v1143
    %1693 = vmatpush2.bf16.msra.mxu0 %v1142
    %1694 = vmatprep.subr.bf16.mxu0 %v1139
    %1695 = vmatpush2.bf16.msra.mxu0 %v1138
    %1696 = vmatprep.subr.bf16.mxu0 %v1135
    %1697 = vmatpush2.bf16.msra.mxu0 %v1134
    %1698 = vmatprep.mubr.bf16.mxu0 %v52
    %1699 = vmatmul.mubr.bf16.gmra.mxu0 %v51
    %v1700 = vpop.f32.mrf.mxu0
    %v1701 = vadd.f32 %v1660, %v1700
    %v1702 = vpop.f32.mrf.mxu0
    %v1703 = vadd.f32 %v1662, %v1702
    %v1704 = vpop.f32.mrf.mxu0
    %v1705 = vpop.f32.mrf.mxu0
    %1706 = vdwg.mxu0
    %1707 = vmatprep.subr.bf16.mxu0 %v1195
    %1708 = vmatpush1.bf16.msra.mxu0 %v1194
    %1709 = vmatprep.subr.bf16.mxu0 %v1191
    %1710 = vmatpush1.bf16.msra.mxu0 %v1190
    %1711 = vmatprep.subr.bf16.mxu0 %v1187
    %1712 = vmatpush1.bf16.msra.mxu0 %v1186
    %1713 = vmatprep.subr.bf16.mxu0 %v1183
    %1714 = vmatpush1.bf16.msra.mxu0 %v1182
    %1715 = vmatprep.subr.bf16.mxu0 %v1179
    %1716 = vmatpush1.bf16.msra.mxu0 %v1178
    %1717 = vmatprep.subr.bf16.mxu0 %v1175
    %1718 = vmatpush1.bf16.msra.mxu0 %v1174
    %1719 = vmatprep.subr.bf16.mxu0 %v1171
    %1720 = vmatpush1.bf16.msra.mxu0 %v1170
    %1721 = vmatprep.subr.bf16.mxu0 %v1167
    %1722 = vmatpush1.bf16.msra.mxu0 %v1166
    %1723 = vmatprep.subr.bf16.mxu0 0
    %1724 = vmatpush2.bf16.msra.mxu0 0
    %1725 = vmatprep.subr.bf16.mxu0 0
    %1726 = vmatpush2.bf16.msra.mxu0 0
    %1727 = vmatprep.subr.bf16.mxu0 0
    %1728 = vmatpush2.bf16.msra.mxu0 0
    %1729 = vmatprep.subr.bf16.mxu0 0
    %1730 = vmatpush2.bf16.msra.mxu0 0
    %1731 = vmatprep.subr.bf16.mxu0 0
    %1732 = vmatpush2.bf16.msra.mxu0 0
    %1733 = vmatprep.subr.bf16.mxu0 0
    %1734 = vmatpush2.bf16.msra.mxu0 0
    %1735 = vmatprep.subr.bf16.mxu0 0
    %1736 = vmatpush2.bf16.msra.mxu0 0
    %1737 = vmatprep.subr.bf16.mxu0 0
    %1738 = vmatpush2.bf16.msra.mxu0 0
    %1739 = vmatprep.mubr.bf16.mxu0 0
    %1740 = vmatmul.mubr.bf16.gmra.mxu0 %v53
    %v1741 = vpop.f32.mrf.mxu0
    %v1742 = vadd.f32 %v1701, %v1741
    %v1743 = vpop.f32.mrf.mxu0
    %v1744 = vadd.f32 %v1703, %v1743
    %v1745 = vpop.f32.mrf.mxu0
    %v1746 = vpop.f32.mrf.mxu0
    %1747 = vdwg.mxu0
    %v1748 = vmax.f32 %v1578, 0.0
    %v1749 = vmax.f32 %v1580, 0.0
    %v1750 = vmax.f32 %v1742, 0.0
    %v1751 = vmax.f32 %v1744, 0.0
    %v1752 = vld [vmem:[%s3] sm:$0xff]
    %v1753 = vld [vmem:[%s3 + $0x8] sm:$0xff]
    %v1754 = vld [vmem:[%s3 + $0x10] sm:$0xff]
    %v1755 = vld [vmem:[%s3 + $0x18] sm:$0xff]
    %v1756 = vld [vmem:[%s3 + $0x20] sm:$0xff]
    %v1757 = vld [vmem:[%s3 + $0x28] sm:$0xff]
    %v1758 = vld [vmem:[%s3 + $0x30] sm:$0xff]
    %v1759 = vld [vmem:[%s3 + $0x38] sm:$0xff]
    %v1760 = vld [vmem:[%s3 + $0x40] sm:$0xff]
    %v1761 = vld [vmem:[%s3 + $0x48] sm:$0xff]
    %v1762 = vld [vmem:[%s3 + $0x50] sm:$0xff]
    %v1763 = vld [vmem:[%s3 + $0x58] sm:$0xff]
    %v1764 = vld [vmem:[%s3 + $0x60] sm:$0xff]
    %v1765 = vld [vmem:[%s3 + $0x68] sm:$0xff]
    %v1766 = vld [vmem:[%s3 + $0x70] sm:$0xff]
    %v1767 = vld [vmem:[%s3 + $0x78] sm:$0xff]
    %v1768 = vld [vmem:[%s3 + $0x80] sm:$0xff]
    %v1769 = vld [vmem:[%s3 + $0x88] sm:$0xff]
    %v1770 = vld [vmem:[%s3 + $0x90] sm:$0xff]
    %v1771 = vld [vmem:[%s3 + $0x98] sm:$0xff]
    %v1772 = vld [vmem:[%s3 + $0xa0] sm:$0xff]
    %v1773 = vld [vmem:[%s3 + $0xa8] sm:$0xff]
    %v1774 = vld [vmem:[%s3 + $0xb0] sm:$0xff]
    %v1775 = vld [vmem:[%s3 + $0xb8] sm:$0xff]
    %v1776 = vld [vmem:[%s3 + $0xc0] sm:$0xff]
    %v1777 = vld [vmem:[%s3 + $0xc8] sm:$0xff]
    %v1778 = vld [vmem:[%s3 + $0xd0] sm:$0xff]
    %v1779 = vld [vmem:[%s3 + $0xd8] sm:$0xff]
    %v1780 = vld [vmem:[%s3 + $0xe0] sm:$0xff]
    %v1781 = vld [vmem:[%s3 + $0xe8] sm:$0xff]
    %v1782 = vld [vmem:[%s3 + $0xf0] sm:$0xff]
    %v1783 = vld [vmem:[%s3 + $0xf8] sm:$0xff]
    %v1784 = vld [vmem:[%s3 + $0x100] sm:$0xff]
    %v1785 = vld [vmem:[%s3 + $0x108] sm:$0xff]
    %v1786 = vld [vmem:[%s3 + $0x110] sm:$0xff]
    %v1787 = vld [vmem:[%s3 + $0x118] sm:$0xff]
    %v1788 = vld [vmem:[%s3 + $0x120] sm:$0xff]
    %v1789 = vld [vmem:[%s3 + $0x128] sm:$0xff]
    %v1790 = vld [vmem:[%s3 + $0x130] sm:$0xff]
    %v1791 = vld [vmem:[%s3 + $0x138] sm:$0xff]
    %v1792 = vld [vmem:[%s3 + $0x140] sm:$0xff]
    %v1793 = vld [vmem:[%s3 + $0x148] sm:$0xff]
    %v1794 = vld [vmem:[%s3 + $0x150] sm:$0xff]
    %v1795 = vld [vmem:[%s3 + $0x158] sm:$0xff]
    %v1796 = vld [vmem:[%s3 + $0x160] sm:$0xff]
    %v1797 = vld [vmem:[%s3 + $0x168] sm:$0xff]
    %v1798 = vld [vmem:[%s3 + $0x170] sm:$0xff]
    %v1799 = vld [vmem:[%s3 + $0x178] sm:$0xff]
    %v1800 = vld [vmem:[%s3 + $0x180] sm:$0xff]
    %v1801 = vld [vmem:[%s3 + $0x188] sm:$0xff]
    %v1802 = vld [vmem:[%s4] sm:$0x1]
    %v1804 = vlaneseq
    %v1805 = vshrl.u32 %v1804, 7
    %v1806 = vsub.s32 0, %v1805
    %v1807 = vrot.slane %v1802, %v1806
    %vm1809 = vcmask 130048
    %v1811 = vsel %vm1809, %v1751, 0
    %1813 = vmatprep.subr.mxu0 0.0
    %1814 = vmatpush1.msra.mxu0 %v1767
    %1815 = vmatprep.subr.mxu0 0.0
    %1816 = vmatpush1.msra.mxu0 %v1766
    %1817 = vmatprep.subr.mxu0 0.0
    %1818 = vmatpush1.msra.mxu0 %v1765
    %1819 = vmatprep.subr.mxu0 0.0
    %1820 = vmatpush1.msra.mxu0 %v1764
    %1821 = vmatprep.subr.mxu0 0.0
    %1822 = vmatpush1.msra.mxu0 %v1763
    %1823 = vmatprep.subr.mxu0 0.0
    %1824 = vmatpush1.msra.mxu0 %v1762
    %1825 = vmatprep.subr.mxu0 0.0
    %1826 = vmatpush1.msra.mxu0 %v1761
    %1827 = vmatprep.subr.mxu0 0.0
    %1828 = vmatpush1.msra.mxu0 %v1760
    %1829 = vmatprep.subr.mxu0 0.0
    %1830 = vmatpush1.msra.mxu0 %v1759
    %1831 = vmatprep.subr.mxu0 0.0
    %1832 = vmatpush1.msra.mxu0 %v1758
    %1833 = vmatprep.subr.mxu0 0.0
    %1834 = vmatpush1.msra.mxu0 %v1757
    %1835 = vmatprep.subr.mxu0 0.0
    %1836 = vmatpush1.msra.mxu0 %v1756
    %1837 = vmatprep.subr.mxu0 0.0
    %1838 = vmatpush1.msra.mxu0 %v1755
    %1839 = vmatprep.subr.mxu0 0.0
    %1840 = vmatpush1.msra.mxu0 %v1754
    %1841 = vmatprep.subr.mxu0 0.0
    %1842 = vmatpush1.msra.mxu0 %v1753
    %1843 = vmatprep.subr.mxu0 0.0
    %1844 = vmatpush1.msra.mxu0 %v1752
    %1845 = vmatprep.subr.mxu0 0.0
    %1846 = vmatpush2.msra.mxu0 %v1783
    %1847 = vmatprep.subr.mxu0 0.0
    %1848 = vmatpush2.msra.mxu0 %v1782
    %1849 = vmatprep.subr.mxu0 0.0
    %1850 = vmatpush2.msra.mxu0 %v1781
    %1851 = vmatprep.subr.mxu0 0.0
    %1852 = vmatpush2.msra.mxu0 %v1780
    %1853 = vmatprep.subr.mxu0 0.0
    %1854 = vmatpush2.msra.mxu0 %v1779
    %1855 = vmatprep.subr.mxu0 0.0
    %1856 = vmatpush2.msra.mxu0 %v1778
    %1857 = vmatprep.subr.mxu0 0.0
    %1858 = vmatpush2.msra.mxu0 %v1777
    %1859 = vmatprep.subr.mxu0 0.0
    %1860 = vmatpush2.msra.mxu0 %v1776
    %1861 = vmatprep.subr.mxu0 0.0
    %1862 = vmatpush2.msra.mxu0 %v1775
    %1863 = vmatprep.subr.mxu0 0.0
    %1864 = vmatpush2.msra.mxu0 %v1774
    %1865 = vmatprep.subr.mxu0 0.0
    %1866 = vmatpush2.msra.mxu0 %v1773
    %1867 = vmatprep.subr.mxu0 0.0
    %1868 = vmatpush2.msra.mxu0 %v1772
    %1869 = vmatprep.subr.mxu0 0.0
    %1870 = vmatpush2.msra.mxu0 %v1771
    %1871 = vmatprep.subr.mxu0 0.0
    %1872 = vmatpush2.msra.mxu0 %v1770
    %1873 = vmatprep.subr.mxu0 0.0
    %1874 = vmatpush2.msra.mxu0 %v1769
    %1875 = vmatprep.subr.mxu0 0.0
    %1876 = vmatpush2.msra.mxu0 %v1768
    %1877 = vmatprep.mubr.f32.mxu0 %v1749
    %1878 = vmatmul.mubr.f32.gmra.mxu0 %v1748
    %v1879 = vpop.f32.mrf.mxu0
    %v1880 = vadd.f32 %v1807, %v1879
    %v1881 = vpop.f32.mrf.mxu0
    %1882 = vdwg.mxu0
    %1883 = vmatprep.subr.mxu0 0.0
    %1884 = vmatpush1.msra.mxu0 %v1799
    %1885 = vmatprep.subr.mxu0 0.0
    %1886 = vmatpush1.msra.mxu0 %v1798
    %1887 = vmatprep.subr.mxu0 0.0
    %1888 = vmatpush1.msra.mxu0 %v1797
    %1889 = vmatprep.subr.mxu0 0.0
    %1890 = vmatpush1.msra.mxu0 %v1796
    %1891 = vmatprep.subr.mxu0 0.0
    %1892 = vmatpush1.msra.mxu0 %v1795
    %1893 = vmatprep.subr.mxu0 0.0
    %1894 = vmatpush1.msra.mxu0 %v1794
    %1895 = vmatprep.subr.mxu0 0.0
    %1896 = vmatpush1.msra.mxu0 %v1793
    %1897 = vmatprep.subr.mxu0 0.0
    %1898 = vmatpush1.msra.mxu0 %v1792
    %1899 = vmatprep.subr.mxu0 0.0
    %1900 = vmatpush1.msra.mxu0 %v1791
    %1901 = vmatprep.subr.mxu0 0.0
    %1902 = vmatpush1.msra.mxu0 %v1790
    %1903 = vmatprep.subr.mxu0 0.0
    %1904 = vmatpush1.msra.mxu0 %v1789
    %1905 = vmatprep.subr.mxu0 0.0
    %1906 = vmatpush1.msra.mxu0 %v1788
    %1907 = vmatprep.subr.mxu0 0.0
    %1908 = vmatpush1.msra.mxu0 %v1787
    %1909 = vmatprep.subr.mxu0 0.0
    %1910 = vmatpush1.msra.mxu0 %v1786
    %1911 = vmatprep.subr.mxu0 0.0
    %1912 = vmatpush1.msra.mxu0 %v1785
    %1913 = vmatprep.subr.mxu0 0.0
    %1914 = vmatpush1.msra.mxu0 %v1784
    %1915 = vmatprep.subr.mxu0 0.0
    %1916 = vmatpush2.msra.mxu0 0.0
    %1917 = vmatprep.subr.mxu0 0.0
    %1918 = vmatpush2.msra.mxu0 0.0
    %1919 = vmatprep.subr.mxu0 0.0
    %1920 = vmatpush2.msra.mxu0 0.0
    %1921 = vmatprep.subr.mxu0 0.0
    %1922 = vmatpush2.msra.mxu0 0.0
    %1923 = vmatprep.subr.mxu0 0.0
    %1924 = vmatpush2.msra.mxu0 0.0
    %1925 = vmatprep.subr.mxu0 0.0
    %1926 = vmatpush2.msra.mxu0 0.0
    %1927 = vmatprep.subr.mxu0 0.0
    %1928 = vmatpush2.msra.mxu0 0.0
    %1929 = vmatprep.subr.mxu0 0.0
    %1930 = vmatpush2.msra.mxu0 0.0
    %1931 = vmatprep.subr.mxu0 0.0
    %1932 = vmatpush2.msra.mxu0 0.0
    %1933 = vmatprep.subr.mxu0 0.0
    %1934 = vmatpush2.msra.mxu0 0.0
    %1935 = vmatprep.subr.mxu0 0.0
    %1936 = vmatpush2.msra.mxu0 0.0
    %1937 = vmatprep.subr.mxu0 0.0
    %1938 = vmatpush2.msra.mxu0 0.0
    %1939 = vmatprep.subr.mxu0 0.0
    %1940 = vmatpush2.msra.mxu0 0.0
    %1941 = vmatprep.subr.mxu0 0.0
    %1942 = vmatpush2.msra.mxu0 0.0
    %1943 = vmatprep.subr.mxu0 0.0
    %1944 = vmatpush2.msra.mxu0 %v1801
    %1945 = vmatprep.subr.mxu0 0.0
    %1946 = vmatpush2.msra.mxu0 %v1800
    %1947 = vmatprep.mubr.f32.mxu0 %v1811
    %1948 = vmatmul.mubr.f32.gmra.mxu0 %v1750
    %v1949 = vpop.f32.mrf.mxu0
    %v1950 = vadd.f32 %v1880, %v1949
    %v1951 = vpop.f32.mrf.mxu0
    %1952 = vdwg.mxu0
    %vm1953 = vcmask 326656
    %1954 = vst.msk [vmem:[#allocation4] sm:$0xff] %vm1953, %v1950
    %v1955 = vld [vmem:[%s5] sm:$0xff]
    %v1956 = vmul.f32 %v1950, 0.5
    %v1957 = vmul.f32 %v1956, 1.442695
    %v1958 = vpow.pop %v1957
    %1960 = vrot.lane.b32.xlu0 %v1958, 108
    %v1961 = vpop.permute.xlu0 %1960
    %v1963 = vmul.f32 %v1955, %v1961
    %v1964 = vadd.f32 %v1950, %v1963
    %v1965 = vld [vmem:[%s6] sm:$0xff]
    %v1966 = vld [vmem:[%s6 + $0x8] sm:$0xff]
    %v1967 = vld [vmem:[%s6 + $0x10] sm:$0xff]
    %v1968 = vld [vmem:[%s6 + $0x18] sm:$0xff]
    %v1969 = vld [vmem:[%s6 + $0x20] sm:$0xff]
    %v1970 = vld [vmem:[%s6 + $0x28] sm:$0xff]
    %v1971 = vld [vmem:[%s6 + $0x30] sm:$0xff]
    %v1972 = vld [vmem:[%s6 + $0x38] sm:$0xff]
    %v1973 = vld [vmem:[%s6 + $0x40] sm:$0xf]
    %v1974 = vld [vmem:[%s6 + $0x48] sm:$0xf]
    %v1975 = vld [vmem:[%s6 + $0x50] sm:$0xf]
    %v1976 = vld [vmem:[%s6 + $0x58] sm:$0xf]
    %v1977 = vld [vmem:[%s7] sm:$0xf]
    %v1979 = vlaneseq
    %v1980 = vshrl.u32 %v1979, 7
    %v1981 = vsub.s32 0, %v1980
    %v1982 = vrot.slane %v1977, %v1981
    %v1983 = vlaneseq
    %v1984 = vshrl.u32 %v1983, 7
    %v1985 = vsub.s32 1, %v1984
    %v1986 = vrot.slane %v1977, %v1985
    %v1987 = vlaneseq
    %v1988 = vshrl.u32 %v1987, 7
    %v1989 = vsub.s32 2, %v1988
    %v1990 = vrot.slane %v1977, %v1989
    %v1991 = vlaneseq
    %v1992 = vshrl.u32 %v1991, 7
    %v1993 = vsub.s32 3, %v1992
    %v1994 = vrot.slane %v1977, %v1993
    %vm1999 = vcmask 162816
    %v2001 = vsel %vm1999, %v1964, 0
    %vm2003 = vcmask 1043456
    %v2005 = vsel %vm2003, %v1973, 0
    %v2008 = vsel %vm2003, %v1974, 0
    %v2011 = vsel %vm2003, %v1975, 0
    %v2014 = vsel %vm2003, %v1976, 0
    %2016 = vmatprep.subr.mxu0 0.0
    %2017 = vmatpush1.msra.mxu0 0.0
    %2018 = vmatprep.subr.mxu0 0.0
    %2019 = vmatpush1.msra.mxu0 0.0
    %2020 = vmatprep.subr.mxu0 0.0
    %2021 = vmatpush1.msra.mxu0 0.0
    %2022 = vmatprep.subr.mxu0 0.0
    %2023 = vmatpush1.msra.mxu0 0.0
    %2024 = vmatprep.subr.mxu0 0.0
    %2025 = vmatpush1.msra.mxu0 0.0
    %2026 = vmatprep.subr.mxu0 0.0
    %2027 = vmatpush1.msra.mxu0 0.0
    %2028 = vmatprep.subr.mxu0 0.0
    %2029 = vmatpush1.msra.mxu0 0.0
    %2030 = vmatprep.subr.mxu0 0.0
    %2031 = vmatpush1.msra.mxu0 0.0
    %2032 = vmatprep.subr.mxu0 0.0
    %2033 = vmatpush1.msra.mxu0 0.0
    %2034 = vmatprep.subr.mxu0 0.0
    %2035 = vmatpush1.msra.mxu0 0.0
    %2036 = vmatprep.subr.mxu0 0.0
    %2037 = vmatpush1.msra.mxu0 0.0
    %2038 = vmatprep.subr.mxu0 0.0
    %2039 = vmatpush1.msra.mxu0 0.0
    %2040 = vmatprep.subr.mxu0 0.0
    %2041 = vmatpush1.msra.mxu0 0.0
    %2042 = vmatprep.subr.mxu0 %v2008
    %2043 = vmatpush1.msra.mxu0 %v2005
    %2044 = vmatprep.subr.mxu0 %v1970
    %2045 = vmatpush1.msra.mxu0 %v1969
    %2046 = vmatprep.subr.mxu0 %v1966
    %2047 = vmatpush1.msra.mxu0 %v1965
    %2048 = vmatprep.subr.mxu0 0.0
    %2049 = vmatpush2.msra.mxu0 0.0
    %2050 = vmatprep.subr.mxu0 0.0
    %2051 = vmatpush2.msra.mxu0 0.0
    %2052 = vmatprep.subr.mxu0 0.0
    %2053 = vmatpush2.msra.mxu0 0.0
    %2054 = vmatprep.subr.mxu0 0.0
    %2055 = vmatpush2.msra.mxu0 0.0
    %2056 = vmatprep.subr.mxu0 0.0
    %2057 = vmatpush2.msra.mxu0 0.0
    %2058 = vmatprep.subr.mxu0 0.0
    %2059 = vmatpush2.msra.mxu0 0.0
    %2060 = vmatprep.subr.mxu0 0.0
    %2061 = vmatpush2.msra.mxu0 0.0
    %2062 = vmatprep.subr.mxu0 0.0
    %2063 = vmatpush2.msra.mxu0 0.0
    %2064 = vmatprep.subr.mxu0 0.0
    %2065 = vmatpush2.msra.mxu0 0.0
    %2066 = vmatprep.subr.mxu0 0.0
    %2067 = vmatpush2.msra.mxu0 0.0
    %2068 = vmatprep.subr.mxu0 0.0
    %2069 = vmatpush2.msra.mxu0 0.0
    %2070 = vmatprep.subr.mxu0 0.0
    %2071 = vmatpush2.msra.mxu0 0.0
    %2072 = vmatprep.subr.mxu0 0.0
    %2073 = vmatpush2.msra.mxu0 0.0
    %2074 = vmatprep.subr.mxu0 0.0
    %2075 = vmatpush2.msra.mxu0 0.0
    %2076 = vmatprep.subr.mxu0 0.0
    %2077 = vmatpush2.msra.mxu0 0.0
    %2078 = vmatprep.subr.mxu0 0.0
    %2079 = vmatpush2.msra.mxu0 0.0
    %2080 = vmatprep.mubr.f32.mxu0 0.0
    %2081 = vmatmul.mubr.f32.gmra.mxu0 %v2001
    %v2082 = vpop.f32.mrf.mxu0
    %v2083 = vadd.f32 %v1982, %v2082
    %v2084 = vpop.f32.mrf.mxu0
    %v2085 = vadd.f32 %v1986, %v2084
    %2086 = vdwg.mxu0
    %2087 = vmatprep.subr.mxu0 0.0
    %2088 = vmatpush1.msra.mxu0 0.0
    %2089 = vmatprep.subr.mxu0 0.0
    %2090 = vmatpush1.msra.mxu0 0.0
    %2091 = vmatprep.subr.mxu0 0.0
    %2092 = vmatpush1.msra.mxu0 0.0
    %2093 = vmatprep.subr.mxu0 0.0
    %2094 = vmatpush1.msra.mxu0 0.0
    %2095 = vmatprep.subr.mxu0 0.0
    %2096 = vmatpush1.msra.mxu0 0.0
    %2097 = vmatprep.subr.mxu0 0.0
    %2098 = vmatpush1.msra.mxu0 0.0
    %2099 = vmatprep.subr.mxu0 0.0
    %2100 = vmatpush1.msra.mxu0 0.0
    %2101 = vmatprep.subr.mxu0 0.0
    %2102 = vmatpush1.msra.mxu0 0.0
    %2103 = vmatprep.subr.mxu0 0.0
    %2104 = vmatpush1.msra.mxu0 0.0
    %2105 = vmatprep.subr.mxu0 0.0
    %2106 = vmatpush1.msra.mxu0 0.0
    %2107 = vmatprep.subr.mxu0 0.0
    %2108 = vmatpush1.msra.mxu0 0.0
    %2109 = vmatprep.subr.mxu0 0.0
    %2110 = vmatpush1.msra.mxu0 0.0
    %2111 = vmatprep.subr.mxu0 0.0
    %2112 = vmatpush1.msra.mxu0 0.0
    %2113 = vmatprep.subr.mxu0 %v2014
    %2114 = vmatpush1.msra.mxu0 %v2011
    %2115 = vmatprep.subr.mxu0 %v1972
    %2116 = vmatpush1.msra.mxu0 %v1971
    %2117 = vmatprep.subr.mxu0 %v1968
    %2118 = vmatpush1.msra.mxu0 %v1967
    %2119 = vmatprep.subr.mxu0 0.0
    %2120 = vmatpush2.msra.mxu0 0.0
    %2121 = vmatprep.subr.mxu0 0.0
    %2122 = vmatpush2.msra.mxu0 0.0
    %2123 = vmatprep.subr.mxu0 0.0
    %2124 = vmatpush2.msra.mxu0 0.0
    %2125 = vmatprep.subr.mxu0 0.0
    %2126 = vmatpush2.msra.mxu0 0.0
    %2127 = vmatprep.subr.mxu0 0.0
    %2128 = vmatpush2.msra.mxu0 0.0
    %2129 = vmatprep.subr.mxu0 0.0
    %2130 = vmatpush2.msra.mxu0 0.0
    %2131 = vmatprep.subr.mxu0 0.0
    %2132 = vmatpush2.msra.mxu0 0.0
    %2133 = vmatprep.subr.mxu0 0.0
    %2134 = vmatpush2.msra.mxu0 0.0
    %2135 = vmatprep.subr.mxu0 0.0
    %2136 = vmatpush2.msra.mxu0 0.0
    %2137 = vmatprep.subr.mxu0 0.0
    %2138 = vmatpush2.msra.mxu0 0.0
    %2139 = vmatprep.subr.mxu0 0.0
    %2140 = vmatpush2.msra.mxu0 0.0
    %2141 = vmatprep.subr.mxu0 0.0
    %2142 = vmatpush2.msra.mxu0 0.0
    %2143 = vmatprep.subr.mxu0 0.0
    %2144 = vmatpush2.msra.mxu0 0.0
    %2145 = vmatprep.subr.mxu0 0.0
    %2146 = vmatpush2.msra.mxu0 0.0
    %2147 = vmatprep.subr.mxu0 0.0
    %2148 = vmatpush2.msra.mxu0 0.0
    %2149 = vmatprep.subr.mxu0 0.0
    %2150 = vmatpush2.msra.mxu0 0.0
    %2151 = vmatprep.mubr.f32.mxu0 0.0
    %2152 = vmatmul.mubr.f32.gmra.mxu0 %v2001
    %v2153 = vpop.f32.mrf.mxu0
    %v2154 = vadd.f32 %v1990, %v2153
    %v2155 = vpop.f32.mrf.mxu0
    %v2156 = vadd.f32 %v1994, %v2155
    %2157 = vdwg.mxu0
    %v2158 = vmax.f32 %v2083, 0.0
    %v2159 = vmax.f32 %v2085, 0.0
    %v2160 = vmax.f32 %v2154, 0.0
    %v2161 = vmax.f32 %v2156, 0.0
    %v2162 = vpack.c.bf16 %v2158, %v2158
    %v2163 = vpack.c.bf16 %v2159, %v2159
    %v2164 = vpack.c.bf16 %v2160, %v2160
    %v2165 = vpack.c.bf16 %v2161, %v2161
    %v2166 = vld [vmem:[%s8] sm:$0xff]
    %v2167 = vld [vmem:[%s8 + $0x8] sm:$0xff]
    %v2168 = vld [vmem:[%s8 + $0x10] sm:$0xff]
    %v2169 = vld [vmem:[%s8 + $0x18] sm:$0xf]
    %v2170 = vld [vmem:[%s8 + $0x1c] sm:$0xff]
    %v2171 = vld [vmem:[%s8 + $0x24] sm:$0xff]
    %v2172 = vld [vmem:[%s8 + $0x2c] sm:$0xff]
    %v2173 = vld [vmem:[%s8 + $0x34] sm:$0xf]
    %v2174 = vld [vmem:[%s8 + $0x38] sm:$0xff]
    %v2175 = vld [vmem:[%s8 + $0x40] sm:$0xff]
    %v2176 = vld [vmem:[%s8 + $0x48] sm:$0xff]
    %v2177 = vld [vmem:[%s8 + $0x50] sm:$0xf]
    %v2178 = vld [vmem:[%s8 + $0x54] sm:$0xff]
    %v2179 = vld [vmem:[%s8 + $0x5c] sm:$0xff]
    %v2180 = vld [vmem:[%s8 + $0x64] sm:$0xff]
    %v2181 = vld [vmem:[%s8 + $0x6c] sm:$0xf]
    %v2182 = vld [vmem:[%s8 + $0x70] sm:$0xff]
    %v2183 = vld [vmem:[%s8 + $0x78] sm:$0xff]
    %v2184 = vld [vmem:[%s8 + $0x80] sm:$0xff]
    %v2185 = vld [vmem:[%s8 + $0x88] sm:$0xf]
    %v2186 = vld [vmem:[%s8 + $0x8c] sm:$0xff]
    %v2187 = vld [vmem:[%s8 + $0x94] sm:$0xff]
    %v2188 = vld [vmem:[%s8 + $0x9c] sm:$0xff]
    %v2189 = vld [vmem:[%s8 + $0xa4] sm:$0xf]
    %v2190 = vld [vmem:[%s8 + $0xa8] sm:$0xff]
    %v2191 = vld [vmem:[%s8 + $0xb0] sm:$0xff]
    %v2192 = vld [vmem:[%s8 + $0xb8] sm:$0xff]
    %v2193 = vld [vmem:[%s8 + $0xc0] sm:$0xf]
    %v2194 = vld [vmem:[%s8 + $0xc4] sm:$0xff]
    %v2195 = vld [vmem:[%s8 + $0xcc] sm:$0xff]
    %v2196 = vld [vmem:[%s8 + $0xd4] sm:$0xff]
    %v2197 = vld [vmem:[%s8 + $0xdc] sm:$0xf]
    %v2198 = vld [vmem:[%s8 + $0xe0] sm:$0xff]
    %v2199 = vld [vmem:[%s8 + $0xe8] sm:$0xff]
    %v2200 = vld [vmem:[%s8 + $0xf0] sm:$0xff]
    %v2201 = vld [vmem:[%s8 + $0xf8] sm:$0xf]
    %v2202 = vld [vmem:[%s8 + $0xfc] sm:$0xff]
    %v2203 = vld [vmem:[%s8 + $0x104] sm:$0xff]
    %v2204 = vld [vmem:[%s8 + $0x10c] sm:$0xff]
    %v2205 = vld [vmem:[%s8 + $0x114] sm:$0xf]
    %v2206 = vld [vmem:[%s8 + $0x118] sm:$0xff]
    %v2207 = vld [vmem:[%s8 + $0x120] sm:$0xff]
    %v2208 = vld [vmem:[%s8 + $0x128] sm:$0xff]
    %v2209 = vld [vmem:[%s8 + $0x130] sm:$0xf]
    %v2210 = vld [vmem:[%s8 + $0x134] sm:$0xff]
    %v2211 = vld [vmem:[%s8 + $0x13c] sm:$0xff]
    %v2212 = vld [vmem:[%s8 + $0x144] sm:$0xff]
    %v2213 = vld [vmem:[%s8 + $0x14c] sm:$0xf]
    %v2214 = vld [vmem:[%s8 + $0x150] sm:$0xff]
    %v2215 = vld [vmem:[%s8 + $0x158] sm:$0xff]
    %v2216 = vld [vmem:[%s8 + $0x160] sm:$0xff]
    %v2217 = vld [vmem:[%s8 + $0x168] sm:$0xf]
    %v2218 = vld [vmem:[%s8 + $0x16c] sm:$0xff]
    %v2219 = vld [vmem:[%s8 + $0x174] sm:$0xff]
    %v2220 = vld [vmem:[%s8 + $0x17c] sm:$0xff]
    %v2221 = vld [vmem:[%s8 + $0x184] sm:$0xf]
    %v2222 = vld [vmem:[%s8 + $0x188] sm:$0xff]
    %v2223 = vld [vmem:[%s8 + $0x190] sm:$0xff]
    %v2224 = vld [vmem:[%s8 + $0x198] sm:$0xff]
    %v2225 = vld [vmem:[%s8 + $0x1a0] sm:$0xf]
    %v2226 = vld [vmem:[%s8 + $0x1a4] sm:$0xff]
    %v2227 = vld [vmem:[%s8 + $0x1ac] sm:$0xff]
    %v2228 = vld [vmem:[%s8 + $0x1b4] sm:$0xff]
    %v2229 = vld [vmem:[%s8 + $0x1bc] sm:$0xf]
    %v2230 = vld [vmem:[%s8 + $0x1c0] sm:$0xff]
    %v2231 = vld [vmem:[%s8 + $0x1c8] sm:$0xff]
    %v2232 = vld [vmem:[%s8 + $0x1d0] sm:$0xff]
    %v2233 = vld [vmem:[%s8 + $0x1d8] sm:$0xf]
    %v2234 = vld [vmem:[%s8 + $0x1dc] sm:$0xff]
    %v2235 = vld [vmem:[%s8 + $0x1e4] sm:$0xff]
    %v2236 = vld [vmem:[%s8 + $0x1ec] sm:$0xff]
    %v2237 = vld [vmem:[%s8 + $0x1f4] sm:$0xf]
    %v2238 = vld [vmem:[%s8 + $0x1f8] sm:$0xff]
    %v2239 = vld [vmem:[%s8 + $0x200] sm:$0xff]
    %v2240 = vld [vmem:[%s8 + $0x208] sm:$0xff]
    %v2241 = vld [vmem:[%s8 + $0x210] sm:$0xf]
    %v2242 = vld [vmem:[%s8 + $0x214] sm:$0xff]
    %v2243 = vld [vmem:[%s8 + $0x21c] sm:$0xff]
    %v2244 = vld [vmem:[%s8 + $0x224] sm:$0xff]
    %v2245 = vld [vmem:[%s8 + $0x22c] sm:$0xf]
    %v2246 = vld [vmem:[%s8 + $0x230] sm:$0xff]
    %v2247 = vld [vmem:[%s8 + $0x238] sm:$0xff]
    %v2248 = vld [vmem:[%s8 + $0x240] sm:$0xff]
    %v2249 = vld [vmem:[%s8 + $0x248] sm:$0xf]
    %v2250 = vld [vmem:[%s8 + $0x24c] sm:$0xff]
    %v2251 = vld [vmem:[%s8 + $0x254] sm:$0xff]
    %v2252 = vld [vmem:[%s8 + $0x25c] sm:$0xff]
    %v2253 = vld [vmem:[%s8 + $0x264] sm:$0xf]
    %v2254 = vld [vmem:[%s8 + $0x268] sm:$0xff]
    %v2255 = vld [vmem:[%s8 + $0x270] sm:$0xff]
    %v2256 = vld [vmem:[%s8 + $0x278] sm:$0xff]
    %v2257 = vld [vmem:[%s8 + $0x280] sm:$0xf]
    %v2258 = vld [vmem:[%s8 + $0x284] sm:$0xff]
    %v2259 = vld [vmem:[%s8 + $0x28c] sm:$0xff]
    %v2260 = vld [vmem:[%s8 + $0x294] sm:$0xff]
    %v2261 = vld [vmem:[%s8 + $0x29c] sm:$0xf]
    %v2262 = vld [vmem:[%s8 + $0x2a0] sm:$0xff]
    %v2263 = vld [vmem:[%s8 + $0x2a8] sm:$0xff]
    %v2264 = vld [vmem:[%s8 + $0x2b0] sm:$0xff]
    %v2265 = vld [vmem:[%s8 + $0x2b8] sm:$0xf]
    %v2266 = vld [vmem:[%s8 + $0x2bc] sm:$0xff]
    %v2267 = vld [vmem:[%s8 + $0x2c4] sm:$0xff]
    %v2268 = vld [vmem:[%s8 + $0x2cc] sm:$0xff]
    %v2269 = vld [vmem:[%s8 + $0x2d4] sm:$0xf]
    %v2270 = vld [vmem:[%s8 + $0x2d8] sm:$0xff]
    %v2271 = vld [vmem:[%s8 + $0x2e0] sm:$0xff]
    %v2272 = vld [vmem:[%s8 + $0x2e8] sm:$0xff]
    %v2273 = vld [vmem:[%s8 + $0x2f0] sm:$0xf]
    %v2274 = vld [vmem:[%s8 + $0x2f4] sm:$0xff]
    %v2275 = vld [vmem:[%s8 + $0x2fc] sm:$0xff]
    %v2276 = vld [vmem:[%s8 + $0x304] sm:$0xff]
    %v2277 = vld [vmem:[%s8 + $0x30c] sm:$0xf]
    %v2278 = vld [vmem:[%s8 + $0x310] sm:$0xff]
    %v2279 = vld [vmem:[%s8 + $0x318] sm:$0xff]
    %v2280 = vld [vmem:[%s8 + $0x320] sm:$0xff]
    %v2281 = vld [vmem:[%s8 + $0x328] sm:$0xf]
    %v2282 = vld [vmem:[%s8 + $0x32c] sm:$0xff]
    %v2283 = vld [vmem:[%s8 + $0x334] sm:$0xff]
    %v2284 = vld [vmem:[%s8 + $0x33c] sm:$0xff]
    %v2285 = vld [vmem:[%s8 + $0x344] sm:$0xf]
    %v2286 = vld [vmem:[%s8 + $0x348] sm:$0xff]
    %v2287 = vld [vmem:[%s8 + $0x350] sm:$0xff]
    %v2288 = vld [vmem:[%s8 + $0x358] sm:$0xff]
    %v2289 = vld [vmem:[%s8 + $0x360] sm:$0xf]
    %v2290 = vld [vmem:[%s8 + $0x364] sm:$0xff]
    %v2291 = vld [vmem:[%s8 + $0x36c] sm:$0xff]
    %v2292 = vld [vmem:[%s8 + $0x374] sm:$0xff]
    %v2293 = vld [vmem:[%s8 + $0x37c] sm:$0xf]
    %v2294 = vld [vmem:[%s8 + $0x380] sm:$0xff]
    %v2295 = vld [vmem:[%s8 + $0x388] sm:$0xff]
    %v2296 = vld [vmem:[%s8 + $0x390] sm:$0xff]
    %v2297 = vld [vmem:[%s8 + $0x398] sm:$0xf]
    %v2298 = vld [vmem:[%s8 + $0x39c] sm:$0xff]
    %v2299 = vld [vmem:[%s8 + $0x3a4] sm:$0xff]
    %v2300 = vld [vmem:[%s8 + $0x3ac] sm:$0xff]
    %v2301 = vld [vmem:[%s8 + $0x3b4] sm:$0xf]
    %v2302 = vld [vmem:[%s8 + $0x3b8] sm:$0xff]
    %v2303 = vld [vmem:[%s8 + $0x3c0] sm:$0xff]
    %v2304 = vld [vmem:[%s8 + $0x3c8] sm:$0xff]
    %v2305 = vld [vmem:[%s8 + $0x3d0] sm:$0xf]
    %v2306 = vld [vmem:[%s8 + $0x3d4] sm:$0xff]
    %v2307 = vld [vmem:[%s8 + $0x3dc] sm:$0xff]
    %v2308 = vld [vmem:[%s8 + $0x3e4] sm:$0xff]
    %v2309 = vld [vmem:[%s8 + $0x3ec] sm:$0xf]
    %v2310 = vld [vmem:[%s8 + $0x3f0] sm:$0xff]
    %v2311 = vld [vmem:[%s8 + $0x3f8] sm:$0xff]
    %v2312 = vld [vmem:[%s8 + $0x400] sm:$0xff]
    %v2313 = vld [vmem:[%s8 + $0x408] sm:$0xf]
    %v2314 = vld [vmem:[%s8 + $0x40c] sm:$0xff]
    %v2315 = vld [vmem:[%s8 + $0x414] sm:$0xff]
    %v2316 = vld [vmem:[%s8 + $0x41c] sm:$0xff]
    %v2317 = vld [vmem:[%s8 + $0x424] sm:$0xf]
    %v2318 = vld [vmem:[%s8 + $0x428] sm:$0xff]
    %v2319 = vld [vmem:[%s8 + $0x430] sm:$0xff]
    %v2320 = vld [vmem:[%s8 + $0x438] sm:$0xff]
    %v2321 = vld [vmem:[%s8 + $0x440] sm:$0xf]
    %v2322 = vld [vmem:[%s8 + $0x444] sm:$0xff]
    %v2323 = vld [vmem:[%s8 + $0x44c] sm:$0xff]
    %v2324 = vld [vmem:[%s8 + $0x454] sm:$0xff]
    %v2325 = vld [vmem:[%s8 + $0x45c] sm:$0xf]
    %v2326 = vld [vmem:[%s8 + $0x460] sm:$0xff]
    %v2327 = vld [vmem:[%s8 + $0x468] sm:$0xff]
    %v2328 = vld [vmem:[%s8 + $0x470] sm:$0xff]
    %v2329 = vld [vmem:[%s8 + $0x478] sm:$0xf]
    %v2330 = vld [vmem:[%s8 + $0x47c] sm:$0xff]
    %v2331 = vld [vmem:[%s8 + $0x484] sm:$0xff]
    %v2332 = vld [vmem:[%s8 + $0x48c] sm:$0xff]
    %v2333 = vld [vmem:[%s8 + $0x494] sm:$0xf]
    %v2334 = vld [vmem:[%s8 + $0x498] sm:$0xff]
    %v2335 = vld [vmem:[%s8 + $0x4a0] sm:$0xff]
    %v2336 = vld [vmem:[%s8 + $0x4a8] sm:$0xff]
    %v2337 = vld [vmem:[%s8 + $0x4b0] sm:$0xf]
    %v2338 = vld [vmem:[%s8 + $0x4b4] sm:$0xff]
    %v2339 = vld [vmem:[%s8 + $0x4bc] sm:$0xff]
    %v2340 = vld [vmem:[%s8 + $0x4c4] sm:$0xff]
    %v2341 = vld [vmem:[%s8 + $0x4cc] sm:$0xf]
    %v2342 = vld [vmem:[%s8 + $0x4d0] sm:$0xff]
    %v2343 = vld [vmem:[%s8 + $0x4d8] sm:$0xff]
    %v2344 = vld [vmem:[%s8 + $0x4e0] sm:$0xff]
    %v2345 = vld [vmem:[%s8 + $0x4e8] sm:$0xf]
    %v2346 = vld [vmem:[%s8 + $0x4ec] sm:$0xff]
    %v2347 = vld [vmem:[%s8 + $0x4f4] sm:$0xff]
    %v2348 = vld [vmem:[%s8 + $0x4fc] sm:$0xff]
    %v2349 = vld [vmem:[%s8 + $0x504] sm:$0xf]
    %v2350 = vld [vmem:[%s8 + $0x508] sm:$0xff]
    %v2351 = vld [vmem:[%s8 + $0x510] sm:$0xff]
    %v2352 = vld [vmem:[%s8 + $0x518] sm:$0xff]
    %v2353 = vld [vmem:[%s8 + $0x520] sm:$0xf]
    %v2354 = vld [vmem:[%s8 + $0x524] sm:$0xff]
    %v2355 = vld [vmem:[%s8 + $0x52c] sm:$0xff]
    %v2356 = vld [vmem:[%s8 + $0x534] sm:$0xff]
    %v2357 = vld [vmem:[%s8 + $0x53c] sm:$0xf]
    %v2358 = vld [vmem:[%s8 + $0x540] sm:$0xff]
    %v2359 = vld [vmem:[%s8 + $0x548] sm:$0xff]
    %v2360 = vld [vmem:[%s8 + $0x550] sm:$0xff]
    %v2361 = vld [vmem:[%s8 + $0x558] sm:$0xf]
    %v2362 = vld [vmem:[%s8 + $0x55c] sm:$0xff]
    %v2363 = vld [vmem:[%s8 + $0x564] sm:$0xff]
    %v2364 = vld [vmem:[%s8 + $0x56c] sm:$0xff]
    %v2365 = vld [vmem:[%s8 + $0x574] sm:$0xf]
    %v2366 = vld [vmem:[%s9] sm:$0xff]
    %v2368 = vlaneseq
    %v2369 = vshrl.u32 %v2368, 7
    %v2370 = vsub.s32 0, %v2369
    %v2371 = vrot.slane %v2366, %v2370
    %v2372 = vlaneseq
    %v2373 = vshrl.u32 %v2372, 7
    %v2374 = vsub.s32 1, %v2373
    %v2375 = vrot.slane %v2366, %v2374
    %v2376 = vlaneseq
    %v2377 = vshrl.u32 %v2376, 7
    %v2378 = vsub.s32 2, %v2377
    %v2379 = vrot.slane %v2366, %v2378
    %v2380 = vlaneseq
    %v2381 = vshrl.u32 %v2380, 7
    %v2382 = vsub.s32 3, %v2381
    %v2383 = vrot.slane %v2366, %v2382
    %v2384 = vlaneseq
    %v2385 = vshrl.u32 %v2384, 7
    %v2386 = vsub.s32 4, %v2385
    %v2387 = vrot.slane %v2366, %v2386
    %v2388 = vlaneseq
    %v2389 = vshrl.u32 %v2388, 7
    %v2390 = vsub.s32 5, %v2389
    %v2391 = vrot.slane %v2366, %v2390
    %v2392 = vlaneseq
    %v2393 = vshrl.u32 %v2392, 7
    %v2394 = vsub.s32 6, %v2393
    %v2395 = vrot.slane %v2366, %v2394
    %v2603 = vunpack.c.l.b16 %v2166
    %v2604 = vunpack.c.h.b16 %v2166
    %v2605 = vunpack.c.l.b16 %v2167
    %v2606 = vunpack.c.h.b16 %v2167
    %v2607 = vunpack.c.l.b16 %v2168
    %v2608 = vunpack.c.h.b16 %v2168
    %v2609 = vunpack.c.l.b16 %v2169
    %v2610 = vunpack.c.l.b16 %v2170
    %v2611 = vunpack.c.h.b16 %v2170
    %v2612 = vunpack.c.l.b16 %v2171
    %v2613 = vunpack.c.h.b16 %v2171
    %v2614 = vunpack.c.l.b16 %v2172
    %v2615 = vunpack.c.h.b16 %v2172
    %v2616 = vunpack.c.l.b16 %v2173
    %v2617 = vunpack.c.l.b16 %v2174
    %v2618 = vunpack.c.h.b16 %v2174
    %v2619 = vunpack.c.l.b16 %v2175
    %v2620 = vunpack.c.h.b16 %v2175
    %v2621 = vunpack.c.l.b16 %v2176
    %v2622 = vunpack.c.h.b16 %v2176
    %v2623 = vunpack.c.l.b16 %v2177
    %v2624 = vunpack.c.l.b16 %v2178
    %v2625 = vunpack.c.h.b16 %v2178
    %v2626 = vunpack.c.l.b16 %v2179
    %v2627 = vunpack.c.h.b16 %v2179
    %v2628 = vunpack.c.l.b16 %v2180
    %v2629 = vunpack.c.h.b16 %v2180
    %v2630 = vunpack.c.l.b16 %v2181
    %v2631 = vunpack.c.l.b16 %v2182
    %v2632 = vunpack.c.h.b16 %v2182
    %v2633 = vunpack.c.l.b16 %v2183
    %v2634 = vunpack.c.h.b16 %v2183
    %v2635 = vunpack.c.l.b16 %v2184
    %v2636 = vunpack.c.h.b16 %v2184
    %v2637 = vunpack.c.l.b16 %v2185
    %v2638 = vunpack.c.l.b16 %v2186
    %v2639 = vunpack.c.h.b16 %v2186
    %v2640 = vunpack.c.l.b16 %v2187
    %v2641 = vunpack.c.h.b16 %v2187
    %v2642 = vunpack.c.l.b16 %v2188
    %v2643 = vunpack.c.h.b16 %v2188
    %v2644 = vunpack.c.l.b16 %v2189
    %v2645 = vunpack.c.l.b16 %v2190
    %v2646 = vunpack.c.h.b16 %v2190
    %v2647 = vunpack.c.l.b16 %v2191
    %v2648 = vunpack.c.h.b16 %v2191
    %v2649 = vunpack.c.l.b16 %v2192
    %v2650 = vunpack.c.h.b16 %v2192
    %v2651 = vunpack.c.l.b16 %v2193
    %v2652 = vunpack.c.l.b16 %v2194
    %v2653 = vunpack.c.h.b16 %v2194
    %v2654 = vunpack.c.l.b16 %v2195
    %v2655 = vunpack.c.h.b16 %v2195
    %v2656 = vunpack.c.l.b16 %v2196
    %v2657 = vunpack.c.h.b16 %v2196
    %v2658 = vunpack.c.l.b16 %v2197
    %v2659 = vunpack.c.l.b16 %v2198
    %v2660 = vunpack.c.h.b16 %v2198
    %v2661 = vunpack.c.l.b16 %v2199
    %v2662 = vunpack.c.h.b16 %v2199
    %v2663 = vunpack.c.l.b16 %v2200
    %v2664 = vunpack.c.h.b16 %v2200
    %v2665 = vunpack.c.l.b16 %v2201
    %v2666 = vunpack.c.l.b16 %v2202
    %v2667 = vunpack.c.h.b16 %v2202
    %v2668 = vunpack.c.l.b16 %v2203
    %v2669 = vunpack.c.h.b16 %v2203
    %v2670 = vunpack.c.l.b16 %v2204
    %v2671 = vunpack.c.h.b16 %v2204
    %v2672 = vunpack.c.l.b16 %v2205
    %v2673 = vunpack.c.l.b16 %v2206
    %v2674 = vunpack.c.h.b16 %v2206
    %v2675 = vunpack.c.l.b16 %v2207
    %v2676 = vunpack.c.h.b16 %v2207
    %v2677 = vunpack.c.l.b16 %v2208
    %v2678 = vunpack.c.h.b16 %v2208
    %v2679 = vunpack.c.l.b16 %v2209
    %v2680 = vunpack.c.l.b16 %v2210
    %v2681 = vunpack.c.h.b16 %v2210
    %v2682 = vunpack.c.l.b16 %v2211
    %v2683 = vunpack.c.h.b16 %v2211
    %v2684 = vunpack.c.l.b16 %v2212
    %v2685 = vunpack.c.h.b16 %v2212
    %v2686 = vunpack.c.l.b16 %v2213
    %v2687 = vunpack.c.l.b16 %v2214
    %v2688 = vunpack.c.h.b16 %v2214
    %v2689 = vunpack.c.l.b16 %v2215
    %v2690 = vunpack.c.h.b16 %v2215
    %v2691 = vunpack.c.l.b16 %v2216
    %v2692 = vunpack.c.h.b16 %v2216
    %v2693 = vunpack.c.l.b16 %v2217
    %v2694 = vunpack.c.l.b16 %v2218
    %v2695 = vunpack.c.h.b16 %v2218
    %v2696 = vunpack.c.l.b16 %v2219
    %v2697 = vunpack.c.h.b16 %v2219
    %v2698 = vunpack.c.l.b16 %v2220
    %v2699 = vunpack.c.h.b16 %v2220
    %v2700 = vunpack.c.l.b16 %v2221
    %v2701 = vunpack.c.l.b16 %v2222
    %v2702 = vunpack.c.h.b16 %v2222
    %v2703 = vunpack.c.l.b16 %v2223
    %v2704 = vunpack.c.h.b16 %v2223
    %v2705 = vunpack.c.l.b16 %v2224
    %v2706 = vunpack.c.h.b16 %v2224
    %v2707 = vunpack.c.l.b16 %v2225
    %v2708 = vunpack.c.l.b16 %v2226
    %v2709 = vunpack.c.h.b16 %v2226
    %v2710 = vunpack.c.l.b16 %v2227
    %v2711 = vunpack.c.h.b16 %v2227
    %v2712 = vunpack.c.l.b16 %v2228
    %v2713 = vunpack.c.h.b16 %v2228
    %v2714 = vunpack.c.l.b16 %v2229
    %v2715 = vunpack.c.l.b16 %v2230
    %v2716 = vunpack.c.h.b16 %v2230
    %v2717 = vunpack.c.l.b16 %v2231
    %v2718 = vunpack.c.h.b16 %v2231
    %v2719 = vunpack.c.l.b16 %v2232
    %v2720 = vunpack.c.h.b16 %v2232
    %v2721 = vunpack.c.l.b16 %v2233
    %v2722 = vunpack.c.l.b16 %v2234
    %v2723 = vunpack.c.h.b16 %v2234
    %v2724 = vunpack.c.l.b16 %v2235
    %v2725 = vunpack.c.h.b16 %v2235
    %v2726 = vunpack.c.l.b16 %v2236
    %v2727 = vunpack.c.h.b16 %v2236
    %v2728 = vunpack.c.l.b16 %v2237
    %v2729 = vunpack.c.l.b16 %v2238
    %v2730 = vunpack.c.h.b16 %v2238
    %v2731 = vunpack.c.l.b16 %v2239
    %v2732 = vunpack.c.h.b16 %v2239
    %v2733 = vunpack.c.l.b16 %v2240
    %v2734 = vunpack.c.h.b16 %v2240
    %v2735 = vunpack.c.l.b16 %v2241
    %v2736 = vunpack.c.l.b16 %v2242
    %v2737 = vunpack.c.h.b16 %v2242
    %v2738 = vunpack.c.l.b16 %v2243
    %v2739 = vunpack.c.h.b16 %v2243
    %v2740 = vunpack.c.l.b16 %v2244
    %v2741 = vunpack.c.h.b16 %v2244
    %v2742 = vunpack.c.l.b16 %v2245
    %v2743 = vunpack.c.l.b16 %v2246
    %v2744 = vunpack.c.h.b16 %v2246
    %v2745 = vunpack.c.l.b16 %v2247
    %v2746 = vunpack.c.h.b16 %v2247
    %v2747 = vunpack.c.l.b16 %v2248
    %v2748 = vunpack.c.h.b16 %v2248
    %v2749 = vunpack.c.l.b16 %v2249
    %v2750 = vunpack.c.l.b16 %v2250
    %v2751 = vunpack.c.h.b16 %v2250
    %v2752 = vunpack.c.l.b16 %v2251
    %v2753 = vunpack.c.h.b16 %v2251
    %v2754 = vunpack.c.l.b16 %v2252
    %v2755 = vunpack.c.h.b16 %v2252
    %v2756 = vunpack.c.l.b16 %v2253
    %v2757 = vunpack.c.l.b16 %v2254
    %v2758 = vunpack.c.h.b16 %v2254
    %v2759 = vunpack.c.l.b16 %v2255
    %v2760 = vunpack.c.h.b16 %v2255
    %v2761 = vunpack.c.l.b16 %v2256
    %v2762 = vunpack.c.h.b16 %v2256
    %v2763 = vunpack.c.l.b16 %v2257
    %v2764 = vunpack.c.l.b16 %v2258
    %v2765 = vunpack.c.h.b16 %v2258
    %v2766 = vunpack.c.l.b16 %v2259
    %v2767 = vunpack.c.h.b16 %v2259
    %v2768 = vunpack.c.l.b16 %v2260
    %v2769 = vunpack.c.h.b16 %v2260
    %v2770 = vunpack.c.l.b16 %v2261
    %v2771 = vunpack.c.l.b16 %v2262
    %v2772 = vunpack.c.h.b16 %v2262
    %v2773 = vunpack.c.l.b16 %v2263
    %v2774 = vunpack.c.h.b16 %v2263
    %v2775 = vunpack.c.l.b16 %v2264
    %v2776 = vunpack.c.h.b16 %v2264
    %v2777 = vunpack.c.l.b16 %v2265
    %v2778 = vunpack.c.l.b16 %v2266
    %v2779 = vunpack.c.h.b16 %v2266
    %v2780 = vunpack.c.l.b16 %v2267
    %v2781 = vunpack.c.h.b16 %v2267
    %v2782 = vunpack.c.l.b16 %v2268
    %v2783 = vunpack.c.h.b16 %v2268
    %v2784 = vunpack.c.l.b16 %v2269
    %v2785 = vunpack.c.l.b16 %v2270
    %v2786 = vunpack.c.h.b16 %v2270
    %v2787 = vunpack.c.l.b16 %v2271
    %v2788 = vunpack.c.h.b16 %v2271
    %v2789 = vunpack.c.l.b16 %v2272
    %v2790 = vunpack.c.h.b16 %v2272
    %v2791 = vunpack.c.l.b16 %v2273
    %v2792 = vunpack.c.l.b16 %v2274
    %v2793 = vunpack.c.h.b16 %v2274
    %v2794 = vunpack.c.l.b16 %v2275
    %v2795 = vunpack.c.h.b16 %v2275
    %v2796 = vunpack.c.l.b16 %v2276
    %v2797 = vunpack.c.h.b16 %v2276
    %v2798 = vunpack.c.l.b16 %v2277
    %v2799 = vunpack.c.l.b16 %v2278
    %v2800 = vunpack.c.h.b16 %v2278
    %v2801 = vunpack.c.l.b16 %v2279
    %v2802 = vunpack.c.h.b16 %v2279
    %v2803 = vunpack.c.l.b16 %v2280
    %v2804 = vunpack.c.h.b16 %v2280
    %v2805 = vunpack.c.l.b16 %v2281
    %v2806 = vunpack.c.l.b16 %v2282
    %v2807 = vunpack.c.h.b16 %v2282
    %v2808 = vunpack.c.l.b16 %v2283
    %v2809 = vunpack.c.h.b16 %v2283
    %v2810 = vunpack.c.l.b16 %v2284
    %v2811 = vunpack.c.h.b16 %v2284
    %v2812 = vunpack.c.l.b16 %v2285
    %v2813 = vunpack.c.l.b16 %v2286
    %v2814 = vunpack.c.h.b16 %v2286
    %v2815 = vunpack.c.l.b16 %v2287
    %v2816 = vunpack.c.h.b16 %v2287
    %v2817 = vunpack.c.l.b16 %v2288
    %v2818 = vunpack.c.h.b16 %v2288
    %v2819 = vunpack.c.l.b16 %v2289
    %v2820 = vunpack.c.l.b16 %v2290
    %v2821 = vunpack.c.h.b16 %v2290
    %v2822 = vunpack.c.l.b16 %v2291
    %v2823 = vunpack.c.h.b16 %v2291
    %v2824 = vunpack.c.l.b16 %v2292
    %v2825 = vunpack.c.h.b16 %v2292
    %v2826 = vunpack.c.l.b16 %v2293
    %v2827 = vunpack.c.l.b16 %v2294
    %v2828 = vunpack.c.h.b16 %v2294
    %v2829 = vunpack.c.l.b16 %v2295
    %v2830 = vunpack.c.h.b16 %v2295
    %v2831 = vunpack.c.l.b16 %v2296
    %v2832 = vunpack.c.h.b16 %v2296
    %v2833 = vunpack.c.l.b16 %v2297
    %v2834 = vunpack.c.l.b16 %v2298
    %v2835 = vunpack.c.h.b16 %v2298
    %v2836 = vunpack.c.l.b16 %v2299
    %v2837 = vunpack.c.h.b16 %v2299
    %v2838 = vunpack.c.l.b16 %v2300
    %v2839 = vunpack.c.h.b16 %v2300
    %v2840 = vunpack.c.l.b16 %v2301
    %v2841 = vunpack.c.l.b16 %v2302
    %v2842 = vunpack.c.h.b16 %v2302
    %v2843 = vunpack.c.l.b16 %v2303
    %v2844 = vunpack.c.h.b16 %v2303
    %v2845 = vunpack.c.l.b16 %v2304
    %v2846 = vunpack.c.h.b16 %v2304
    %v2847 = vunpack.c.l.b16 %v2305
    %v2848 = vunpack.c.l.b16 %v2306
    %v2849 = vunpack.c.h.b16 %v2306
    %v2850 = vunpack.c.l.b16 %v2307
    %v2851 = vunpack.c.h.b16 %v2307
    %v2852 = vunpack.c.l.b16 %v2308
    %v2853 = vunpack.c.h.b16 %v2308
    %v2854 = vunpack.c.l.b16 %v2309
    %v2855 = vunpack.c.l.b16 %v2310
    %v2856 = vunpack.c.h.b16 %v2310
    %v2857 = vunpack.c.l.b16 %v2311
    %v2858 = vunpack.c.h.b16 %v2311
    %v2859 = vunpack.c.l.b16 %v2312
    %v2860 = vunpack.c.h.b16 %v2312
    %v2861 = vunpack.c.l.b16 %v2313
    %v2862 = vunpack.c.l.b16 %v2314
    %v2863 = vunpack.c.h.b16 %v2314
    %v2864 = vunpack.c.l.b16 %v2315
    %v2865 = vunpack.c.h.b16 %v2315
    %v2866 = vunpack.c.l.b16 %v2316
    %v2867 = vunpack.c.h.b16 %v2316
    %v2868 = vunpack.c.l.b16 %v2317
    %v2869 = vunpack.c.l.b16 %v2318
    %v2870 = vunpack.c.h.b16 %v2318
    %v2871 = vunpack.c.l.b16 %v2319
    %v2872 = vunpack.c.h.b16 %v2319
    %v2873 = vunpack.c.l.b16 %v2320
    %v2874 = vunpack.c.h.b16 %v2320
    %v2875 = vunpack.c.l.b16 %v2321
    %v2876 = vunpack.c.l.b16 %v2322
    %v2877 = vunpack.c.h.b16 %v2322
    %v2878 = vunpack.c.l.b16 %v2323
    %v2879 = vunpack.c.h.b16 %v2323
    %v2880 = vunpack.c.l.b16 %v2324
    %v2881 = vunpack.c.h.b16 %v2324
    %v2882 = vunpack.c.l.b16 %v2325
    %v2883 = vunpack.c.l.b16 %v2326
    %v2884 = vunpack.c.h.b16 %v2326
    %v2885 = vunpack.c.l.b16 %v2327
    %v2886 = vunpack.c.h.b16 %v2327
    %v2887 = vunpack.c.l.b16 %v2328
    %v2888 = vunpack.c.h.b16 %v2328
    %v2889 = vunpack.c.l.b16 %v2329
    %v2890 = vunpack.c.l.b16 %v2330
    %v2891 = vunpack.c.h.b16 %v2330
    %v2892 = vunpack.c.l.b16 %v2331
    %v2893 = vunpack.c.h.b16 %v2331
    %v2894 = vunpack.c.l.b16 %v2332
    %v2895 = vunpack.c.h.b16 %v2332
    %v2896 = vunpack.c.l.b16 %v2333
    %v2897 = vunpack.c.l.b16 %v2334
    %v2898 = vunpack.c.h.b16 %v2334
    %v2899 = vunpack.c.l.b16 %v2335
    %v2900 = vunpack.c.h.b16 %v2335
    %v2901 = vunpack.c.l.b16 %v2336
    %v2902 = vunpack.c.h.b16 %v2336
    %v2903 = vunpack.c.l.b16 %v2337
    %v2904 = vunpack.c.l.b16 %v2338
    %v2905 = vunpack.c.h.b16 %v2338
    %v2906 = vunpack.c.l.b16 %v2339
    %v2907 = vunpack.c.h.b16 %v2339
    %v2908 = vunpack.c.l.b16 %v2340
    %v2909 = vunpack.c.h.b16 %v2340
    %v2910 = vunpack.c.l.b16 %v2341
    %v2911 = vunpack.c.l.b16 %v2342
    %v2912 = vunpack.c.h.b16 %v2342
    %v2913 = vunpack.c.l.b16 %v2343
    %v2914 = vunpack.c.h.b16 %v2343
    %v2915 = vunpack.c.l.b16 %v2344
    %v2916 = vunpack.c.h.b16 %v2344
    %v2917 = vunpack.c.l.b16 %v2345
    %v2918 = vunpack.c.l.b16 %v2346
    %v2919 = vunpack.c.h.b16 %v2346
    %v2920 = vunpack.c.l.b16 %v2347
    %v2921 = vunpack.c.h.b16 %v2347
    %v2922 = vunpack.c.l.b16 %v2348
    %v2923 = vunpack.c.h.b16 %v2348
    %v2924 = vunpack.c.l.b16 %v2349
    %v2925 = vunpack.c.l.b16 %v2350
    %v2926 = vunpack.c.h.b16 %v2350
    %v2927 = vunpack.c.l.b16 %v2351
    %v2928 = vunpack.c.h.b16 %v2351
    %v2929 = vunpack.c.l.b16 %v2352
    %v2930 = vunpack.c.h.b16 %v2352
    %v2931 = vunpack.c.l.b16 %v2353
    %v2932 = vunpack.c.l.b16 %v2354
    %v2933 = vunpack.c.h.b16 %v2354
    %v2934 = vunpack.c.l.b16 %v2355
    %v2935 = vunpack.c.h.b16 %v2355
    %v2936 = vunpack.c.l.b16 %v2356
    %v2937 = vunpack.c.h.b16 %v2356
    %v2938 = vunpack.c.l.b16 %v2357
    %v2939 = vunpack.c.l.b16 %v2358
    %v2940 = vunpack.c.h.b16 %v2358
    %v2941 = vunpack.c.l.b16 %v2359
    %v2942 = vunpack.c.h.b16 %v2359
    %v2943 = vunpack.c.l.b16 %v2360
    %v2944 = vunpack.c.h.b16 %v2360
    %v2945 = vunpack.c.l.b16 %v2361
    %v2946 = vunpack.c.l.b16 %v2362
    %v2947 = vunpack.c.h.b16 %v2362
    %v2948 = vunpack.c.l.b16 %v2363
    %v2949 = vunpack.c.h.b16 %v2363
    %v2950 = vunpack.c.l.b16 %v2364
    %v2951 = vunpack.c.h.b16 %v2364
    %v2952 = vunpack.c.l.b16 %v2365
    %v2953 = vpack.c.b16 %v2610, %v2603
    %v2954 = vpack.c.b16 %v2611, %v2604
    %v2955 = vpack.c.b16 %v2612, %v2605
    %v2956 = vpack.c.b16 %v2613, %v2606
    %v2957 = vpack.c.b16 %v2614, %v2607
    %v2958 = vpack.c.b16 %v2615, %v2608
    %v2959 = vpack.c.b16 %v2616, %v2609
    %v2960 = vpack.c.b16 %v2624, %v2617
    %v2961 = vpack.c.b16 %v2625, %v2618
    %v2962 = vpack.c.b16 %v2626, %v2619
    %v2963 = vpack.c.b16 %v2627, %v2620
    %v2964 = vpack.c.b16 %v2628, %v2621
    %v2965 = vpack.c.b16 %v2629, %v2622
    %v2966 = vpack.c.b16 %v2630, %v2623
    %v2967 = vpack.c.b16 %v2638, %v2631
    %v2968 = vpack.c.b16 %v2639, %v2632
    %v2969 = vpack.c.b16 %v2640, %v2633
    %v2970 = vpack.c.b16 %v2641, %v2634
    %v2971 = vpack.c.b16 %v2642, %v2635
    %v2972 = vpack.c.b16 %v2643, %v2636
    %v2973 = vpack.c.b16 %v2644, %v2637
    %v2974 = vpack.c.b16 %v2652, %v2645
    %v2975 = vpack.c.b16 %v2653, %v2646
    %v2976 = vpack.c.b16 %v2654, %v2647
    %v2977 = vpack.c.b16 %v2655, %v2648
    %v2978 = vpack.c.b16 %v2656, %v2649
    %v2979 = vpack.c.b16 %v2657, %v2650
    %v2980 = vpack.c.b16 %v2658, %v2651
    %v2981 = vpack.c.b16 %v2666, %v2659
    %v2982 = vpack.c.b16 %v2667, %v2660
    %v2983 = vpack.c.b16 %v2668, %v2661
    %v2984 = vpack.c.b16 %v2669, %v2662
    %v2985 = vpack.c.b16 %v2670, %v2663
    %v2986 = vpack.c.b16 %v2671, %v2664
    %v2987 = vpack.c.b16 %v2672, %v2665
    %v2988 = vpack.c.b16 %v2680, %v2673
    %v2989 = vpack.c.b16 %v2681, %v2674
    %v2990 = vpack.c.b16 %v2682, %v2675
    %v2991 = vpack.c.b16 %v2683, %v2676
    %v2992 = vpack.c.b16 %v2684, %v2677
    %v2993 = vpack.c.b16 %v2685, %v2678
    %v2994 = vpack.c.b16 %v2686, %v2679
    %v2995 = vpack.c.b16 %v2694, %v2687
    %v2996 = vpack.c.b16 %v2695, %v2688
    %v2997 = vpack.c.b16 %v2696, %v2689
    %v2998 = vpack.c.b16 %v2697, %v2690
    %v2999 = vpack.c.b16 %v2698, %v2691
    %v3000 = vpack.c.b16 %v2699, %v2692
    %v3001 = vpack.c.b16 %v2700, %v2693
    %v3002 = vpack.c.b16 %v2708, %v2701
    %v3003 = vpack.c.b16 %v2709, %v2702
    %v3004 = vpack.c.b16 %v2710, %v2703
    %v3005 = vpack.c.b16 %v2711, %v2704
    %v3006 = vpack.c.b16 %v2712, %v2705
    %v3007 = vpack.c.b16 %v2713, %v2706
    %v3008 = vpack.c.b16 %v2714, %v2707
    %v3009 = vpack.c.b16 %v2722, %v2715
    %v3010 = vpack.c.b16 %v2723, %v2716
    %v3011 = vpack.c.b16 %v2724, %v2717
    %v3012 = vpack.c.b16 %v2725, %v2718
    %v3013 = vpack.c.b16 %v2726, %v2719
    %v3014 = vpack.c.b16 %v2727, %v2720
    %v3015 = vpack.c.b16 %v2728, %v2721
    %v3016 = vpack.c.b16 %v2736, %v2729
    %v3017 = vpack.c.b16 %v2737, %v2730
    %v3018 = vpack.c.b16 %v2738, %v2731
    %v3019 = vpack.c.b16 %v2739, %v2732
    %v3020 = vpack.c.b16 %v2740, %v2733
    %v3021 = vpack.c.b16 %v2741, %v2734
    %v3022 = vpack.c.b16 %v2742, %v2735
    %v3023 = vpack.c.b16 %v2750, %v2743
    %v3024 = vpack.c.b16 %v2751, %v2744
    %v3025 = vpack.c.b16 %v2752, %v2745
    %v3026 = vpack.c.b16 %v2753, %v2746
    %v3027 = vpack.c.b16 %v2754, %v2747
    %v3028 = vpack.c.b16 %v2755, %v2748
    %v3029 = vpack.c.b16 %v2756, %v2749
    %v3030 = vpack.c.b16 %v2764, %v2757
    %v3031 = vpack.c.b16 %v2765, %v2758
    %v3032 = vpack.c.b16 %v2766, %v2759
    %v3033 = vpack.c.b16 %v2767, %v2760
    %v3034 = vpack.c.b16 %v2768, %v2761
    %v3035 = vpack.c.b16 %v2769, %v2762
    %v3036 = vpack.c.b16 %v2770, %v2763
    %v3037 = vpack.c.b16 %v2778, %v2771
    %v3038 = vpack.c.b16 %v2779, %v2772
    %v3039 = vpack.c.b16 %v2780, %v2773
    %v3040 = vpack.c.b16 %v2781, %v2774
    %v3041 = vpack.c.b16 %v2782, %v2775
    %v3042 = vpack.c.b16 %v2783, %v2776
    %v3043 = vpack.c.b16 %v2784, %v2777
    %v3044 = vpack.c.b16 %v2792, %v2785
    %v3045 = vpack.c.b16 %v2793, %v2786
    %v3046 = vpack.c.b16 %v2794, %v2787
    %v3047 = vpack.c.b16 %v2795, %v2788
    %v3048 = vpack.c.b16 %v2796, %v2789
    %v3049 = vpack.c.b16 %v2797, %v2790
    %v3050 = vpack.c.b16 %v2798, %v2791
    %v3051 = vpack.c.b16 %v2806, %v2799
    %v3052 = vpack.c.b16 %v2807, %v2800
    %v3053 = vpack.c.b16 %v2808, %v2801
    %v3054 = vpack.c.b16 %v2809, %v2802
    %v3055 = vpack.c.b16 %v2810, %v2803
    %v3056 = vpack.c.b16 %v2811, %v2804
    %v3057 = vpack.c.b16 %v2812, %v2805
    %v3058 = vpack.c.b16 %v2820, %v2813
    %v3059 = vpack.c.b16 %v2821, %v2814
    %v3060 = vpack.c.b16 %v2822, %v2815
    %v3061 = vpack.c.b16 %v2823, %v2816
    %v3062 = vpack.c.b16 %v2824, %v2817
    %v3063 = vpack.c.b16 %v2825, %v2818
    %v3064 = vpack.c.b16 %v2826, %v2819
    %v3065 = vpack.c.b16 %v2834, %v2827
    %v3066 = vpack.c.b16 %v2835, %v2828
    %v3067 = vpack.c.b16 %v2836, %v2829
    %v3068 = vpack.c.b16 %v2837, %v2830
    %v3069 = vpack.c.b16 %v2838, %v2831
    %v3070 = vpack.c.b16 %v2839, %v2832
    %v3071 = vpack.c.b16 %v2840, %v2833
    %v3072 = vpack.c.b16 %v2848, %v2841
    %v3073 = vpack.c.b16 %v2849, %v2842
    %v3074 = vpack.c.b16 %v2850, %v2843
    %v3075 = vpack.c.b16 %v2851, %v2844
    %v3076 = vpack.c.b16 %v2852, %v2845
    %v3077 = vpack.c.b16 %v2853, %v2846
    %v3078 = vpack.c.b16 %v2854, %v2847
    %v3079 = vpack.c.b16 %v2862, %v2855
    %v3080 = vpack.c.b16 %v2863, %v2856
    %v3081 = vpack.c.b16 %v2864, %v2857
    %v3082 = vpack.c.b16 %v2865, %v2858
    %v3083 = vpack.c.b16 %v2866, %v2859
    %v3084 = vpack.c.b16 %v2867, %v2860
    %v3085 = vpack.c.b16 %v2868, %v2861
    %v3086 = vpack.c.b16 %v2876, %v2869
    %v3087 = vpack.c.b16 %v2877, %v2870
    %v3088 = vpack.c.b16 %v2878, %v2871
    %v3089 = vpack.c.b16 %v2879, %v2872
    %v3090 = vpack.c.b16 %v2880, %v2873
    %v3091 = vpack.c.b16 %v2881, %v2874
    %v3092 = vpack.c.b16 %v2882, %v2875
    %v3093 = vpack.c.b16 %v2890, %v2883
    %v3094 = vpack.c.b16 %v2891, %v2884
    %v3095 = vpack.c.b16 %v2892, %v2885
    %v3096 = vpack.c.b16 %v2893, %v2886
    %v3097 = vpack.c.b16 %v2894, %v2887
    %v3098 = vpack.c.b16 %v2895, %v2888
    %v3099 = vpack.c.b16 %v2896, %v2889
    %v3100 = vpack.c.b16 %v2904, %v2897
    %v3101 = vpack.c.b16 %v2905, %v2898
    %v3102 = vpack.c.b16 %v2906, %v2899
    %v3103 = vpack.c.b16 %v2907, %v2900
    %v3104 = vpack.c.b16 %v2908, %v2901
    %v3105 = vpack.c.b16 %v2909, %v2902
    %v3106 = vpack.c.b16 %v2910, %v2903
    %v3107 = vpack.c.b16 %v2918, %v2911
    %v3108 = vpack.c.b16 %v2919, %v2912
    %v3109 = vpack.c.b16 %v2920, %v2913
    %v3110 = vpack.c.b16 %v2921, %v2914
    %v3111 = vpack.c.b16 %v2922, %v2915
    %v3112 = vpack.c.b16 %v2923, %v2916
    %v3113 = vpack.c.b16 %v2924, %v2917
    %v3114 = vpack.c.b16 %v2932, %v2925
    %v3115 = vpack.c.b16 %v2933, %v2926
    %v3116 = vpack.c.b16 %v2934, %v2927
    %v3117 = vpack.c.b16 %v2935, %v2928
    %v3118 = vpack.c.b16 %v2936, %v2929
    %v3119 = vpack.c.b16 %v2937, %v2930
    %v3120 = vpack.c.b16 %v2938, %v2931
    %v3121 = vpack.c.b16 %v2946, %v2939
    %v3122 = vpack.c.b16 %v2947, %v2940
    %v3123 = vpack.c.b16 %v2948, %v2941
    %v3124 = vpack.c.b16 %v2949, %v2942
    %v3125 = vpack.c.b16 %v2950, %v2943
    %v3126 = vpack.c.b16 %v2951, %v2944
    %v3127 = vpack.c.b16 %v2952, %v2945
    %v3304 = vsel %vm1809, %v2165, 0
    %3306 = vmatprep.subr.bf16.mxu0 %v3003
    %3307 = vmatpush1.bf16.msra.mxu0 %v3002
    %3308 = vmatprep.subr.bf16.mxu0 %v2996
    %3309 = vmatpush1.bf16.msra.mxu0 %v2995
    %3310 = vmatprep.subr.bf16.mxu0 %v2989
    %3311 = vmatpush1.bf16.msra.mxu0 %v2988
    %3312 = vmatprep.subr.bf16.mxu0 %v2982
    %3313 = vmatpush1.bf16.msra.mxu0 %v2981
    %3314 = vmatprep.subr.bf16.mxu0 %v2975
    %3315 = vmatpush1.bf16.msra.mxu0 %v2974
    %3316 = vmatprep.subr.bf16.mxu0 %v2968
    %3317 = vmatpush1.bf16.msra.mxu0 %v2967
    %3318 = vmatprep.subr.bf16.mxu0 %v2961
    %3319 = vmatpush1.bf16.msra.mxu0 %v2960
    %3320 = vmatprep.subr.bf16.mxu0 %v2954
    %3321 = vmatpush1.bf16.msra.mxu0 %v2953
    %3322 = vmatprep.subr.bf16.mxu0 %v3059
    %3323 = vmatpush2.bf16.msra.mxu0 %v3058
    %3324 = vmatprep.subr.bf16.mxu0 %v3052
    %3325 = vmatpush2.bf16.msra.mxu0 %v3051
    %3326 = vmatprep.subr.bf16.mxu0 %v3045
    %3327 = vmatpush2.bf16.msra.mxu0 %v3044
    %3328 = vmatprep.subr.bf16.mxu0 %v3038
    %3329 = vmatpush2.bf16.msra.mxu0 %v3037
    %3330 = vmatprep.subr.bf16.mxu0 %v3031
    %3331 = vmatpush2.bf16.msra.mxu0 %v3030
    %3332 = vmatprep.subr.bf16.mxu0 %v3024
    %3333 = vmatpush2.bf16.msra.mxu0 %v3023
    %3334 = vmatprep.subr.bf16.mxu0 %v3017
    %3335 = vmatpush2.bf16.msra.mxu0 %v3016
    %3336 = vmatprep.subr.bf16.mxu0 %v3010
    %3337 = vmatpush2.bf16.msra.mxu0 %v3009
    %3338 = vmatprep.mubr.bf16.mxu0 %v2163
    %3339 = vmatmul.mubr.bf16.gmra.mxu0 %v2162
    %v3340 = vpop.f32.mrf.mxu0
    %v3341 = vadd.f32 %v2371, %v3340
    %v3342 = vpop.f32.mrf.mxu0
    %v3343 = vadd.f32 %v2375, %v3342
    %v3344 = vpop.f32.mrf.mxu0
    %v3345 = vpop.f32.mrf.mxu0
    %3346 = vdwg.mxu0
    %3347 = vmatprep.subr.bf16.mxu0 %v3115
    %3348 = vmatpush1.bf16.msra.mxu0 %v3114
    %3349 = vmatprep.subr.bf16.mxu0 %v3108
    %3350 = vmatpush1.bf16.msra.mxu0 %v3107
    %3351 = vmatprep.subr.bf16.mxu0 %v3101
    %3352 = vmatpush1.bf16.msra.mxu0 %v3100
    %3353 = vmatprep.subr.bf16.mxu0 %v3094
    %3354 = vmatpush1.bf16.msra.mxu0 %v3093
    %3355 = vmatprep.subr.bf16.mxu0 %v3087
    %3356 = vmatpush1.bf16.msra.mxu0 %v3086
    %3357 = vmatprep.subr.bf16.mxu0 %v3080
    %3358 = vmatpush1.bf16.msra.mxu0 %v3079
    %3359 = vmatprep.subr.bf16.mxu0 %v3073
    %3360 = vmatpush1.bf16.msra.mxu0 %v3072
    %3361 = vmatprep.subr.bf16.mxu0 %v3066
    %3362 = vmatpush1.bf16.msra.mxu0 %v3065
    %3363 = vmatprep.subr.bf16.mxu0 0
    %3364 = vmatpush2.bf16.msra.mxu0 0
    %3365 = vmatprep.subr.bf16.mxu0 0
    %3366 = vmatpush2.bf16.msra.mxu0 0
    %3367 = vmatprep.subr.bf16.mxu0 0
    %3368 = vmatpush2.bf16.msra.mxu0 0
    %3369 = vmatprep.subr.bf16.mxu0 0
    %3370 = vmatpush2.bf16.msra.mxu0 0
    %3371 = vmatprep.subr.bf16.mxu0 0
    %3372 = vmatpush2.bf16.msra.mxu0 0
    %3373 = vmatprep.subr.bf16.mxu0 0
    %3374 = vmatpush2.bf16.msra.mxu0 0
    %3375 = vmatprep.subr.bf16.mxu0 0
    %3376 = vmatpush2.bf16.msra.mxu0 0
    %3377 = vmatprep.subr.bf16.mxu0 %v3122
    %3378 = vmatpush2.bf16.msra.mxu0 %v3121
    %3379 = vmatprep.mubr.bf16.mxu0 %v3304
    %3380 = vmatmul.mubr.bf16.gmra.mxu0 %v2164
    %v3381 = vpop.f32.mrf.mxu0
    %v3382 = vadd.f32 %v3341, %v3381
    %v3383 = vpop.f32.mrf.mxu0
    %v3384 = vadd.f32 %v3343, %v3383
    %v3385 = vpop.f32.mrf.mxu0
    %v3386 = vpop.f32.mrf.mxu0
    %3387 = vdwg.mxu0
    %3388 = vmatprep.subr.bf16.mxu0 %v3005
    %3389 = vmatpush1.bf16.msra.mxu0 %v3004
    %3390 = vmatprep.subr.bf16.mxu0 %v2998
    %3391 = vmatpush1.bf16.msra.mxu0 %v2997
    %3392 = vmatprep.subr.bf16.mxu0 %v2991
    %3393 = vmatpush1.bf16.msra.mxu0 %v2990
    %3394 = vmatprep.subr.bf16.mxu0 %v2984
    %3395 = vmatpush1.bf16.msra.mxu0 %v2983
    %3396 = vmatprep.subr.bf16.mxu0 %v2977
    %3397 = vmatpush1.bf16.msra.mxu0 %v2976
    %3398 = vmatprep.subr.bf16.mxu0 %v2970
    %3399 = vmatpush1.bf16.msra.mxu0 %v2969
    %3400 = vmatprep.subr.bf16.mxu0 %v2963
    %3401 = vmatpush1.bf16.msra.mxu0 %v2962
    %3402 = vmatprep.subr.bf16.mxu0 %v2956
    %3403 = vmatpush1.bf16.msra.mxu0 %v2955
    %3404 = vmatprep.subr.bf16.mxu0 %v3061
    %3405 = vmatpush2.bf16.msra.mxu0 %v3060
    %3406 = vmatprep.subr.bf16.mxu0 %v3054
    %3407 = vmatpush2.bf16.msra.mxu0 %v3053
    %3408 = vmatprep.subr.bf16.mxu0 %v3047
    %3409 = vmatpush2.bf16.msra.mxu0 %v3046
    %3410 = vmatprep.subr.bf16.mxu0 %v3040
    %3411 = vmatpush2.bf16.msra.mxu0 %v3039
    %3412 = vmatprep.subr.bf16.mxu0 %v3033
    %3413 = vmatpush2.bf16.msra.mxu0 %v3032
    %3414 = vmatprep.subr.bf16.mxu0 %v3026
    %3415 = vmatpush2.bf16.msra.mxu0 %v3025
    %3416 = vmatprep.subr.bf16.mxu0 %v3019
    %3417 = vmatpush2.bf16.msra.mxu0 %v3018
    %3418 = vmatprep.subr.bf16.mxu0 %v3012
    %3419 = vmatpush2.bf16.msra.mxu0 %v3011
    %3420 = vmatprep.mubr.bf16.mxu0 %v2163
    %3421 = vmatmul.mubr.bf16.gmra.mxu0 %v2162
    %v3422 = vpop.f32.mrf.mxu0
    %v3423 = vadd.f32 %v2379, %v3422
    %v3424 = vpop.f32.mrf.mxu0
    %v3425 = vadd.f32 %v2383, %v3424
    %v3426 = vpop.f32.mrf.mxu0
    %v3427 = vpop.f32.mrf.mxu0
    %3428 = vdwg.mxu0
    %3429 = vmatprep.subr.bf16.mxu0 %v3117
    %3430 = vmatpush1.bf16.msra.mxu0 %v3116
    %3431 = vmatprep.subr.bf16.mxu0 %v3110
    %3432 = vmatpush1.bf16.msra.mxu0 %v3109
    %3433 = vmatprep.subr.bf16.mxu0 %v3103
    %3434 = vmatpush1.bf16.msra.mxu0 %v3102
    %3435 = vmatprep.subr.bf16.mxu0 %v3096
    %3436 = vmatpush1.bf16.msra.mxu0 %v3095
    %3437 = vmatprep.subr.bf16.mxu0 %v3089
    %3438 = vmatpush1.bf16.msra.mxu0 %v3088
    %3439 = vmatprep.subr.bf16.mxu0 %v3082
    %3440 = vmatpush1.bf16.msra.mxu0 %v3081
    %3441 = vmatprep.subr.bf16.mxu0 %v3075
    %3442 = vmatpush1.bf16.msra.mxu0 %v3074
    %3443 = vmatprep.subr.bf16.mxu0 %v3068
    %3444 = vmatpush1.bf16.msra.mxu0 %v3067
    %3445 = vmatprep.subr.bf16.mxu0 0
    %3446 = vmatpush2.bf16.msra.mxu0 0
    %3447 = vmatprep.subr.bf16.mxu0 0
    %3448 = vmatpush2.bf16.msra.mxu0 0
    %3449 = vmatprep.subr.bf16.mxu0 0
    %3450 = vmatpush2.bf16.msra.mxu0 0
    %3451 = vmatprep.subr.bf16.mxu0 0
    %3452 = vmatpush2.bf16.msra.mxu0 0
    %3453 = vmatprep.subr.bf16.mxu0 0
    %3454 = vmatpush2.bf16.msra.mxu0 0
    %3455 = vmatprep.subr.bf16.mxu0 0
    %3456 = vmatpush2.bf16.msra.mxu0 0
    %3457 = vmatprep.subr.bf16.mxu0 0
    %3458 = vmatpush2.bf16.msra.mxu0 0
    %3459 = vmatprep.subr.bf16.mxu0 %v3124
    %3460 = vmatpush2.bf16.msra.mxu0 %v3123
    %3461 = vmatprep.mubr.bf16.mxu0 %v3304
    %3462 = vmatmul.mubr.bf16.gmra.mxu0 %v2164
    %v3463 = vpop.f32.mrf.mxu0
    %v3464 = vadd.f32 %v3423, %v3463
    %v3465 = vpop.f32.mrf.mxu0
    %v3466 = vadd.f32 %v3425, %v3465
    %v3467 = vpop.f32.mrf.mxu0
    %v3468 = vpop.f32.mrf.mxu0
    %3469 = vdwg.mxu0
    %3470 = vmatprep.subr.bf16.mxu0 %v3007
    %3471 = vmatpush1.bf16.msra.mxu0 %v3006
    %3472 = vmatprep.subr.bf16.mxu0 %v3000
    %3473 = vmatpush1.bf16.msra.mxu0 %v2999
    %3474 = vmatprep.subr.bf16.mxu0 %v2993
    %3475 = vmatpush1.bf16.msra.mxu0 %v2992
    %3476 = vmatprep.subr.bf16.mxu0 %v2986
    %3477 = vmatpush1.bf16.msra.mxu0 %v2985
    %3478 = vmatprep.subr.bf16.mxu0 %v2979
    %3479 = vmatpush1.bf16.msra.mxu0 %v2978
    %3480 = vmatprep.subr.bf16.mxu0 %v2972
    %3481 = vmatpush1.bf16.msra.mxu0 %v2971
    %3482 = vmatprep.subr.bf16.mxu0 %v2965
    %3483 = vmatpush1.bf16.msra.mxu0 %v2964
    %3484 = vmatprep.subr.bf16.mxu0 %v2958
    %3485 = vmatpush1.bf16.msra.mxu0 %v2957
    %3486 = vmatprep.subr.bf16.mxu0 %v3063
    %3487 = vmatpush2.bf16.msra.mxu0 %v3062
    %3488 = vmatprep.subr.bf16.mxu0 %v3056
    %3489 = vmatpush2.bf16.msra.mxu0 %v3055
    %3490 = vmatprep.subr.bf16.mxu0 %v3049
    %3491 = vmatpush2.bf16.msra.mxu0 %v3048
    %3492 = vmatprep.subr.bf16.mxu0 %v3042
    %3493 = vmatpush2.bf16.msra.mxu0 %v3041
    %3494 = vmatprep.subr.bf16.mxu0 %v3035
    %3495 = vmatpush2.bf16.msra.mxu0 %v3034
    %3496 = vmatprep.subr.bf16.mxu0 %v3028
    %3497 = vmatpush2.bf16.msra.mxu0 %v3027
    %3498 = vmatprep.subr.bf16.mxu0 %v3021
    %3499 = vmatpush2.bf16.msra.mxu0 %v3020
    %3500 = vmatprep.subr.bf16.mxu0 %v3014
    %3501 = vmatpush2.bf16.msra.mxu0 %v3013
    %3502 = vmatprep.mubr.bf16.mxu0 %v2163
    %3503 = vmatmul.mubr.bf16.gmra.mxu0 %v2162
    %v3504 = vpop.f32.mrf.mxu0
    %v3505 = vadd.f32 %v2387, %v3504
    %v3506 = vpop.f32.mrf.mxu0
    %v3507 = vadd.f32 %v2391, %v3506
    %v3508 = vpop.f32.mrf.mxu0
    %v3509 = vpop.f32.mrf.mxu0
    %3510 = vdwg.mxu0
    %3511 = vmatprep.subr.bf16.mxu0 %v3119
    %3512 = vmatpush1.bf16.msra.mxu0 %v3118
    %3513 = vmatprep.subr.bf16.mxu0 %v3112
    %3514 = vmatpush1.bf16.msra.mxu0 %v3111
    %3515 = vmatprep.subr.bf16.mxu0 %v3105
    %3516 = vmatpush1.bf16.msra.mxu0 %v3104
    %3517 = vmatprep.subr.bf16.mxu0 %v3098
    %3518 = vmatpush1.bf16.msra.mxu0 %v3097
    %3519 = vmatprep.subr.bf16.mxu0 %v3091
    %3520 = vmatpush1.bf16.msra.mxu0 %v3090
    %3521 = vmatprep.subr.bf16.mxu0 %v3084
    %3522 = vmatpush1.bf16.msra.mxu0 %v3083
    %3523 = vmatprep.subr.bf16.mxu0 %v3077
    %3524 = vmatpush1.bf16.msra.mxu0 %v3076
    %3525 = vmatprep.subr.bf16.mxu0 %v3070
    %3526 = vmatpush1.bf16.msra.mxu0 %v3069
    %3527 = vmatprep.subr.bf16.mxu0 0
    %3528 = vmatpush2.bf16.msra.mxu0 0
    %3529 = vmatprep.subr.bf16.mxu0 0
    %3530 = vmatpush2.bf16.msra.mxu0 0
    %3531 = vmatprep.subr.bf16.mxu0 0
    %3532 = vmatpush2.bf16.msra.mxu0 0
    %3533 = vmatprep.subr.bf16.mxu0 0
    %3534 = vmatpush2.bf16.msra.mxu0 0
    %3535 = vmatprep.subr.bf16.mxu0 0
    %3536 = vmatpush2.bf16.msra.mxu0 0
    %3537 = vmatprep.subr.bf16.mxu0 0
    %3538 = vmatpush2.bf16.msra.mxu0 0
    %3539 = vmatprep.subr.bf16.mxu0 0
    %3540 = vmatpush2.bf16.msra.mxu0 0
    %3541 = vmatprep.subr.bf16.mxu0 %v3126
    %3542 = vmatpush2.bf16.msra.mxu0 %v3125
    %3543 = vmatprep.mubr.bf16.mxu0 %v3304
    %3544 = vmatmul.mubr.bf16.gmra.mxu0 %v2164
    %v3545 = vpop.f32.mrf.mxu0
    %v3546 = vadd.f32 %v3505, %v3545
    %v3547 = vpop.f32.mrf.mxu0
    %v3548 = vadd.f32 %v3507, %v3547
    %v3549 = vpop.f32.mrf.mxu0
    %v3550 = vpop.f32.mrf.mxu0
    %3551 = vdwg.mxu0
    %3552 = vmatprep.subr.bf16.mxu0 0
    %3553 = vmatpush1.bf16.msra.mxu0 %v3008
    %3554 = vmatprep.subr.bf16.mxu0 0
    %3555 = vmatpush1.bf16.msra.mxu0 %v3001
    %3556 = vmatprep.subr.bf16.mxu0 0
    %3557 = vmatpush1.bf16.msra.mxu0 %v2994
    %3558 = vmatprep.subr.bf16.mxu0 0
    %3559 = vmatpush1.bf16.msra.mxu0 %v2987
    %3560 = vmatprep.subr.bf16.mxu0 0
    %3561 = vmatpush1.bf16.msra.mxu0 %v2980
    %3562 = vmatprep.subr.bf16.mxu0 0
    %3563 = vmatpush1.bf16.msra.mxu0 %v2973
    %3564 = vmatprep.subr.bf16.mxu0 0
    %3565 = vmatpush1.bf16.msra.mxu0 %v2966
    %3566 = vmatprep.subr.bf16.mxu0 0
    %3567 = vmatpush1.bf16.msra.mxu0 %v2959
    %3568 = vmatprep.subr.bf16.mxu0 0
    %3569 = vmatpush2.bf16.msra.mxu0 %v3064
    %3570 = vmatprep.subr.bf16.mxu0 0
    %3571 = vmatpush2.bf16.msra.mxu0 %v3057
    %3572 = vmatprep.subr.bf16.mxu0 0
    %3573 = vmatpush2.bf16.msra.mxu0 %v3050
    %3574 = vmatprep.subr.bf16.mxu0 0
    %3575 = vmatpush2.bf16.msra.mxu0 %v3043
    %3576 = vmatprep.subr.bf16.mxu0 0
    %3577 = vmatpush2.bf16.msra.mxu0 %v3036
    %3578 = vmatprep.subr.bf16.mxu0 0
    %3579 = vmatpush2.bf16.msra.mxu0 %v3029
    %3580 = vmatprep.subr.bf16.mxu0 0
    %3581 = vmatpush2.bf16.msra.mxu0 %v3022
    %3582 = vmatprep.subr.bf16.mxu0 0
    %3583 = vmatpush2.bf16.msra.mxu0 %v3015
    %3584 = vmatprep.mubr.bf16.mxu0 %v2163
    %3585 = vmatmul.mubr.bf16.gmra.mxu0 %v2162
    %v3586 = vpop.f32.mrf.mxu0
    %v3587 = vadd.f32 %v2395, %v3586
    %v3588 = vpop.f32.mrf.mxu0
    %v3589 = vpop.f32.mrf.mxu0
    %v3590 = vpop.f32.mrf.mxu0
    %3591 = vdwg.mxu0
    %3592 = vmatprep.subr.bf16.mxu0 0
    %3593 = vmatpush1.bf16.msra.mxu0 %v3120
    %3594 = vmatprep.subr.bf16.mxu0 0
    %3595 = vmatpush1.bf16.msra.mxu0 %v3113
    %3596 = vmatprep.subr.bf16.mxu0 0
    %3597 = vmatpush1.bf16.msra.mxu0 %v3106
    %3598 = vmatprep.subr.bf16.mxu0 0
    %3599 = vmatpush1.bf16.msra.mxu0 %v3099
    %3600 = vmatprep.subr.bf16.mxu0 0
    %3601 = vmatpush1.bf16.msra.mxu0 %v3092
    %3602 = vmatprep.subr.bf16.mxu0 0
    %3603 = vmatpush1.bf16.msra.mxu0 %v3085
    %3604 = vmatprep.subr.bf16.mxu0 0
    %3605 = vmatpush1.bf16.msra.mxu0 %v3078
    %3606 = vmatprep.subr.bf16.mxu0 0
    %3607 = vmatpush1.bf16.msra.mxu0 %v3071
    %3608 = vmatprep.subr.bf16.mxu0 0
    %3609 = vmatpush2.bf16.msra.mxu0 0
    %3610 = vmatprep.subr.bf16.mxu0 0
    %3611 = vmatpush2.bf16.msra.mxu0 0
    %3612 = vmatprep.subr.bf16.mxu0 0
    %3613 = vmatpush2.bf16.msra.mxu0 0
    %3614 = vmatprep.subr.bf16.mxu0 0
    %3615 = vmatpush2.bf16.msra.mxu0 0
    %3616 = vmatprep.subr.bf16.mxu0 0
    %3617 = vmatpush2.bf16.msra.mxu0 0
    %3618 = vmatprep.subr.bf16.mxu0 0
    %3619 = vmatpush2.bf16.msra.mxu0 0
    %3620 = vmatprep.subr.bf16.mxu0 0
    %3621 = vmatpush2.bf16.msra.mxu0 0
    %3622 = vmatprep.subr.bf16.mxu0 0
    %3623 = vmatpush2.bf16.msra.mxu0 %v3127
    %3624 = vmatprep.mubr.bf16.mxu0 %v3304
    %3625 = vmatmul.mubr.bf16.gmra.mxu0 %v2164
    %v3626 = vpop.f32.mrf.mxu0
    %v3627 = vadd.f32 %v3587, %v3626
    %v3628 = vpop.f32.mrf.mxu0
    %v3629 = vpop.f32.mrf.mxu0
    %v3630 = vpop.f32.mrf.mxu0
    %3631 = vdwg.mxu0
    %v3632 = vxor.u32 %v3382, 2147483648
    %v3633 = vxor.u32 %v3384, 2147483648
    %v3634 = vxor.u32 %v3464, 2147483648
    %v3635 = vxor.u32 %v3466, 2147483648
    %v3636 = vxor.u32 %v3546, 2147483648
    %v3637 = vxor.u32 %v3548, 2147483648
    %v3638 = vxor.u32 %v3627, 2147483648
    %v3639 = vmul.f32 %v3632, 1.442695
    %v3640 = vpow.pop %v3639
    %v3641 = vmul.f32 %v3633, 1.442695
    %v3642 = vpow.pop %v3641
    %v3643 = vmul.f32 %v3634, 1.442695
    %v3644 = vpow.pop %v3643
    %v3645 = vmul.f32 %v3635, 1.442695
    %v3646 = vpow.pop %v3645
    %v3647 = vmul.f32 %v3636, 1.442695
    %v3648 = vpow.pop %v3647
    %v3649 = vmul.f32 %v3637, 1.442695
    %v3650 = vpow.pop %v3649
    %v3651 = vmul.f32 %v3638, 1.442695
    %v3652 = vpow.pop %v3651
    %v3653 = vadd.f32 %v3640, 1.0
    %v3654 = vadd.f32 %v3642, 1.0
    %v3655 = vadd.f32 %v3644, 1.0
    %v3656 = vadd.f32 %v3646, 1.0
    %v3657 = vadd.f32 %v3648, 1.0
    %v3658 = vadd.f32 %v3650, 1.0
    %v3659 = vadd.f32 %v3652, 1.0
    %v3660 = vrcp.pop %v3653
    %v3661 = vmul.f32 1.0, %v3660
    %v3662 = vrcp.pop %v3654
    %v3663 = vmul.f32 1.0, %v3662
    %v3664 = vrcp.pop %v3655
    %v3665 = vmul.f32 1.0, %v3664
    %v3666 = vrcp.pop %v3656
    %v3667 = vmul.f32 1.0, %v3666
    %v3668 = vrcp.pop %v3657
    %v3669 = vmul.f32 1.0, %v3668
    %v3670 = vrcp.pop %v3658
    %v3671 = vmul.f32 1.0, %v3670
    %v3672 = vrcp.pop %v3659
    %v3673 = vmul.f32 1.0, %v3672
    %3674 = vst [vmem:[#allocation2] sm:$0xff] %v3661
    %3675 = vst [vmem:[#allocation2 + $0x8] sm:$0xff] %v3663
    %3676 = vst [vmem:[#allocation2 + $0x10] sm:$0xff] %v3665
    %3677 = vst [vmem:[#allocation2 + $0x18] sm:$0xff] %v3667
    %3678 = vst [vmem:[#allocation2 + $0x20] sm:$0xff] %v3669
    %3679 = vst [vmem:[#allocation2 + $0x28] sm:$0xff] %v3671
    %3680 = vst [vmem:[#allocation2 + $0x30] sm:$0xff] %v3673
    // Predicated region
    $region42: #{tpu_custom_call.1} parent=1 // pred_check
      _
    $region43: #{tpu_custom_call.1} parent=1 // pred_check_branch
      %3682 = sbr.rel (0) target = $region45
    $region44: #{tpu_custom_call.1} parent=1 // pred_region
      %s3684 = ssub.s32 896, 896
      %3685 = vsyncadd [#allocation3], %s3684
      %s3687 = sshll.u32 [#allocation2], 4
      %s3688 = int_to_ptr.vmem [resolvable:$true] %s3687
      %3690 = dma.vmem_to_hbm [thread:$0]  %s3688, 896, %s10, [#allocation3]
    $region45: #{tpu_custom_call.1} parent=1 // pred_fallthru
      _
    // Predicated region
    $region46: #{tpu_custom_call.1} parent=1 // pred_check
      _
    $region47: #{tpu_custom_call.1} parent=1 // pred_check_branch
      %3692 = sbr.rel (0) target = $region49
    $region48: #{tpu_custom_call.1} parent=1 // pred_region
      %s3694 = ssub.s32 128, 128
      %3695 = vsyncadd [#allocation5], %s3694
      %s3697 = sshll.u32 [#allocation4], 4
      %s3698 = int_to_ptr.vmem [resolvable:$true] %s3697
      %3700 = dma.vmem_to_hbm [thread:$0]  %s3698, 128, %s11, [#allocation5]
    $region49: #{tpu_custom_call.1} parent=1 // pred_fallthru
      _
    // Predicated region
    $region50: #{tpu_custom_call.1} parent=1 // pred_check
      _
    $region51: #{tpu_custom_call.1} parent=1 // pred_check_branch
      %3702 = sbr.rel (0) target = $region53
    $region52: #{tpu_custom_call.1} parent=1 // pred_region
      %3703 = dma.done [#allocation3], 896
    $region53: #{tpu_custom_call.1} parent=1 // pred_fallthru
      _
    // Predicated region
    $region54: #{tpu_custom_call.1} parent=1 // pred_check
      _
    $region55: #{tpu_custom_call.1} parent=1 // pred_check_branch
      %3705 = sbr.rel (0) target = $region57
    $region56: #{tpu_custom_call.1} parent=1 // pred_region
      %3706 = dma.done [#allocation5], 128
    $region57: #{tpu_custom_call.1} parent=1 // pred_fallthru
      _
    %3707 = vsyncpa [#allocation3], 1
    %3708 = vsyncpa [#allocation5], 1

</llo_original>
